<compile_context>
chip_gen: v6e
topology: v6e:2x2x1
jax: 0.10.0
libtpu: 0.0.40
codegen_flags: <defaults>
</compile_context>

<pallas_src>
import jax
import jax.numpy as jnp
from jax import lax
from jax.experimental import pallas as pl
from jax.experimental.pallas import tpu as pltpu

LABEL_N = 10          # setup.label_n
L0 = 81               # sequence length: 81 -> 27 -> 9 -> 3 -> 1 after MaxPool1d(3) x4
C_IN = 4              # concat of the input list gives 4 channels
C_HID = 32
BN_EPS = 1e-5
_LS = (81, 27, 9, 3)  # sequence length entering each conv block


def _conv_block(x, w_ref, b_ref, m0_ref, mL_ref, pool_ref, relu):
    """One conv_block on batch-flattened rows.

    x:       (R, Cin) with R = TB*L, row r = b*L + l
    w_ref:   (3, Cin, Cout) conv taps with the BN scale folded in
    b_ref:   (1, Cout) folded conv-bias + BN affine shift
    m0/mL:   (R, 1) 0/1 masks zeroing rows with l==0 / l==L-1 after the roll
    pool_ref:(R, Cout) VMEM scratch used for the stride-3 max-pool selection
    """
    R = x.shape[0]
    a0 = jnp.dot(x, w_ref[0], preferred_element_type=jnp.float32)
    a1 = jnp.dot(x, w_ref[1], preferred_element_type=jnp.float32)
    a2 = jnp.dot(x, w_ref[2], preferred_element_type=jnp.float32)
    # Conv1d(k=3, stride=1, padding=1): y[l] = a0[l-1] + a1[l] + a2[l+1].
    # In the flattened layout the shift is uniform across samples; the masks
    # kill the wrapped / cross-sample rows (== the zero padding).
    y = (pltpu.roll(a0, shift=1, axis=0) * m0_ref[...]
         + a1
         + pltpu.roll(a2, shift=R - 1, axis=0) * mL_ref[...]   # roll by -1
         + b_ref[...])
    if relu:
        y = jnp.maximum(y, 0.0)
    # MaxPool1d(kernel_size=3, stride=3): global stride-3 row selection.
    pool_ref[...] = y
    Rp = R // 3
    p = jnp.maximum(pool_ref[pl.ds(0, Rp, stride=3), :],
                    pool_ref[pl.ds(1, Rp, stride=3), :])
    return jnp.maximum(p, pool_ref[pl.ds(2, Rp, stride=3), :])


def deepflow_kernel(x_ref,
                    w1, b1, m01, mL1,
                    w2, b2, m02, mL2,
                    w3, b3, m03, mL3,
                    w4, b4, m04, mL4,
                    wfc, bfc,
                    out_ref,
                    p1, p2, p3, p4):
    h = x_ref[...]                                           # (TB*81, 4)
    h = _conv_block(h, w1, b1, m01, mL1, p1, relu=True)      # (TB*27, 32)
    h = _conv_block(h, w2, b2, m02, mL2, p2, relu=True)      # (TB*9, 32)
    h = _conv_block(h, w3, b3, m03, mL3, p3, relu=True)      # (TB*3, 32)
    h = _conv_block(h, w4, b4, m04, mL4, p4, relu=False)     # (TB, 32)
    # Flatten is trivial (final L == 1).  fc -> Dropout(0.5, eval=id) -> fc2
    # were folded host-side into a single (32, LABEL_N) affine.
    out_ref[...] = (jnp.dot(h, wfc[...], preferred_element_type=jnp.float32)
                    + bfc[...])


def _edge_masks(tb, L):
    l = jnp.arange(tb * L, dtype=jnp.int32) % L
    m0 = (l != 0).astype(jnp.float32).reshape(-1, 1)      # kills x[l-1] at l==0
    mL = (l != L - 1).astype(jnp.float32).reshape(-1, 1)  # kills x[l+1] at l==L-1
    return m0, mL


def _kernel_inputs(params, tb):
    """Host-side constant folding into the kernel argument list."""
    args = []
    for (w, scale, shift, _relu), L in zip(params["blocks"], _LS):
        args.append(w * scale)      # fold BN scale into the conv taps (per Cout)
        args.append(shift)          # (1, Cout) folded conv bias + BN shift
        m0, mL = _edge_masks(tb, L)
        args += [m0, mL]
    wfc = params["fcw"] @ params["fc2w"]                      # (32, LABEL_N)
    bfc = params["fcb"] @ params["fc2w"] + params["fc2b"]     # (1, LABEL_N)
    args += [wfc, bfc]
    return args


def _const_spec(a):
    nd = a.ndim
    return pl.BlockSpec(a.shape, lambda g, _nd=nd: (0,) * _nd)


def deepflow_forward(x_list, params, tb=None):
    # torch.concat(x, dim=1) on NCL inputs, then go channels-last + flatten B,L.
    x = jnp.concatenate(x_list, axis=1)            # (B, 4, L0)
    B = x.shape[0]
    if tb is None:
        tb = min(64, 8 * pl.cdiv(B, 8))            # samples per grid step
    assert tb % 8 == 0
    n_tiles = pl.cdiv(B, tb)
    B_pad = n_tiles * tb

    x_blc = jnp.transpose(x, (0, 2, 1))            # (B, L0, 4)
    if B_pad != B:
        x_blc = jnp.pad(x_blc, ((0, B_pad - B), (0, 0), (0, 0)))
    x_flat = x_blc.reshape(B_pad * L0, C_IN)       # row r = b*L0 + l

    kargs = _kernel_inputs(params, tb)

    out = pl.pallas_call(
        deepflow_kernel,
        out_shape=jax.ShapeDtypeStruct((B_pad, LABEL_N), jnp.float32),
        grid=(n_tiles,),
        in_specs=[pl.BlockSpec((tb * L0, C_IN), lambda g: (g, 0))]
                 + [_const_spec(a) for a in kargs],
        out_specs=pl.BlockSpec((tb, LABEL_N), lambda g: (g, 0)),
        scratch_shapes=[pltpu.VMEM((tb * L, C_HID), jnp.float32) for L in _LS],
        compiler_params=pltpu.CompilerParams(
            dimension_semantics=("parallel",)),     # batch tiles are independent
    )(x_flat, *kargs)
    return out[:B]


def init_params(key):
    keys = jax.random.split(key, 20)
    it = iter(keys)

    def conv_bn(cin, cout, relu):
        w = jax.random.normal(next(it), (3, cin, cout), jnp.float32) / jnp.sqrt(3.0 * cin)
        b = 0.05 * jax.random.normal(next(it), (cout,), jnp.float32)
        gamma = 1.0 + 0.1 * jax.random.normal(next(it), (cout,), jnp.float32)
        beta = 0.1 * jax.random.normal(next(it), (cout,), jnp.float32)
        rm = jnp.zeros((cout,), jnp.float32)       # eval-mode running stats
        rv = jnp.ones((cout,), jnp.float32)
        scale = gamma / jnp.sqrt(rv + BN_EPS)
        shift = (b - rm) * scale + beta
        return (w, scale.reshape(1, cout), shift.reshape(1, cout), relu)

    blocks = [conv_bn(C_IN, C_HID, True), conv_bn(C_HID, C_HID, True),
              conv_bn(C_HID, C_HID, True), conv_bn(C_HID, C_HID, False)]
    flat_dim = C_HID * (L0 // 3 ** 4)              # == calc_flat_shape() == 32
    fcw = jax.random.normal(next(it), (flat_dim, 32), jnp.float32) / jnp.sqrt(1.0 * flat_dim)
    fcb = 0.05 * jax.random.normal(next(it), (1, 32), jnp.float32)
    fc2w = jax.random.normal(next(it), (32, LABEL_N), jnp.float32) / jnp.sqrt(32.0)
    fc2b = 0.05 * jax.random.normal(next(it), (1, LABEL_N), jnp.float32)
    return dict(blocks=blocks, fcw=fcw, fcb=fcb, fc2w=fc2w, fc2b=fc2b)


def reference_forward(x_list, params):
    # Pure-JAX (XLA) reference matching the PyTorch eval-mode forward
    # (unfolded BN affine and separate fc/fc2, to validate the host folding).
    x = jnp.concatenate(x_list, axis=1)            # (B, 4, L)
    for (w, scale, shift, relu) in params["blocks"]:
        w_oih = jnp.transpose(w, (2, 1, 0))        # (Cout, Cin, 3)
        y = lax.conv_general_dilated(
            x, w_oih, window_strides=(1,), padding=[(1, 1)],
            dimension_numbers=("NCH", "OIH", "NCH"))
        y = y * scale[0][None, :, None] + shift[0][None, :, None]
        if relu:
            y = jnp.maximum(y, 0.0)
        B, C, L = y.shape
        y = y[:, :, :(L // 3) * 3].reshape(B, C, L // 3, 3).max(axis=-1)
        x = y
    B = x.shape[0]
    feat = x.reshape(B, -1)
    z = feat @ params["fcw"] + params["fcb"][0]
    return z @ params["fc2w"] + params["fc2b"][0]


if __name__ == "__main__":
    key = jax.random.PRNGKey(0)
    kp, kx1, kx2 = jax.random.split(key, 3)
    params = init_params(kp)

    # forward takes a list of NCL tensors; concat(dim=1) yields 4 channels.
    B = 2
    x_list = [jax.random.normal(kx1, (B, 2, L0), jnp.float32),
              jax.random.normal(kx2, (B, 2, L0), jnp.float32)]
    out = jax.block_until_ready(deepflow_forward(x_list, params))
    assert out.shape == (B, LABEL_N), out.shape
    ref = reference_forward(x_list, params)
    if not bool(jnp.allclose(out, ref, rtol=2e-4, atol=2e-4)):
        raise SystemExit(
            f"mismatch (B={B}): max abs diff = {float(jnp.max(jnp.abs(out - ref)))}")

    # Multi-tile grid check (tb=8 -> 2 grid steps, with tail padding).
    B2 = 12
    kx3, kx4 = jax.random.split(kx1)
    x_list2 = [jax.random.normal(kx3, (B2, 2, L0), jnp.float32),
               jax.random.normal(kx4, (B2, 2, L0), jnp.float32)]
    out2 = jax.block_until_ready(deepflow_forward(x_list2, params, tb=8))
    ref2 = reference_forward(x_list2, params)
    if not bool(jnp.allclose(out2, ref2, rtol=2e-4, atol=2e-4)):
        raise SystemExit(
            f"mismatch (B={B2}): max abs diff = "
            f"{float(jnp.max(jnp.abs(out2 - ref2)))}")

    print("KERNEL_OK")
</pallas_src>

<mosaic_0001>
module attributes {stable_mosaic.version = 11 : i64} {
  func.func @deepflow_kernel(%arg0: i32, %arg1: memref<648x4xf32, #tpu.memory_space<vmem>>, %arg2: memref<3x4x32xf32, #tpu.memory_space<vmem>>, %arg3: memref<1x32xf32, #tpu.memory_space<vmem>>, %arg4: memref<648x1xf32, #tpu.memory_space<vmem>>, %arg5: memref<648x1xf32, #tpu.memory_space<vmem>>, %arg6: memref<3x32x32xf32, #tpu.memory_space<vmem>>, %arg7: memref<1x32xf32, #tpu.memory_space<vmem>>, %arg8: memref<216x1xf32, #tpu.memory_space<vmem>>, %arg9: memref<216x1xf32, #tpu.memory_space<vmem>>, %arg10: memref<3x32x32xf32, #tpu.memory_space<vmem>>, %arg11: memref<1x32xf32, #tpu.memory_space<vmem>>, %arg12: memref<72x1xf32, #tpu.memory_space<vmem>>, %arg13: memref<72x1xf32, #tpu.memory_space<vmem>>, %arg14: memref<3x32x32xf32, #tpu.memory_space<vmem>>, %arg15: memref<1x32xf32, #tpu.memory_space<vmem>>, %arg16: memref<24x1xf32, #tpu.memory_space<vmem>>, %arg17: memref<24x1xf32, #tpu.memory_space<vmem>>, %arg18: memref<32x10xf32, #tpu.memory_space<vmem>>, %arg19: memref<1x10xf32, #tpu.memory_space<vmem>>, %arg20: memref<8x10xf32, #tpu.memory_space<vmem>>, %arg21: memref<648x32xf32, #tpu.memory_space<vmem>>, %arg22: memref<216x32xf32, #tpu.memory_space<vmem>>, %arg23: memref<72x32xf32, #tpu.memory_space<vmem>>, %arg24: memref<24x32xf32, #tpu.memory_space<vmem>>) attributes {dimension_semantics = [#tpu.dimension_semantics<parallel>], iteration_bounds = array<i64: 1>, scalar_prefetch = 0 : i64, scratch_operands = 4 : i64, tpu.core_type = #tpu.core_type<tc>, window_params = [{transform_indices = @transform_0, window_bounds = array<i64: 648, 4>}, {pipeline_mode = #tpu.pipeline_mode<synchronous>, transform_indices = @transform_1, window_bounds = array<i64: 3, 4, 32>}, {pipeline_mode = #tpu.pipeline_mode<synchronous>, transform_indices = @transform_2, window_bounds = array<i64: 1, 32>}, {pipeline_mode = #tpu.pipeline_mode<synchronous>, transform_indices = @transform_3, window_bounds = array<i64: 648, 1>}, {pipeline_mode = #tpu.pipeline_mode<synchronous>, transform_indices = @transform_4, window_bounds = array<i64: 648, 1>}, {pipeline_mode = #tpu.pipeline_mode<synchronous>, transform_indices = @transform_5, window_bounds = array<i64: 3, 32, 32>}, {pipeline_mode = #tpu.pipeline_mode<synchronous>, transform_indices = @transform_6, window_bounds = array<i64: 1, 32>}, {pipeline_mode = #tpu.pipeline_mode<synchronous>, transform_indices = @transform_7, window_bounds = array<i64: 216, 1>}, {pipeline_mode = #tpu.pipeline_mode<synchronous>, transform_indices = @transform_8, window_bounds = array<i64: 216, 1>}, {pipeline_mode = #tpu.pipeline_mode<synchronous>, transform_indices = @transform_9, window_bounds = array<i64: 3, 32, 32>}, {pipeline_mode = #tpu.pipeline_mode<synchronous>, transform_indices = @transform_10, window_bounds = array<i64: 1, 32>}, {pipeline_mode = #tpu.pipeline_mode<synchronous>, transform_indices = @transform_11, window_bounds = array<i64: 72, 1>}, {pipeline_mode = #tpu.pipeline_mode<synchronous>, transform_indices = @transform_12, window_bounds = array<i64: 72, 1>}, {pipeline_mode = #tpu.pipeline_mode<synchronous>, transform_indices = @transform_13, window_bounds = array<i64: 3, 32, 32>}, {pipeline_mode = #tpu.pipeline_mode<synchronous>, transform_indices = @transform_14, window_bounds = array<i64: 1, 32>}, {pipeline_mode = #tpu.pipeline_mode<synchronous>, transform_indices = @transform_15, window_bounds = array<i64: 24, 1>}, {pipeline_mode = #tpu.pipeline_mode<synchronous>, transform_indices = @transform_16, window_bounds = array<i64: 24, 1>}, {pipeline_mode = #tpu.pipeline_mode<synchronous>, transform_indices = @transform_17, window_bounds = array<i64: 32, 10>}, {pipeline_mode = #tpu.pipeline_mode<synchronous>, transform_indices = @transform_18, window_bounds = array<i64: 1, 10>}, {transform_indices = @transform_19, window_bounds = array<i64: 8, 10>}]} {
    %c0 = arith.constant 0 : index
    %c0_0 = arith.constant 0 : index
    %0 = vector.load %arg1[%c0, %c0_0] : memref<648x4xf32, #tpu.memory_space<vmem>>, vector<648x4xf32>
    %c0_1 = arith.constant 0 : index
    %c0_2 = arith.constant 0 : index
    %c0_3 = arith.constant 0 : index
    %1 = vector.load %arg2[%c0_1, %c0_2, %c0_3] : memref<3x4x32xf32, #tpu.memory_space<vmem>>, vector<1x4x32xf32>
    %2 = vector.shape_cast %1 : vector<1x4x32xf32> to vector<4x32xf32>
    %cst = arith.constant dense<0.000000e+00> : vector<648x32xf32>
    %3 = tpu.matmul %0, %2, %cst {dimension_numbers = #tpu.dot_dimension_numbers<[1], [0], [0], [1], [0, 0, 1, 1], [], []>} : vector<648x4xf32>, vector<4x32xf32>, vector<648x32xf32> -> vector<648x32xf32>
    %c1 = arith.constant 1 : index
    %c0_4 = arith.constant 0 : index
    %c0_5 = arith.constant 0 : index
    %4 = vector.load %arg2[%c1, %c0_4, %c0_5] : memref<3x4x32xf32, #tpu.memory_space<vmem>>, vector<1x4x32xf32>
    %5 = vector.shape_cast %4 : vector<1x4x32xf32> to vector<4x32xf32>
    %cst_6 = arith.constant dense<0.000000e+00> : vector<648x32xf32>
    %6 = tpu.matmul %0, %5, %cst_6 {dimension_numbers = #tpu.dot_dimension_numbers<[1], [0], [0], [1], [0, 0, 1, 1], [], []>} : vector<648x4xf32>, vector<4x32xf32>, vector<648x32xf32> -> vector<648x32xf32>
    %c2 = arith.constant 2 : index
    %c0_7 = arith.constant 0 : index
    %c0_8 = arith.constant 0 : index
    %7 = vector.load %arg2[%c2, %c0_7, %c0_8] : memref<3x4x32xf32, #tpu.memory_space<vmem>>, vector<1x4x32xf32>
    %8 = vector.shape_cast %7 : vector<1x4x32xf32> to vector<4x32xf32>
    %cst_9 = arith.constant dense<0.000000e+00> : vector<648x32xf32>
    %9 = tpu.matmul %0, %8, %cst_9 {dimension_numbers = #tpu.dot_dimension_numbers<[1], [0], [0], [1], [0, 0, 1, 1], [], []>} : vector<648x4xf32>, vector<4x32xf32>, vector<648x32xf32> -> vector<648x32xf32>
    %c1_i32 = arith.constant 1 : i32
    %10 = tpu.dynamic_rotate %3 by %c1_i32 dim 0 : vector<648x32xf32>, i32 -> vector<648x32xf32>
    %c0_10 = arith.constant 0 : index
    %c0_11 = arith.constant 0 : index
    %11 = vector.load %arg4[%c0_10, %c0_11] : memref<648x1xf32, #tpu.memory_space<vmem>>, vector<648x1xf32>
    %12 = vector.broadcast %11 : vector<648x1xf32> to vector<648x32xf32>
    %13 = arith.mulf %10, %12 : vector<648x32xf32>
    %14 = arith.addf %13, %6 : vector<648x32xf32>
    %c647_i32 = arith.constant 647 : i32
    %15 = tpu.dynamic_rotate %9 by %c647_i32 dim 0 : vector<648x32xf32>, i32 -> vector<648x32xf32>
    %c0_12 = arith.constant 0 : index
    %c0_13 = arith.constant 0 : index
    %16 = vector.load %arg5[%c0_12, %c0_13] : memref<648x1xf32, #tpu.memory_space<vmem>>, vector<648x1xf32>
    %17 = vector.broadcast %16 : vector<648x1xf32> to vector<648x32xf32>
    %18 = arith.mulf %15, %17 : vector<648x32xf32>
    %19 = arith.addf %14, %18 : vector<648x32xf32>
    %c0_14 = arith.constant 0 : index
    %c0_15 = arith.constant 0 : index
    %20 = vector.load %arg3[%c0_14, %c0_15] : memref<1x32xf32, #tpu.memory_space<vmem>>, vector<1x32xf32>
    %21 = vector.broadcast %20 : vector<1x32xf32> to vector<648x32xf32>
    %22 = arith.addf %19, %21 : vector<648x32xf32>
    %cst_16 = arith.constant 0.000000e+00 : f32
    %23 = vector.broadcast %cst_16 : f32 to vector<648x32xf32>
    %24 = arith.maximumf %22, %23 : vector<648x32xf32>
    %c0_17 = arith.constant 0 : index
    %c0_18 = arith.constant 0 : index
    %25 = vector.load %arg21[%c0_17, %c0_18] : memref<648x32xf32, #tpu.memory_space<vmem>>, vector<648x32xf32>
    tpu.vector_store %arg21[%c0_17, %c0_18], %24 {strides = array<i32>} : memref<648x32xf32, #tpu.memory_space<vmem>>, vector<648x32xf32>,
    %c0_19 = arith.constant 0 : index
    %c0_20 = arith.constant 0 : index
    %26 = tpu.strided_load %arg21[%c0_19, %c0_20] {strides = array<i32: 3, 1>} : memref<648x32xf32, #tpu.memory_space<vmem>>, vector<216x32xf32>
    %c1_21 = arith.constant 1 : index
    %c0_22 = arith.constant 0 : index
    %27 = tpu.strided_load %arg21[%c1_21, %c0_22] {strides = array<i32: 3, 1>} : memref<648x32xf32, #tpu.memory_space<vmem>>, vector<216x32xf32>
    %28 = arith.maximumf %26, %27 : vector<216x32xf32>
    %c2_23 = arith.constant 2 : index
    %c0_24 = arith.constant 0 : index
    %29 = tpu.strided_load %arg21[%c2_23, %c0_24] {strides = array<i32: 3, 1>} : memref<648x32xf32, #tpu.memory_space<vmem>>, vector<216x32xf32>
    %30 = arith.maximumf %28, %29 : vector<216x32xf32>
    %c0_25 = arith.constant 0 : index
    %c0_26 = arith.constant 0 : index
    %c0_27 = arith.constant 0 : index
    %31 = vector.load %arg6[%c0_25, %c0_26, %c0_27] : memref<3x32x32xf32, #tpu.memory_space<vmem>>, vector<1x32x32xf32>
    %32 = vector.shape_cast %31 : vector<1x32x32xf32> to vector<32x32xf32>
    %cst_28 = arith.constant dense<0.000000e+00> : vector<216x32xf32>
    %33 = tpu.matmul %30, %32, %cst_28 {dimension_numbers = #tpu.dot_dimension_numbers<[1], [0], [0], [1], [0, 0, 1, 1], [], []>} : vector<216x32xf32>, vector<32x32xf32>, vector<216x32xf32> -> vector<216x32xf32>
    %c1_29 = arith.constant 1 : index
    %c0_30 = arith.constant 0 : index
    %c0_31 = arith.constant 0 : index
    %34 = vector.load %arg6[%c1_29, %c0_30, %c0_31] : memref<3x32x32xf32, #tpu.memory_space<vmem>>, vector<1x32x32xf32>
    %35 = vector.shape_cast %34 : vector<1x32x32xf32> to vector<32x32xf32>
    %cst_32 = arith.constant dense<0.000000e+00> : vector<216x32xf32>
    %36 = tpu.matmul %30, %35, %cst_32 {dimension_numbers = #tpu.dot_dimension_numbers<[1], [0], [0], [1], [0, 0, 1, 1], [], []>} : vector<216x32xf32>, vector<32x32xf32>, vector<216x32xf32> -> vector<216x32xf32>
    %c2_33 = arith.constant 2 : index
    %c0_34 = arith.constant 0 : index
    %c0_35 = arith.constant 0 : index
    %37 = vector.load %arg6[%c2_33, %c0_34, %c0_35] : memref<3x32x32xf32, #tpu.memory_space<vmem>>, vector<1x32x32xf32>
    %38 = vector.shape_cast %37 : vector<1x32x32xf32> to vector<32x32xf32>
    %cst_36 = arith.constant dense<0.000000e+00> : vector<216x32xf32>
    %39 = tpu.matmul %30, %38, %cst_36 {dimension_numbers = #tpu.dot_dimension_numbers<[1], [0], [0], [1], [0, 0, 1, 1], [], []>} : vector<216x32xf32>, vector<32x32xf32>, vector<216x32xf32> -> vector<216x32xf32>
    %c1_i32_37 = arith.constant 1 : i32
    %40 = tpu.dynamic_rotate %33 by %c1_i32_37 dim 0 : vector<216x32xf32>, i32 -> vector<216x32xf32>
    %c0_38 = arith.constant 0 : index
    %c0_39 = arith.constant 0 : index
    %41 = vector.load %arg8[%c0_38, %c0_39] : memref<216x1xf32, #tpu.memory_space<vmem>>, vector<216x1xf32>
    %42 = vector.broadcast %41 : vector<216x1xf32> to vector<216x32xf32>
    %43 = arith.mulf %40, %42 : vector<216x32xf32>
    %44 = arith.addf %43, %36 : vector<216x32xf32>
    %c215_i32 = arith.constant 215 : i32
    %45 = tpu.dynamic_rotate %39 by %c215_i32 dim 0 : vector<216x32xf32>, i32 -> vector<216x32xf32>
    %c0_40 = arith.constant 0 : index
    %c0_41 = arith.constant 0 : index
    %46 = vector.load %arg9[%c0_40, %c0_41] : memref<216x1xf32, #tpu.memory_space<vmem>>, vector<216x1xf32>
    %47 = vector.broadcast %46 : vector<216x1xf32> to vector<216x32xf32>
    %48 = arith.mulf %45, %47 : vector<216x32xf32>
    %49 = arith.addf %44, %48 : vector<216x32xf32>
    %c0_42 = arith.constant 0 : index
    %c0_43 = arith.constant 0 : index
    %50 = vector.load %arg7[%c0_42, %c0_43] : memref<1x32xf32, #tpu.memory_space<vmem>>, vector<1x32xf32>
    %51 = vector.broadcast %50 : vector<1x32xf32> to vector<216x32xf32>
    %52 = arith.addf %49, %51 : vector<216x32xf32>
    %cst_44 = arith.constant 0.000000e+00 : f32
    %53 = vector.broadcast %cst_44 : f32 to vector<216x32xf32>
    %54 = arith.maximumf %52, %53 : vector<216x32xf32>
    %c0_45 = arith.constant 0 : index
    %c0_46 = arith.constant 0 : index
    %55 = vector.load %arg22[%c0_45, %c0_46] : memref<216x32xf32, #tpu.memory_space<vmem>>, vector<216x32xf32>
    tpu.vector_store %arg22[%c0_45, %c0_46], %54 {strides = array<i32>} : memref<216x32xf32, #tpu.memory_space<vmem>>, vector<216x32xf32>,
    %c0_47 = arith.constant 0 : index
    %c0_48 = arith.constant 0 : index
    %56 = tpu.strided_load %arg22[%c0_47, %c0_48] {strides = array<i32: 3, 1>} : memref<216x32xf32, #tpu.memory_space<vmem>>, vector<72x32xf32>
    %c1_49 = arith.constant 1 : index
    %c0_50 = arith.constant 0 : index
    %57 = tpu.strided_load %arg22[%c1_49, %c0_50] {strides = array<i32: 3, 1>} : memref<216x32xf32, #tpu.memory_space<vmem>>, vector<72x32xf32>
    %58 = arith.maximumf %56, %57 : vector<72x32xf32>
    %c2_51 = arith.constant 2 : index
    %c0_52 = arith.constant 0 : index
    %59 = tpu.strided_load %arg22[%c2_51, %c0_52] {strides = array<i32: 3, 1>} : memref<216x32xf32, #tpu.memory_space<vmem>>, vector<72x32xf32>
    %60 = arith.maximumf %58, %59 : vector<72x32xf32>
    %c0_53 = arith.constant 0 : index
    %c0_54 = arith.constant 0 : index
    %c0_55 = arith.constant 0 : index
    %61 = vector.load %arg10[%c0_53, %c0_54, %c0_55] : memref<3x32x32xf32, #tpu.memory_space<vmem>>, vector<1x32x32xf32>
    %62 = vector.shape_cast %61 : vector<1x32x32xf32> to vector<32x32xf32>
    %cst_56 = arith.constant dense<0.000000e+00> : vector<72x32xf32>
    %63 = tpu.matmul %60, %62, %cst_56 {dimension_numbers = #tpu.dot_dimension_numbers<[1], [0], [0], [1], [0, 0, 1, 1], [], []>} : vector<72x32xf32>, vector<32x32xf32>, vector<72x32xf32> -> vector<72x32xf32>
    %c1_57 = arith.constant 1 : index
    %c0_58 = arith.constant 0 : index
    %c0_59 = arith.constant 0 : index
    %64 = vector.load %arg10[%c1_57, %c0_58, %c0_59] : memref<3x32x32xf32, #tpu.memory_space<vmem>>, vector<1x32x32xf32>
    %65 = vector.shape_cast %64 : vector<1x32x32xf32> to vector<32x32xf32>
    %cst_60 = arith.constant dense<0.000000e+00> : vector<72x32xf32>
    %66 = tpu.matmul %60, %65, %cst_60 {dimension_numbers = #tpu.dot_dimension_numbers<[1], [0], [0], [1], [0, 0, 1, 1], [], []>} : vector<72x32xf32>, vector<32x32xf32>, vector<72x32xf32> -> vector<72x32xf32>
    %c2_61 = arith.constant 2 : index
    %c0_62 = arith.constant 0 : index
    %c0_63 = arith.constant 0 : index
    %67 = vector.load %arg10[%c2_61, %c0_62, %c0_63] : memref<3x32x32xf32, #tpu.memory_space<vmem>>, vector<1x32x32xf32>
    %68 = vector.shape_cast %67 : vector<1x32x32xf32> to vector<32x32xf32>
    %cst_64 = arith.constant dense<0.000000e+00> : vector<72x32xf32>
    %69 = tpu.matmul %60, %68, %cst_64 {dimension_numbers = #tpu.dot_dimension_numbers<[1], [0], [0], [1], [0, 0, 1, 1], [], []>} : vector<72x32xf32>, vector<32x32xf32>, vector<72x32xf32> -> vector<72x32xf32>
    %c1_i32_65 = arith.constant 1 : i32
    %70 = tpu.dynamic_rotate %63 by %c1_i32_65 dim 0 : vector<72x32xf32>, i32 -> vector<72x32xf32>
    %c0_66 = arith.constant 0 : index
    %c0_67 = arith.constant 0 : index
    %71 = vector.load %arg12[%c0_66, %c0_67] : memref<72x1xf32, #tpu.memory_space<vmem>>, vector<72x1xf32>
    %72 = vector.broadcast %71 : vector<72x1xf32> to vector<72x32xf32>
    %73 = arith.mulf %70, %72 : vector<72x32xf32>
    %74 = arith.addf %73, %66 : vector<72x32xf32>
    %c71_i32 = arith.constant 71 : i32
    %75 = tpu.dynamic_rotate %69 by %c71_i32 dim 0 : vector<72x32xf32>, i32 -> vector<72x32xf32>
    %c0_68 = arith.constant 0 : index
    %c0_69 = arith.constant 0 : index
    %76 = vector.load %arg13[%c0_68, %c0_69] : memref<72x1xf32, #tpu.memory_space<vmem>>, vector<72x1xf32>
    %77 = vector.broadcast %76 : vector<72x1xf32> to vector<72x32xf32>
    %78 = arith.mulf %75, %77 : vector<72x32xf32>
    %79 = arith.addf %74, %78 : vector<72x32xf32>
    %c0_70 = arith.constant 0 : index
    %c0_71 = arith.constant 0 : index
    %80 = vector.load %arg11[%c0_70, %c0_71] : memref<1x32xf32, #tpu.memory_space<vmem>>, vector<1x32xf32>
    %81 = vector.broadcast %80 : vector<1x32xf32> to vector<72x32xf32>
    %82 = arith.addf %79, %81 : vector<72x32xf32>
    %cst_72 = arith.constant 0.000000e+00 : f32
    %83 = vector.broadcast %cst_72 : f32 to vector<72x32xf32>
    %84 = arith.maximumf %82, %83 : vector<72x32xf32>
    %c0_73 = arith.constant 0 : index
    %c0_74 = arith.constant 0 : index
    %85 = vector.load %arg23[%c0_73, %c0_74] : memref<72x32xf32, #tpu.memory_space<vmem>>, vector<72x32xf32>
    tpu.vector_store %arg23[%c0_73, %c0_74], %84 {strides = array<i32>} : memref<72x32xf32, #tpu.memory_space<vmem>>, vector<72x32xf32>,
    %c0_75 = arith.constant 0 : index
    %c0_76 = arith.constant 0 : index
    %86 = tpu.strided_load %arg23[%c0_75, %c0_76] {strides = array<i32: 3, 1>} : memref<72x32xf32, #tpu.memory_space<vmem>>, vector<24x32xf32>
    %c1_77 = arith.constant 1 : index
    %c0_78 = arith.constant 0 : index
    %87 = tpu.strided_load %arg23[%c1_77, %c0_78] {strides = array<i32: 3, 1>} : memref<72x32xf32, #tpu.memory_space<vmem>>, vector<24x32xf32>
    %88 = arith.maximumf %86, %87 : vector<24x32xf32>
    %c2_79 = arith.constant 2 : index
    %c0_80 = arith.constant 0 : index
    %89 = tpu.strided_load %arg23[%c2_79, %c0_80] {strides = array<i32: 3, 1>} : memref<72x32xf32, #tpu.memory_space<vmem>>, vector<24x32xf32>
    %90 = arith.maximumf %88, %89 : vector<24x32xf32>
    %c0_81 = arith.constant 0 : index
    %c0_82 = arith.constant 0 : index
    %c0_83 = arith.constant 0 : index
    %91 = vector.load %arg14[%c0_81, %c0_82, %c0_83] : memref<3x32x32xf32, #tpu.memory_space<vmem>>, vector<1x32x32xf32>
    %92 = vector.shape_cast %91 : vector<1x32x32xf32> to vector<32x32xf32>
    %cst_84 = arith.constant dense<0.000000e+00> : vector<24x32xf32>
    %93 = tpu.matmul %90, %92, %cst_84 {dimension_numbers = #tpu.dot_dimension_numbers<[1], [0], [0], [1], [0, 0, 1, 1], [], []>} : vector<24x32xf32>, vector<32x32xf32>, vector<24x32xf32> -> vector<24x32xf32>
    %c1_85 = arith.constant 1 : index
    %c0_86 = arith.constant 0 : index
    %c0_87 = arith.constant 0 : index
    %94 = vector.load %arg14[%c1_85, %c0_86, %c0_87] : memref<3x32x32xf32, #tpu.memory_space<vmem>>, vector<1x32x32xf32>
    %95 = vector.shape_cast %94 : vector<1x32x32xf32> to vector<32x32xf32>
    %cst_88 = arith.constant dense<0.000000e+00> : vector<24x32xf32>
    %96 = tpu.matmul %90, %95, %cst_88 {dimension_numbers = #tpu.dot_dimension_numbers<[1], [0], [0], [1], [0, 0, 1, 1], [], []>} : vector<24x32xf32>, vector<32x32xf32>, vector<24x32xf32> -> vector<24x32xf32>
    %c2_89 = arith.constant 2 : index
    %c0_90 = arith.constant 0 : index
    %c0_91 = arith.constant 0 : index
    %97 = vector.load %arg14[%c2_89, %c0_90, %c0_91] : memref<3x32x32xf32, #tpu.memory_space<vmem>>, vector<1x32x32xf32>
    %98 = vector.shape_cast %97 : vector<1x32x32xf32> to vector<32x32xf32>
    %cst_92 = arith.constant dense<0.000000e+00> : vector<24x32xf32>
    %99 = tpu.matmul %90, %98, %cst_92 {dimension_numbers = #tpu.dot_dimension_numbers<[1], [0], [0], [1], [0, 0, 1, 1], [], []>} : vector<24x32xf32>, vector<32x32xf32>, vector<24x32xf32> -> vector<24x32xf32>
    %c1_i32_93 = arith.constant 1 : i32
    %100 = tpu.dynamic_rotate %93 by %c1_i32_93 dim 0 : vector<24x32xf32>, i32 -> vector<24x32xf32>
    %c0_94 = arith.constant 0 : index
    %c0_95 = arith.constant 0 : index
    %101 = vector.load %arg16[%c0_94, %c0_95] : memref<24x1xf32, #tpu.memory_space<vmem>>, vector<24x1xf32>
    %102 = vector.broadcast %101 : vector<24x1xf32> to vector<24x32xf32>
    %103 = arith.mulf %100, %102 : vector<24x32xf32>
    %104 = arith.addf %103, %96 : vector<24x32xf32>
    %c23_i32 = arith.constant 23 : i32
    %105 = tpu.dynamic_rotate %99 by %c23_i32 dim 0 : vector<24x32xf32>, i32 -> vector<24x32xf32>
    %c0_96 = arith.constant 0 : index
    %c0_97 = arith.constant 0 : index
    %106 = vector.load %arg17[%c0_96, %c0_97] : memref<24x1xf32, #tpu.memory_space<vmem>>, vector<24x1xf32>
    %107 = vector.broadcast %106 : vector<24x1xf32> to vector<24x32xf32>
    %108 = arith.mulf %105, %107 : vector<24x32xf32>
    %109 = arith.addf %104, %108 : vector<24x32xf32>
    %c0_98 = arith.constant 0 : index
    %c0_99 = arith.constant 0 : index
    %110 = vector.load %arg15[%c0_98, %c0_99] : memref<1x32xf32, #tpu.memory_space<vmem>>, vector<1x32xf32>
    %111 = vector.broadcast %110 : vector<1x32xf32> to vector<24x32xf32>
    %112 = arith.addf %109, %111 : vector<24x32xf32>
    %c0_100 = arith.constant 0 : index
    %c0_101 = arith.constant 0 : index
    %113 = vector.load %arg24[%c0_100, %c0_101] : memref<24x32xf32, #tpu.memory_space<vmem>>, vector<24x32xf32>
    tpu.vector_store %arg24[%c0_100, %c0_101], %112 {strides = array<i32>} : memref<24x32xf32, #tpu.memory_space<vmem>>, vector<24x32xf32>,
    %c0_102 = arith.constant 0 : index
    %c0_103 = arith.constant 0 : index
    %114 = tpu.strided_load %arg24[%c0_102, %c0_103] {strides = array<i32: 3, 1>} : memref<24x32xf32, #tpu.memory_space<vmem>>, vector<8x32xf32>
    %c1_104 = arith.constant 1 : index
    %c0_105 = arith.constant 0 : index
    %115 = tpu.strided_load %arg24[%c1_104, %c0_105] {strides = array<i32: 3, 1>} : memref<24x32xf32, #tpu.memory_space<vmem>>, vector<8x32xf32>
    %116 = arith.maximumf %114, %115 : vector<8x32xf32>
    %c2_106 = arith.constant 2 : index
    %c0_107 = arith.constant 0 : index
    %117 = tpu.strided_load %arg24[%c2_106, %c0_107] {strides = array<i32: 3, 1>} : memref<24x32xf32, #tpu.memory_space<vmem>>, vector<8x32xf32>
    %118 = arith.maximumf %116, %117 : vector<8x32xf32>
    %c0_108 = arith.constant 0 : index
    %c0_109 = arith.constant 0 : index
    %119 = vector.load %arg18[%c0_108, %c0_109] : memref<32x10xf32, #tpu.memory_space<vmem>>, vector<32x10xf32>
    %cst_110 = arith.constant dense<0.000000e+00> : vector<8x10xf32>
    %120 = tpu.matmul %118, %119, %cst_110 {dimension_numbers = #tpu.dot_dimension_numbers<[1], [0], [0], [1], [0, 0, 1, 1], [], []>} : vector<8x32xf32>, vector<32x10xf32>, vector<8x10xf32> -> vector<8x10xf32>
    %c0_111 = arith.constant 0 : index
    %c0_112 = arith.constant 0 : index
    %121 = vector.load %arg19[%c0_111, %c0_112] : memref<1x10xf32, #tpu.memory_space<vmem>>, vector<1x10xf32>
    %122 = vector.broadcast %121 : vector<1x10xf32> to vector<8x10xf32>
    %123 = arith.addf %120, %122 : vector<8x10xf32>
    %c0_113 = arith.constant 0 : index
    %c0_114 = arith.constant 0 : index
    %124 = vector.load %arg20[%c0_113, %c0_114] : memref<8x10xf32, #tpu.memory_space<vmem>>, vector<8x10xf32>
    tpu.vector_store %arg20[%c0_113, %c0_114], %123 {strides = array<i32>} : memref<8x10xf32, #tpu.memory_space<vmem>>, vector<8x10xf32>,
    return
  }
  func.func @transform_0(%arg0: i32) -> (i32, i32) {
    %c0_i32 = arith.constant 0 : i32
    %c0_i32_0 = arith.constant 0 : i32
    return %arg0, %c0_i32 : i32, i32
  }
  func.func @transform_1(%arg0: i32) -> (i32, i32, i32) {
    %c0_i32 = arith.constant 0 : i32
    %c0_i32_0 = arith.constant 0 : i32
    %c0_i32_1 = arith.constant 0 : i32
    %c0_i32_2 = arith.constant 0 : i32
    return %c0_i32, %c0_i32_0, %c0_i32_1 : i32, i32, i32
  }
  func.func @transform_2(%arg0: i32) -> (i32, i32) {
    %c0_i32 = arith.constant 0 : i32
    %c0_i32_0 = arith.constant 0 : i32
    %c0_i32_1 = arith.constant 0 : i32
    return %c0_i32, %c0_i32_0 : i32, i32
  }
  func.func @transform_3(%arg0: i32) -> (i32, i32) {
    %c0_i32 = arith.constant 0 : i32
    %c0_i32_0 = arith.constant 0 : i32
    %c0_i32_1 = arith.constant 0 : i32
    return %c0_i32, %c0_i32_0 : i32, i32
  }
  func.func @transform_4(%arg0: i32) -> (i32, i32) {
    %c0_i32 = arith.constant 0 : i32
    %c0_i32_0 = arith.constant 0 : i32
    %c0_i32_1 = arith.constant 0 : i32
    return %c0_i32, %c0_i32_0 : i32, i32
  }
  func.func @transform_5(%arg0: i32) -> (i32, i32, i32) {
    %c0_i32 = arith.constant 0 : i32
    %c0_i32_0 = arith.constant 0 : i32
    %c0_i32_1 = arith.constant 0 : i32
    %c0_i32_2 = arith.constant 0 : i32
    return %c0_i32, %c0_i32_0, %c0_i32_1 : i32, i32, i32
  }
  func.func @transform_6(%arg0: i32) -> (i32, i32) {
    %c0_i32 = arith.constant 0 : i32
    %c0_i32_0 = arith.constant 0 : i32
    %c0_i32_1 = arith.constant 0 : i32
    return %c0_i32, %c0_i32_0 : i32, i32
  }
  func.func @transform_7(%arg0: i32) -> (i32, i32) {
    %c0_i32 = arith.constant 0 : i32
    %c0_i32_0 = arith.constant 0 : i32
    %c0_i32_1 = arith.constant 0 : i32
    return %c0_i32, %c0_i32_0 : i32, i32
  }
  func.func @transform_8(%arg0: i32) -> (i32, i32) {
    %c0_i32 = arith.constant 0 : i32
    %c0_i32_0 = arith.constant 0 : i32
    %c0_i32_1 = arith.constant 0 : i32
    return %c0_i32, %c0_i32_0 : i32, i32
  }
  func.func @transform_9(%arg0: i32) -> (i32, i32, i32) {
    %c0_i32 = arith.constant 0 : i32
    %c0_i32_0 = arith.constant 0 : i32
    %c0_i32_1 = arith.constant 0 : i32
    %c0_i32_2 = arith.constant 0 : i32
    return %c0_i32, %c0_i32_0, %c0_i32_1 : i32, i32, i32
  }
  func.func @transform_10(%arg0: i32) -> (i32, i32) {
    %c0_i32 = arith.constant 0 : i32
    %c0_i32_0 = arith.constant 0 : i32
    %c0_i32_1 = arith.constant 0 : i32
    return %c0_i32, %c0_i32_0 : i32, i32
  }
  func.func @transform_11(%arg0: i32) -> (i32, i32) {
    %c0_i32 = arith.constant 0 : i32
    %c0_i32_0 = arith.constant 0 : i32
    %c0_i32_1 = arith.constant 0 : i32
    return %c0_i32, %c0_i32_0 : i32, i32
  }
  func.func @transform_12(%arg0: i32) -> (i32, i32) {
    %c0_i32 = arith.constant 0 : i32
    %c0_i32_0 = arith.constant 0 : i32
    %c0_i32_1 = arith.constant 0 : i32
    return %c0_i32, %c0_i32_0 : i32, i32
  }
  func.func @transform_13(%arg0: i32) -> (i32, i32, i32) {
    %c0_i32 = arith.constant 0 : i32
    %c0_i32_0 = arith.constant 0 : i32
    %c0_i32_1 = arith.constant 0 : i32
    %c0_i32_2 = arith.constant 0 : i32
    return %c0_i32, %c0_i32_0, %c0_i32_1 : i32, i32, i32
  }
  func.func @transform_14(%arg0: i32) -> (i32, i32) {
    %c0_i32 = arith.constant 0 : i32
    %c0_i32_0 = arith.constant 0 : i32
    %c0_i32_1 = arith.constant 0 : i32
    return %c0_i32, %c0_i32_0 : i32, i32
  }
  func.func @transform_15(%arg0: i32) -> (i32, i32) {
    %c0_i32 = arith.constant 0 : i32
    %c0_i32_0 = arith.constant 0 : i32
    %c0_i32_1 = arith.constant 0 : i32
    return %c0_i32, %c0_i32_0 : i32, i32
  }
  func.func @transform_16(%arg0: i32) -> (i32, i32) {
    %c0_i32 = arith.constant 0 : i32
    %c0_i32_0 = arith.constant 0 : i32
    %c0_i32_1 = arith.constant 0 : i32
    return %c0_i32, %c0_i32_0 : i32, i32
  }
  func.func @transform_17(%arg0: i32) -> (i32, i32) {
    %c0_i32 = arith.constant 0 : i32
    %c0_i32_0 = arith.constant 0 : i32
    %c0_i32_1 = arith.constant 0 : i32
    return %c0_i32, %c0_i32_0 : i32, i32
  }
  func.func @transform_18(%arg0: i32) -> (i32, i32) {
    %c0_i32 = arith.constant 0 : i32
    %c0_i32_0 = arith.constant 0 : i32
    %c0_i32_1 = arith.constant 0 : i32
    return %c0_i32, %c0_i32_0 : i32, i32
  }
  func.func @transform_19(%arg0: i32) -> (i32, i32) {
    %c0_i32 = arith.constant 0 : i32
    %c0_i32_0 = arith.constant 0 : i32
    return %arg0, %c0_i32 : i32, i32
  }
}

</mosaic_0001>

<llo_original>
// kernel: tpu_custom_call.1
$region0: #{tpu_custom_call.1}
  #allocation0 [shape = 'u32[]', space=smem, size = 0x4, offset = 0x4, fixed_abs, tag = 'smem constant byte address 0x4 - core index']
  #allocation1 [shape = 'u32[144,128]{1,0:T(1,128)}', space=vmem, size = 0x12000, scoped, tag = 'internal scratch']
  #allocation2 [shape = 'f32[648,32]{1,0:T(8,128)}', space=vmem, size = 0x51000, scoped, tag = 'scratch operand']
  #allocation3 [shape = 'f32[216,32]{1,0:T(8,128)}', space=vmem, size = 0x1b000, scoped, tag = 'scratch operand']
  #allocation4 [shape = 'f32[72,32]{1,0:T(8,128)}', space=vmem, size = 0x9000, scoped, tag = 'scratch operand']
  #allocation5 [shape = 'f32[24,32]{1,0:T(8,128)}', space=vmem, size = 0x3000, scoped, tag = 'scratch operand']
  %s0 = inlined_call_operand.vmem [shape: f32[648,4], index: 0, kind: input, shape index: {}]
  %s1 = inlined_call_operand.vmem [shape: f32[3,4,32], index: 1, kind: input, shape index: {}]
  %s2 = inlined_call_operand.vmem [shape: f32[1,32], index: 2, kind: input, shape index: {}]
  %s3 = inlined_call_operand.vmem [shape: f32[648,1], index: 3, kind: input, shape index: {}]
  %s4 = inlined_call_operand.vmem [shape: f32[648,1], index: 4, kind: input, shape index: {}]
  %s5 = inlined_call_operand.vmem [shape: f32[3,32,32], index: 5, kind: input, shape index: {}]
  %s6 = inlined_call_operand.vmem [shape: f32[1,32], index: 6, kind: input, shape index: {}]
  %s7 = inlined_call_operand.vmem [shape: f32[216,1], index: 7, kind: input, shape index: {}]
  %s8 = inlined_call_operand.vmem [shape: f32[216,1], index: 8, kind: input, shape index: {}]
  %s9 = inlined_call_operand.vmem [shape: f32[3,32,32], index: 9, kind: input, shape index: {}]
  %s10 = inlined_call_operand.vmem [shape: f32[1,32], index: 10, kind: input, shape index: {}]
  %s11 = inlined_call_operand.vmem [shape: f32[72,1], index: 11, kind: input, shape index: {}]
  %s12 = inlined_call_operand.vmem [shape: f32[72,1], index: 12, kind: input, shape index: {}]
  %s13 = inlined_call_operand.vmem [shape: f32[3,32,32], index: 13, kind: input, shape index: {}]
  %s14 = inlined_call_operand.vmem [shape: f32[1,32], index: 14, kind: input, shape index: {}]
  %s15 = inlined_call_operand.vmem [shape: f32[24,1], index: 15, kind: input, shape index: {}]
  %s16 = inlined_call_operand.vmem [shape: f32[24,1], index: 16, kind: input, shape index: {}]
  %s17 = inlined_call_operand.vmem [shape: f32[32,10], index: 17, kind: input, shape index: {}]
  %s18 = inlined_call_operand.vmem [shape: f32[1,10], index: 18, kind: input, shape index: {}]
  %s19 = inlined_call_operand.hbm [shape: f32[8,10], index: 19, kind: output, shape index: {}]
  %s20 = sld [smem:[#allocation0]]
  $region86: #{tpu_custom_call.1} parent=0
    _
  %s22 = ssub.s32 1, %s20
  %s23 = scalar_select 0, %s22, %s20
  $region1: #{tpu_custom_call.1} parent=0
    #allocation6 [shape = 'u8[4096]{0}', space=vmem, size = 0x1000, scoped, tag = 'output window, operand 0, single buffered']
    #allocation7 [shape = 's32[1]{0}', space=sflag, size = 0x4, scoped, tag = 'scoped memory for tpu_custom_call.1']
    %24 = vsyncpa [#allocation7], 0
    // Predicated region
    $region2: #{tpu_custom_call.1} parent=1 // pred_check
      _
    $region3: #{tpu_custom_call.1} parent=1 // pred_check_branch
      %26 = sbr.rel (0) target = $region5
    $region4: #{tpu_custom_call.1} parent=1 // pred_region
      _
    $region5: #{tpu_custom_call.1} parent=1 // pred_fallthru
      _
    // Predicated region
    $region6: #{tpu_custom_call.1} parent=1 // pred_check
      _
    $region7: #{tpu_custom_call.1} parent=1 // pred_check_branch
      %28 = sbr.rel (0) target = $region9
    $region8: #{tpu_custom_call.1} parent=1 // pred_region
      _
    $region9: #{tpu_custom_call.1} parent=1 // pred_fallthru
      _
    // Predicated region
    $region10: #{tpu_custom_call.1} parent=1 // pred_check
      _
    $region11: #{tpu_custom_call.1} parent=1 // pred_check_branch
      %30 = sbr.rel (0) target = $region13
    $region12: #{tpu_custom_call.1} parent=1 // pred_region
      _
    $region13: #{tpu_custom_call.1} parent=1 // pred_fallthru
      _
    // Predicated region
    $region14: #{tpu_custom_call.1} parent=1 // pred_check
      _
    $region15: #{tpu_custom_call.1} parent=1 // pred_check_branch
      %32 = sbr.rel (0) target = $region17
    $region16: #{tpu_custom_call.1} parent=1 // pred_region
      _
    $region17: #{tpu_custom_call.1} parent=1 // pred_fallthru
      _
    // Predicated region
    $region18: #{tpu_custom_call.1} parent=1 // pred_check
      _
    $region19: #{tpu_custom_call.1} parent=1 // pred_check_branch
      %34 = sbr.rel (0) target = $region21
    $region20: #{tpu_custom_call.1} parent=1 // pred_region
      _
    $region21: #{tpu_custom_call.1} parent=1 // pred_fallthru
      _
    // Predicated region
    $region22: #{tpu_custom_call.1} parent=1 // pred_check
      _
    $region23: #{tpu_custom_call.1} parent=1 // pred_check_branch
      %36 = sbr.rel (0) target = $region25
    $region24: #{tpu_custom_call.1} parent=1 // pred_region
      _
    $region25: #{tpu_custom_call.1} parent=1 // pred_fallthru
      _
    // Predicated region
    $region26: #{tpu_custom_call.1} parent=1 // pred_check
      _
    $region27: #{tpu_custom_call.1} parent=1 // pred_check_branch
      %38 = sbr.rel (0) target = $region29
    $region28: #{tpu_custom_call.1} parent=1 // pred_region
      _
    $region29: #{tpu_custom_call.1} parent=1 // pred_fallthru
      _
    // Predicated region
    $region30: #{tpu_custom_call.1} parent=1 // pred_check
      _
    $region31: #{tpu_custom_call.1} parent=1 // pred_check_branch
      %40 = sbr.rel (0) target = $region33
    $region32: #{tpu_custom_call.1} parent=1 // pred_region
      _
    $region33: #{tpu_custom_call.1} parent=1 // pred_fallthru
      _
    // Predicated region
    $region34: #{tpu_custom_call.1} parent=1 // pred_check
      _
    $region35: #{tpu_custom_call.1} parent=1 // pred_check_branch
      %42 = sbr.rel (0) target = $region37
    $region36: #{tpu_custom_call.1} parent=1 // pred_region
      _
    $region37: #{tpu_custom_call.1} parent=1 // pred_fallthru
      _
    // Predicated region
    $region38: #{tpu_custom_call.1} parent=1 // pred_check
      _
    $region39: #{tpu_custom_call.1} parent=1 // pred_check_branch
      %44 = sbr.rel (0) target = $region41
    $region40: #{tpu_custom_call.1} parent=1 // pred_region
      _
    $region41: #{tpu_custom_call.1} parent=1 // pred_fallthru
      _
    // Predicated region
    $region42: #{tpu_custom_call.1} parent=1 // pred_check
      _
    $region43: #{tpu_custom_call.1} parent=1 // pred_check_branch
      %46 = sbr.rel (0) target = $region45
    $region44: #{tpu_custom_call.1} parent=1 // pred_region
      _
    $region45: #{tpu_custom_call.1} parent=1 // pred_fallthru
      _
    // Predicated region
    $region46: #{tpu_custom_call.1} parent=1 // pred_check
      _
    $region47: #{tpu_custom_call.1} parent=1 // pred_check_branch
      %48 = sbr.rel (0) target = $region49
    $region48: #{tpu_custom_call.1} parent=1 // pred_region
      _
    $region49: #{tpu_custom_call.1} parent=1 // pred_fallthru
      _
    // Predicated region
    $region50: #{tpu_custom_call.1} parent=1 // pred_check
      _
    $region51: #{tpu_custom_call.1} parent=1 // pred_check_branch
      %50 = sbr.rel (0) target = $region53
    $region52: #{tpu_custom_call.1} parent=1 // pred_region
      _
    $region53: #{tpu_custom_call.1} parent=1 // pred_fallthru
      _
    // Predicated region
    $region54: #{tpu_custom_call.1} parent=1 // pred_check
      _
    $region55: #{tpu_custom_call.1} parent=1 // pred_check_branch
      %52 = sbr.rel (0) target = $region57
    $region56: #{tpu_custom_call.1} parent=1 // pred_region
      _
    $region57: #{tpu_custom_call.1} parent=1 // pred_fallthru
      _
    // Predicated region
    $region58: #{tpu_custom_call.1} parent=1 // pred_check
      _
    $region59: #{tpu_custom_call.1} parent=1 // pred_check_branch
      %54 = sbr.rel (0) target = $region61
    $region60: #{tpu_custom_call.1} parent=1 // pred_region
      _
    $region61: #{tpu_custom_call.1} parent=1 // pred_fallthru
      _
    // Predicated region
    $region62: #{tpu_custom_call.1} parent=1 // pred_check
      _
    $region63: #{tpu_custom_call.1} parent=1 // pred_check_branch
      %56 = sbr.rel (0) target = $region65
    $region64: #{tpu_custom_call.1} parent=1 // pred_region
      _
    $region65: #{tpu_custom_call.1} parent=1 // pred_fallthru
      _
    // Predicated region
    $region66: #{tpu_custom_call.1} parent=1 // pred_check
      _
    $region67: #{tpu_custom_call.1} parent=1 // pred_check_branch
      %58 = sbr.rel (0) target = $region69
    $region68: #{tpu_custom_call.1} parent=1 // pred_region
      _
    $region69: #{tpu_custom_call.1} parent=1 // pred_fallthru
      _
    // Predicated region
    $region70: #{tpu_custom_call.1} parent=1 // pred_check
      _
    $region71: #{tpu_custom_call.1} parent=1 // pred_check_branch
      %60 = sbr.rel (0) target = $region73
    $region72: #{tpu_custom_call.1} parent=1 // pred_region
      _
    $region73: #{tpu_custom_call.1} parent=1 // pred_fallthru
      _
    // Predicated region
    $region74: #{tpu_custom_call.1} parent=1 // pred_check
      _
    $region75: #{tpu_custom_call.1} parent=1 // pred_check_branch
      %62 = sbr.rel (0) target = $region77
    $region76: #{tpu_custom_call.1} parent=1 // pred_region
      _
    $region77: #{tpu_custom_call.1} parent=1 // pred_fallthru
      _
    %v63 = vld [vmem:[%s0] sm:$0xff]
    %v64 = vld [vmem:[%s0 + $0x8] sm:$0xff]
    %v65 = vld [vmem:[%s0 + $0x10] sm:$0xff]
    %v66 = vld [vmem:[%s0 + $0x18] sm:$0xff]
    %v67 = vld [vmem:[%s0 + $0x20] sm:$0xff]
    %v68 = vld [vmem:[%s0 + $0x28] sm:$0xff]
    %v69 = vld [vmem:[%s0 + $0x30] sm:$0xff]
    %v70 = vld [vmem:[%s0 + $0x38] sm:$0xff]
    %v71 = vld [vmem:[%s0 + $0x40] sm:$0xff]
    %v72 = vld [vmem:[%s0 + $0x48] sm:$0xff]
    %v73 = vld [vmem:[%s0 + $0x50] sm:$0xff]
    %v74 = vld [vmem:[%s0 + $0x58] sm:$0xff]
    %v75 = vld [vmem:[%s0 + $0x60] sm:$0xff]
    %v76 = vld [vmem:[%s0 + $0x68] sm:$0xff]
    %v77 = vld [vmem:[%s0 + $0x70] sm:$0xff]
    %v78 = vld [vmem:[%s0 + $0x78] sm:$0xff]
    %v79 = vld [vmem:[%s0 + $0x80] sm:$0xff]
    %v80 = vld [vmem:[%s0 + $0x88] sm:$0xff]
    %v81 = vld [vmem:[%s0 + $0x90] sm:$0xff]
    %v82 = vld [vmem:[%s0 + $0x98] sm:$0xff]
    %v83 = vld [vmem:[%s0 + $0xa0] sm:$0xff]
    %v84 = vld [vmem:[%s0 + $0xa8] sm:$0xff]
    %v85 = vld [vmem:[%s0 + $0xb0] sm:$0xff]
    %v86 = vld [vmem:[%s0 + $0xb8] sm:$0xff]
    %v87 = vld [vmem:[%s0 + $0xc0] sm:$0xff]
    %v88 = vld [vmem:[%s0 + $0xc8] sm:$0xff]
    %v89 = vld [vmem:[%s0 + $0xd0] sm:$0xff]
    %v90 = vld [vmem:[%s0 + $0xd8] sm:$0xff]
    %v91 = vld [vmem:[%s0 + $0xe0] sm:$0xff]
    %v92 = vld [vmem:[%s0 + $0xe8] sm:$0xff]
    %v93 = vld [vmem:[%s0 + $0xf0] sm:$0xff]
    %v94 = vld [vmem:[%s0 + $0xf8] sm:$0xff]
    %v95 = vld [vmem:[%s0 + $0x100] sm:$0xff]
    %v96 = vld [vmem:[%s0 + $0x108] sm:$0xff]
    %v97 = vld [vmem:[%s0 + $0x110] sm:$0xff]
    %v98 = vld [vmem:[%s0 + $0x118] sm:$0xff]
    %v99 = vld [vmem:[%s0 + $0x120] sm:$0xff]
    %v100 = vld [vmem:[%s0 + $0x128] sm:$0xff]
    %v101 = vld [vmem:[%s0 + $0x130] sm:$0xff]
    %v102 = vld [vmem:[%s0 + $0x138] sm:$0xff]
    %v103 = vld [vmem:[%s0 + $0x140] sm:$0xff]
    %v104 = vld [vmem:[%s0 + $0x148] sm:$0xff]
    %v105 = vld [vmem:[%s0 + $0x150] sm:$0xff]
    %v106 = vld [vmem:[%s0 + $0x158] sm:$0xff]
    %v107 = vld [vmem:[%s0 + $0x160] sm:$0xff]
    %v108 = vld [vmem:[%s0 + $0x168] sm:$0xff]
    %v109 = vld [vmem:[%s0 + $0x170] sm:$0xff]
    %v110 = vld [vmem:[%s0 + $0x178] sm:$0xff]
    %v111 = vld [vmem:[%s0 + $0x180] sm:$0xff]
    %v112 = vld [vmem:[%s0 + $0x188] sm:$0xff]
    %v113 = vld [vmem:[%s0 + $0x190] sm:$0xff]
    %v114 = vld [vmem:[%s0 + $0x198] sm:$0xff]
    %v115 = vld [vmem:[%s0 + $0x1a0] sm:$0xff]
    %v116 = vld [vmem:[%s0 + $0x1a8] sm:$0xff]
    %v117 = vld [vmem:[%s0 + $0x1b0] sm:$0xff]
    %v118 = vld [vmem:[%s0 + $0x1b8] sm:$0xff]
    %v119 = vld [vmem:[%s0 + $0x1c0] sm:$0xff]
    %v120 = vld [vmem:[%s0 + $0x1c8] sm:$0xff]
    %v121 = vld [vmem:[%s0 + $0x1d0] sm:$0xff]
    %v122 = vld [vmem:[%s0 + $0x1d8] sm:$0xff]
    %v123 = vld [vmem:[%s0 + $0x1e0] sm:$0xff]
    %v124 = vld [vmem:[%s0 + $0x1e8] sm:$0xff]
    %v125 = vld [vmem:[%s0 + $0x1f0] sm:$0xff]
    %v126 = vld [vmem:[%s0 + $0x1f8] sm:$0xff]
    %v127 = vld [vmem:[%s0 + $0x200] sm:$0xff]
    %v128 = vld [vmem:[%s0 + $0x208] sm:$0xff]
    %v129 = vld [vmem:[%s0 + $0x210] sm:$0xff]
    %v130 = vld [vmem:[%s0 + $0x218] sm:$0xff]
    %v131 = vld [vmem:[%s0 + $0x220] sm:$0xff]
    %v132 = vld [vmem:[%s0 + $0x228] sm:$0xff]
    %v133 = vld [vmem:[%s0 + $0x230] sm:$0xff]
    %v134 = vld [vmem:[%s0 + $0x238] sm:$0xff]
    %v135 = vld [vmem:[%s0 + $0x240] sm:$0xff]
    %v136 = vld [vmem:[%s0 + $0x248] sm:$0xff]
    %v137 = vld [vmem:[%s0 + $0x250] sm:$0xff]
    %v138 = vld [vmem:[%s0 + $0x258] sm:$0xff]
    %v139 = vld [vmem:[%s0 + $0x260] sm:$0xff]
    %v140 = vld [vmem:[%s0 + $0x268] sm:$0xff]
    %v141 = vld [vmem:[%s0 + $0x270] sm:$0xff]
    %v142 = vld [vmem:[%s0 + $0x278] sm:$0xff]
    %v143 = vld [vmem:[%s0 + $0x280] sm:$0xff]
    %v144 = vld [vmem:[%s1] sm:$0xf]
    %vm145 = vcmask 31744
    %v147 = vsel %vm145, %v63, 0
    %v150 = vsel %vm145, %v64, 0
    %v153 = vsel %vm145, %v65, 0
    %v156 = vsel %vm145, %v66, 0
    %v159 = vsel %vm145, %v67, 0
    %v162 = vsel %vm145, %v68, 0
    %v165 = vsel %vm145, %v69, 0
    %v168 = vsel %vm145, %v70, 0
    %v171 = vsel %vm145, %v71, 0
    %v174 = vsel %vm145, %v72, 0
    %v177 = vsel %vm145, %v73, 0
    %v180 = vsel %vm145, %v74, 0
    %v183 = vsel %vm145, %v75, 0
    %v186 = vsel %vm145, %v76, 0
    %v189 = vsel %vm145, %v77, 0
    %v192 = vsel %vm145, %v78, 0
    %v195 = vsel %vm145, %v79, 0
    %v198 = vsel %vm145, %v80, 0
    %v201 = vsel %vm145, %v81, 0
    %v204 = vsel %vm145, %v82, 0
    %v207 = vsel %vm145, %v83, 0
    %v210 = vsel %vm145, %v84, 0
    %v213 = vsel %vm145, %v85, 0
    %v216 = vsel %vm145, %v86, 0
    %v219 = vsel %vm145, %v87, 0
    %v222 = vsel %vm145, %v88, 0
    %v225 = vsel %vm145, %v89, 0
    %v228 = vsel %vm145, %v90, 0
    %v231 = vsel %vm145, %v91, 0
    %v234 = vsel %vm145, %v92, 0
    %v237 = vsel %vm145, %v93, 0
    %v240 = vsel %vm145, %v94, 0
    %v243 = vsel %vm145, %v95, 0
    %v246 = vsel %vm145, %v96, 0
    %v249 = vsel %vm145, %v97, 0
    %v252 = vsel %vm145, %v98, 0
    %v255 = vsel %vm145, %v99, 0
    %v258 = vsel %vm145, %v100, 0
    %v261 = vsel %vm145, %v101, 0
    %v264 = vsel %vm145, %v102, 0
    %v267 = vsel %vm145, %v103, 0
    %v270 = vsel %vm145, %v104, 0
    %v273 = vsel %vm145, %v105, 0
    %v276 = vsel %vm145, %v106, 0
    %v279 = vsel %vm145, %v107, 0
    %v282 = vsel %vm145, %v108, 0
    %v285 = vsel %vm145, %v109, 0
    %v288 = vsel %vm145, %v110, 0
    %v291 = vsel %vm145, %v111, 0
    %v294 = vsel %vm145, %v112, 0
    %v297 = vsel %vm145, %v113, 0
    %v300 = vsel %vm145, %v114, 0
    %v303 = vsel %vm145, %v115, 0
    %v306 = vsel %vm145, %v116, 0
    %v309 = vsel %vm145, %v117, 0
    %v312 = vsel %vm145, %v118, 0
    %v315 = vsel %vm145, %v119, 0
    %v318 = vsel %vm145, %v120, 0
    %v321 = vsel %vm145, %v121, 0
    %v324 = vsel %vm145, %v122, 0
    %v327 = vsel %vm145, %v123, 0
    %v330 = vsel %vm145, %v124, 0
    %v333 = vsel %vm145, %v125, 0
    %v336 = vsel %vm145, %v126, 0
    %v339 = vsel %vm145, %v127, 0
    %v342 = vsel %vm145, %v128, 0
    %v345 = vsel %vm145, %v129, 0
    %v348 = vsel %vm145, %v130, 0
    %v351 = vsel %vm145, %v131, 0
    %v354 = vsel %vm145, %v132, 0
    %v357 = vsel %vm145, %v133, 0
    %v360 = vsel %vm145, %v134, 0
    %v363 = vsel %vm145, %v135, 0
    %v366 = vsel %vm145, %v136, 0
    %v369 = vsel %vm145, %v137, 0
    %v372 = vsel %vm145, %v138, 0
    %v375 = vsel %vm145, %v139, 0
    %v378 = vsel %vm145, %v140, 0
    %v381 = vsel %vm145, %v141, 0
    %v384 = vsel %vm145, %v142, 0
    %v387 = vsel %vm145, %v143, 0
    %vm389 = vcmask 1043456
    %v391 = vsel %vm389, %v144, 0
    %393 = vmatprep.subr.mxu0 0.0
    %394 = vmatpush1.msra.mxu0 0.0
    %395 = vmatprep.subr.mxu0 0.0
    %396 = vmatpush1.msra.mxu0 0.0
    %397 = vmatprep.subr.mxu0 0.0
    %398 = vmatpush1.msra.mxu0 0.0
    %399 = vmatprep.subr.mxu0 0.0
    %400 = vmatpush1.msra.mxu0 0.0
    %401 = vmatprep.subr.mxu0 0.0
    %402 = vmatpush1.msra.mxu0 0.0
    %403 = vmatprep.subr.mxu0 0.0
    %404 = vmatpush1.msra.mxu0 0.0
    %405 = vmatprep.subr.mxu0 0.0
    %406 = vmatpush1.msra.mxu0 0.0
    %407 = vmatprep.subr.mxu0 0.0
    %408 = vmatpush1.msra.mxu0 0.0
    %409 = vmatprep.subr.mxu0 0.0
    %410 = vmatpush1.msra.mxu0 0.0
    %411 = vmatprep.subr.mxu0 0.0
    %412 = vmatpush1.msra.mxu0 0.0
    %413 = vmatprep.subr.mxu0 0.0
    %414 = vmatpush1.msra.mxu0 0.0
    %415 = vmatprep.subr.mxu0 0.0
    %416 = vmatpush1.msra.mxu0 0.0
    %417 = vmatprep.subr.mxu0 0.0
    %418 = vmatpush1.msra.mxu0 0.0
    %419 = vmatprep.subr.mxu0 0.0
    %420 = vmatpush1.msra.mxu0 0.0
    %421 = vmatprep.subr.mxu0 0.0
    %422 = vmatpush1.msra.mxu0 0.0
    %423 = vmatprep.subr.mxu0 0.0
    %424 = vmatpush1.msra.mxu0 %v391
    %425 = vmatprep.subr.mxu0 0.0
    %426 = vmatpush2.msra.mxu0 0.0
    %427 = vmatprep.subr.mxu0 0.0
    %428 = vmatpush2.msra.mxu0 0.0
    %429 = vmatprep.subr.mxu0 0.0
    %430 = vmatpush2.msra.mxu0 0.0
    %431 = vmatprep.subr.mxu0 0.0
    %432 = vmatpush2.msra.mxu0 0.0
    %433 = vmatprep.subr.mxu0 0.0
    %434 = vmatpush2.msra.mxu0 0.0
    %435 = vmatprep.subr.mxu0 0.0
    %436 = vmatpush2.msra.mxu0 0.0
    %437 = vmatprep.subr.mxu0 0.0
    %438 = vmatpush2.msra.mxu0 0.0
    %439 = vmatprep.subr.mxu0 0.0
    %440 = vmatpush2.msra.mxu0 0.0
    %441 = vmatprep.subr.mxu0 0.0
    %442 = vmatpush2.msra.mxu0 0.0
    %443 = vmatprep.subr.mxu0 0.0
    %444 = vmatpush2.msra.mxu0 0.0
    %445 = vmatprep.subr.mxu0 0.0
    %446 = vmatpush2.msra.mxu0 0.0
    %447 = vmatprep.subr.mxu0 0.0
    %448 = vmatpush2.msra.mxu0 0.0
    %449 = vmatprep.subr.mxu0 0.0
    %450 = vmatpush2.msra.mxu0 0.0
    %451 = vmatprep.subr.mxu0 0.0
    %452 = vmatpush2.msra.mxu0 0.0
    %453 = vmatprep.subr.mxu0 0.0
    %454 = vmatpush2.msra.mxu0 0.0
    %455 = vmatprep.subr.mxu0 0.0
    %456 = vmatpush2.msra.mxu0 0.0
    %457 = vmatprep.mubr.f32.mxu0 0.0
    %458 = vmatmul.mubr.f32.gmra.mxu0 %v147
    %v459 = vpop.f32.mrf.mxu0
    %v460 = vadd.f32 0.0, %v459
    %v461 = vpop.f32.mrf.mxu0
    %462 = vmatprep.mubr.f32.mxu0 0.0
    %463 = vmatmul.mubr.f32.gmra.mxu0 %v150
    %v464 = vpop.f32.mrf.mxu0
    %v465 = vadd.f32 0.0, %v464
    %v466 = vpop.f32.mrf.mxu0
    %467 = vmatprep.mubr.f32.mxu0 0.0
    %468 = vmatmul.mubr.f32.gmra.mxu0 %v153
    %v469 = vpop.f32.mrf.mxu0
    %v470 = vadd.f32 0.0, %v469
    %v471 = vpop.f32.mrf.mxu0
    %472 = vmatprep.mubr.f32.mxu0 0.0
    %473 = vmatmul.mubr.f32.gmra.mxu0 %v156
    %v474 = vpop.f32.mrf.mxu0
    %v475 = vadd.f32 0.0, %v474
    %v476 = vpop.f32.mrf.mxu0
    %477 = vmatprep.mubr.f32.mxu0 0.0
    %478 = vmatmul.mubr.f32.gmra.mxu0 %v159
    %v479 = vpop.f32.mrf.mxu0
    %v480 = vadd.f32 0.0, %v479
    %v481 = vpop.f32.mrf.mxu0
    %482 = vmatprep.mubr.f32.mxu0 0.0
    %483 = vmatmul.mubr.f32.gmra.mxu0 %v162
    %v484 = vpop.f32.mrf.mxu0
    %v485 = vadd.f32 0.0, %v484
    %v486 = vpop.f32.mrf.mxu0
    %487 = vmatprep.mubr.f32.mxu0 0.0
    %488 = vmatmul.mubr.f32.gmra.mxu0 %v165
    %v489 = vpop.f32.mrf.mxu0
    %v490 = vadd.f32 0.0, %v489
    %v491 = vpop.f32.mrf.mxu0
    %492 = vmatprep.mubr.f32.mxu0 0.0
    %493 = vmatmul.mubr.f32.gmra.mxu0 %v168
    %v494 = vpop.f32.mrf.mxu0
    %v495 = vadd.f32 0.0, %v494
    %v496 = vpop.f32.mrf.mxu0
    %497 = vmatprep.mubr.f32.mxu0 0.0
    %498 = vmatmul.mubr.f32.gmra.mxu0 %v171
    %v499 = vpop.f32.mrf.mxu0
    %v500 = vadd.f32 0.0, %v499
    %v501 = vpop.f32.mrf.mxu0
    %502 = vmatprep.mubr.f32.mxu0 0.0
    %503 = vmatmul.mubr.f32.gmra.mxu0 %v174
    %v504 = vpop.f32.mrf.mxu0
    %v505 = vadd.f32 0.0, %v504
    %v506 = vpop.f32.mrf.mxu0
    %507 = vmatprep.mubr.f32.mxu0 0.0
    %508 = vmatmul.mubr.f32.gmra.mxu0 %v177
    %v509 = vpop.f32.mrf.mxu0
    %v510 = vadd.f32 0.0, %v509
    %v511 = vpop.f32.mrf.mxu0
    %512 = vmatprep.mubr.f32.mxu0 0.0
    %513 = vmatmul.mubr.f32.gmra.mxu0 %v180
    %v514 = vpop.f32.mrf.mxu0
    %v515 = vadd.f32 0.0, %v514
    %v516 = vpop.f32.mrf.mxu0
    %517 = vmatprep.mubr.f32.mxu0 0.0
    %518 = vmatmul.mubr.f32.gmra.mxu0 %v183
    %v519 = vpop.f32.mrf.mxu0
    %v520 = vadd.f32 0.0, %v519
    %v521 = vpop.f32.mrf.mxu0
    %522 = vmatprep.mubr.f32.mxu0 0.0
    %523 = vmatmul.mubr.f32.gmra.mxu0 %v186
    %v524 = vpop.f32.mrf.mxu0
    %v525 = vadd.f32 0.0, %v524
    %v526 = vpop.f32.mrf.mxu0
    %527 = vmatprep.mubr.f32.mxu0 0.0
    %528 = vmatmul.mubr.f32.gmra.mxu0 %v189
    %v529 = vpop.f32.mrf.mxu0
    %v530 = vadd.f32 0.0, %v529
    %v531 = vpop.f32.mrf.mxu0
    %532 = vmatprep.mubr.f32.mxu0 0.0
    %533 = vmatmul.mubr.f32.gmra.mxu0 %v192
    %v534 = vpop.f32.mrf.mxu0
    %v535 = vadd.f32 0.0, %v534
    %v536 = vpop.f32.mrf.mxu0
    %537 = vmatprep.mubr.f32.mxu0 0.0
    %538 = vmatmul.mubr.f32.gmra.mxu0 %v195
    %v539 = vpop.f32.mrf.mxu0
    %v540 = vadd.f32 0.0, %v539
    %v541 = vpop.f32.mrf.mxu0
    %542 = vmatprep.mubr.f32.mxu0 0.0
    %543 = vmatmul.mubr.f32.gmra.mxu0 %v198
    %v544 = vpop.f32.mrf.mxu0
    %v545 = vadd.f32 0.0, %v544
    %v546 = vpop.f32.mrf.mxu0
    %547 = vmatprep.mubr.f32.mxu0 0.0
    %548 = vmatmul.mubr.f32.gmra.mxu0 %v201
    %v549 = vpop.f32.mrf.mxu0
    %v550 = vadd.f32 0.0, %v549
    %v551 = vpop.f32.mrf.mxu0
    %552 = vmatprep.mubr.f32.mxu0 0.0
    %553 = vmatmul.mubr.f32.gmra.mxu0 %v204
    %v554 = vpop.f32.mrf.mxu0
    %v555 = vadd.f32 0.0, %v554
    %v556 = vpop.f32.mrf.mxu0
    %557 = vmatprep.mubr.f32.mxu0 0.0
    %558 = vmatmul.mubr.f32.gmra.mxu0 %v207
    %v559 = vpop.f32.mrf.mxu0
    %v560 = vadd.f32 0.0, %v559
    %v561 = vpop.f32.mrf.mxu0
    %562 = vmatprep.mubr.f32.mxu0 0.0
    %563 = vmatmul.mubr.f32.gmra.mxu0 %v210
    %v564 = vpop.f32.mrf.mxu0
    %v565 = vadd.f32 0.0, %v564
    %v566 = vpop.f32.mrf.mxu0
    %567 = vmatprep.mubr.f32.mxu0 0.0
    %568 = vmatmul.mubr.f32.gmra.mxu0 %v213
    %v569 = vpop.f32.mrf.mxu0
    %v570 = vadd.f32 0.0, %v569
    %v571 = vpop.f32.mrf.mxu0
    %572 = vmatprep.mubr.f32.mxu0 0.0
    %573 = vmatmul.mubr.f32.gmra.mxu0 %v216
    %v574 = vpop.f32.mrf.mxu0
    %v575 = vadd.f32 0.0, %v574
    %v576 = vpop.f32.mrf.mxu0
    %577 = vmatprep.mubr.f32.mxu0 0.0
    %578 = vmatmul.mubr.f32.gmra.mxu0 %v219
    %v579 = vpop.f32.mrf.mxu0
    %v580 = vadd.f32 0.0, %v579
    %v581 = vpop.f32.mrf.mxu0
    %582 = vmatprep.mubr.f32.mxu0 0.0
    %583 = vmatmul.mubr.f32.gmra.mxu0 %v222
    %v584 = vpop.f32.mrf.mxu0
    %v585 = vadd.f32 0.0, %v584
    %v586 = vpop.f32.mrf.mxu0
    %587 = vmatprep.mubr.f32.mxu0 0.0
    %588 = vmatmul.mubr.f32.gmra.mxu0 %v225
    %v589 = vpop.f32.mrf.mxu0
    %v590 = vadd.f32 0.0, %v589
    %v591 = vpop.f32.mrf.mxu0
    %592 = vmatprep.mubr.f32.mxu0 0.0
    %593 = vmatmul.mubr.f32.gmra.mxu0 %v228
    %v594 = vpop.f32.mrf.mxu0
    %v595 = vadd.f32 0.0, %v594
    %v596 = vpop.f32.mrf.mxu0
    %597 = vmatprep.mubr.f32.mxu0 0.0
    %598 = vmatmul.mubr.f32.gmra.mxu0 %v231
    %v599 = vpop.f32.mrf.mxu0
    %v600 = vadd.f32 0.0, %v599
    %v601 = vpop.f32.mrf.mxu0
    %602 = vmatprep.mubr.f32.mxu0 0.0
    %603 = vmatmul.mubr.f32.gmra.mxu0 %v234
    %v604 = vpop.f32.mrf.mxu0
    %v605 = vadd.f32 0.0, %v604
    %v606 = vpop.f32.mrf.mxu0
    %607 = vmatprep.mubr.f32.mxu0 0.0
    %608 = vmatmul.mubr.f32.gmra.mxu0 %v237
    %v609 = vpop.f32.mrf.mxu0
    %v610 = vadd.f32 0.0, %v609
    %v611 = vpop.f32.mrf.mxu0
    %612 = vmatprep.mubr.f32.mxu0 0.0
    %613 = vmatmul.mubr.f32.gmra.mxu0 %v240
    %v614 = vpop.f32.mrf.mxu0
    %v615 = vadd.f32 0.0, %v614
    %v616 = vpop.f32.mrf.mxu0
    %617 = vmatprep.mubr.f32.mxu0 0.0
    %618 = vmatmul.mubr.f32.gmra.mxu0 %v243
    %v619 = vpop.f32.mrf.mxu0
    %v620 = vadd.f32 0.0, %v619
    %v621 = vpop.f32.mrf.mxu0
    %622 = vmatprep.mubr.f32.mxu0 0.0
    %623 = vmatmul.mubr.f32.gmra.mxu0 %v246
    %v624 = vpop.f32.mrf.mxu0
    %v625 = vadd.f32 0.0, %v624
    %v626 = vpop.f32.mrf.mxu0
    %627 = vmatprep.mubr.f32.mxu0 0.0
    %628 = vmatmul.mubr.f32.gmra.mxu0 %v249
    %v629 = vpop.f32.mrf.mxu0
    %v630 = vadd.f32 0.0, %v629
    %v631 = vpop.f32.mrf.mxu0
    %632 = vmatprep.mubr.f32.mxu0 0.0
    %633 = vmatmul.mubr.f32.gmra.mxu0 %v252
    %v634 = vpop.f32.mrf.mxu0
    %v635 = vadd.f32 0.0, %v634
    %v636 = vpop.f32.mrf.mxu0
    %637 = vmatprep.mubr.f32.mxu0 0.0
    %638 = vmatmul.mubr.f32.gmra.mxu0 %v255
    %v639 = vpop.f32.mrf.mxu0
    %v640 = vadd.f32 0.0, %v639
    %v641 = vpop.f32.mrf.mxu0
    %642 = vmatprep.mubr.f32.mxu0 0.0
    %643 = vmatmul.mubr.f32.gmra.mxu0 %v258
    %v644 = vpop.f32.mrf.mxu0
    %v645 = vadd.f32 0.0, %v644
    %v646 = vpop.f32.mrf.mxu0
    %647 = vmatprep.mubr.f32.mxu0 0.0
    %648 = vmatmul.mubr.f32.gmra.mxu0 %v261
    %v649 = vpop.f32.mrf.mxu0
    %v650 = vadd.f32 0.0, %v649
    %v651 = vpop.f32.mrf.mxu0
    %652 = vmatprep.mubr.f32.mxu0 0.0
    %653 = vmatmul.mubr.f32.gmra.mxu0 %v264
    %v654 = vpop.f32.mrf.mxu0
    %v655 = vadd.f32 0.0, %v654
    %v656 = vpop.f32.mrf.mxu0
    %657 = vmatprep.mubr.f32.mxu0 0.0
    %658 = vmatmul.mubr.f32.gmra.mxu0 %v267
    %v659 = vpop.f32.mrf.mxu0
    %v660 = vadd.f32 0.0, %v659
    %v661 = vpop.f32.mrf.mxu0
    %662 = vmatprep.mubr.f32.mxu0 0.0
    %663 = vmatmul.mubr.f32.gmra.mxu0 %v270
    %v664 = vpop.f32.mrf.mxu0
    %v665 = vadd.f32 0.0, %v664
    %v666 = vpop.f32.mrf.mxu0
    %667 = vmatprep.mubr.f32.mxu0 0.0
    %668 = vmatmul.mubr.f32.gmra.mxu0 %v273
    %v669 = vpop.f32.mrf.mxu0
    %v670 = vadd.f32 0.0, %v669
    %v671 = vpop.f32.mrf.mxu0
    %672 = vmatprep.mubr.f32.mxu0 0.0
    %673 = vmatmul.mubr.f32.gmra.mxu0 %v276
    %v674 = vpop.f32.mrf.mxu0
    %v675 = vadd.f32 0.0, %v674
    %v676 = vpop.f32.mrf.mxu0
    %677 = vmatprep.mubr.f32.mxu0 0.0
    %678 = vmatmul.mubr.f32.gmra.mxu0 %v279
    %v679 = vpop.f32.mrf.mxu0
    %v680 = vadd.f32 0.0, %v679
    %v681 = vpop.f32.mrf.mxu0
    %682 = vmatprep.mubr.f32.mxu0 0.0
    %683 = vmatmul.mubr.f32.gmra.mxu0 %v282
    %v684 = vpop.f32.mrf.mxu0
    %v685 = vadd.f32 0.0, %v684
    %v686 = vpop.f32.mrf.mxu0
    %687 = vmatprep.mubr.f32.mxu0 0.0
    %688 = vmatmul.mubr.f32.gmra.mxu0 %v285
    %v689 = vpop.f32.mrf.mxu0
    %v690 = vadd.f32 0.0, %v689
    %v691 = vpop.f32.mrf.mxu0
    %692 = vmatprep.mubr.f32.mxu0 0.0
    %693 = vmatmul.mubr.f32.gmra.mxu0 %v288
    %v694 = vpop.f32.mrf.mxu0
    %v695 = vadd.f32 0.0, %v694
    %v696 = vpop.f32.mrf.mxu0
    %697 = vmatprep.mubr.f32.mxu0 0.0
    %698 = vmatmul.mubr.f32.gmra.mxu0 %v291
    %v699 = vpop.f32.mrf.mxu0
    %v700 = vadd.f32 0.0, %v699
    %v701 = vpop.f32.mrf.mxu0
    %702 = vmatprep.mubr.f32.mxu0 0.0
    %703 = vmatmul.mubr.f32.gmra.mxu0 %v294
    %v704 = vpop.f32.mrf.mxu0
    %v705 = vadd.f32 0.0, %v704
    %v706 = vpop.f32.mrf.mxu0
    %707 = vmatprep.mubr.f32.mxu0 0.0
    %708 = vmatmul.mubr.f32.gmra.mxu0 %v297
    %v709 = vpop.f32.mrf.mxu0
    %v710 = vadd.f32 0.0, %v709
    %v711 = vpop.f32.mrf.mxu0
    %712 = vmatprep.mubr.f32.mxu0 0.0
    %713 = vmatmul.mubr.f32.gmra.mxu0 %v300
    %v714 = vpop.f32.mrf.mxu0
    %v715 = vadd.f32 0.0, %v714
    %v716 = vpop.f32.mrf.mxu0
    %717 = vmatprep.mubr.f32.mxu0 0.0
    %718 = vmatmul.mubr.f32.gmra.mxu0 %v303
    %v719 = vpop.f32.mrf.mxu0
    %v720 = vadd.f32 0.0, %v719
    %v721 = vpop.f32.mrf.mxu0
    %722 = vmatprep.mubr.f32.mxu0 0.0
    %723 = vmatmul.mubr.f32.gmra.mxu0 %v306
    %v724 = vpop.f32.mrf.mxu0
    %v725 = vadd.f32 0.0, %v724
    %v726 = vpop.f32.mrf.mxu0
    %727 = vmatprep.mubr.f32.mxu0 0.0
    %728 = vmatmul.mubr.f32.gmra.mxu0 %v309
    %v729 = vpop.f32.mrf.mxu0
    %v730 = vadd.f32 0.0, %v729
    %v731 = vpop.f32.mrf.mxu0
    %732 = vmatprep.mubr.f32.mxu0 0.0
    %733 = vmatmul.mubr.f32.gmra.mxu0 %v312
    %v734 = vpop.f32.mrf.mxu0
    %v735 = vadd.f32 0.0, %v734
    %v736 = vpop.f32.mrf.mxu0
    %737 = vmatprep.mubr.f32.mxu0 0.0
    %738 = vmatmul.mubr.f32.gmra.mxu0 %v315
    %v739 = vpop.f32.mrf.mxu0
    %v740 = vadd.f32 0.0, %v739
    %v741 = vpop.f32.mrf.mxu0
    %742 = vmatprep.mubr.f32.mxu0 0.0
    %743 = vmatmul.mubr.f32.gmra.mxu0 %v318
    %v744 = vpop.f32.mrf.mxu0
    %v745 = vadd.f32 0.0, %v744
    %v746 = vpop.f32.mrf.mxu0
    %747 = vmatprep.mubr.f32.mxu0 0.0
    %748 = vmatmul.mubr.f32.gmra.mxu0 %v321
    %v749 = vpop.f32.mrf.mxu0
    %v750 = vadd.f32 0.0, %v749
    %v751 = vpop.f32.mrf.mxu0
    %752 = vmatprep.mubr.f32.mxu0 0.0
    %753 = vmatmul.mubr.f32.gmra.mxu0 %v324
    %v754 = vpop.f32.mrf.mxu0
    %v755 = vadd.f32 0.0, %v754
    %v756 = vpop.f32.mrf.mxu0
    %757 = vmatprep.mubr.f32.mxu0 0.0
    %758 = vmatmul.mubr.f32.gmra.mxu0 %v327
    %v759 = vpop.f32.mrf.mxu0
    %v760 = vadd.f32 0.0, %v759
    %v761 = vpop.f32.mrf.mxu0
    %762 = vmatprep.mubr.f32.mxu0 0.0
    %763 = vmatmul.mubr.f32.gmra.mxu0 %v330
    %v764 = vpop.f32.mrf.mxu0
    %v765 = vadd.f32 0.0, %v764
    %v766 = vpop.f32.mrf.mxu0
    %767 = vmatprep.mubr.f32.mxu0 0.0
    %768 = vmatmul.mubr.f32.gmra.mxu0 %v333
    %v769 = vpop.f32.mrf.mxu0
    %v770 = vadd.f32 0.0, %v769
    %v771 = vpop.f32.mrf.mxu0
    %772 = vmatprep.mubr.f32.mxu0 0.0
    %773 = vmatmul.mubr.f32.gmra.mxu0 %v336
    %v774 = vpop.f32.mrf.mxu0
    %v775 = vadd.f32 0.0, %v774
    %v776 = vpop.f32.mrf.mxu0
    %777 = vmatprep.mubr.f32.mxu0 0.0
    %778 = vmatmul.mubr.f32.gmra.mxu0 %v339
    %v779 = vpop.f32.mrf.mxu0
    %v780 = vadd.f32 0.0, %v779
    %v781 = vpop.f32.mrf.mxu0
    %782 = vmatprep.mubr.f32.mxu0 0.0
    %783 = vmatmul.mubr.f32.gmra.mxu0 %v342
    %v784 = vpop.f32.mrf.mxu0
    %v785 = vadd.f32 0.0, %v784
    %v786 = vpop.f32.mrf.mxu0
    %787 = vmatprep.mubr.f32.mxu0 0.0
    %788 = vmatmul.mubr.f32.gmra.mxu0 %v345
    %v789 = vpop.f32.mrf.mxu0
    %v790 = vadd.f32 0.0, %v789
    %v791 = vpop.f32.mrf.mxu0
    %792 = vmatprep.mubr.f32.mxu0 0.0
    %793 = vmatmul.mubr.f32.gmra.mxu0 %v348
    %v794 = vpop.f32.mrf.mxu0
    %v795 = vadd.f32 0.0, %v794
    %v796 = vpop.f32.mrf.mxu0
    %797 = vmatprep.mubr.f32.mxu0 0.0
    %798 = vmatmul.mubr.f32.gmra.mxu0 %v351
    %v799 = vpop.f32.mrf.mxu0
    %v800 = vadd.f32 0.0, %v799
    %v801 = vpop.f32.mrf.mxu0
    %802 = vmatprep.mubr.f32.mxu0 0.0
    %803 = vmatmul.mubr.f32.gmra.mxu0 %v354
    %v804 = vpop.f32.mrf.mxu0
    %v805 = vadd.f32 0.0, %v804
    %v806 = vpop.f32.mrf.mxu0
    %807 = vmatprep.mubr.f32.mxu0 0.0
    %808 = vmatmul.mubr.f32.gmra.mxu0 %v357
    %v809 = vpop.f32.mrf.mxu0
    %v810 = vadd.f32 0.0, %v809
    %v811 = vpop.f32.mrf.mxu0
    %812 = vmatprep.mubr.f32.mxu0 0.0
    %813 = vmatmul.mubr.f32.gmra.mxu0 %v360
    %v814 = vpop.f32.mrf.mxu0
    %v815 = vadd.f32 0.0, %v814
    %v816 = vpop.f32.mrf.mxu0
    %817 = vmatprep.mubr.f32.mxu0 0.0
    %818 = vmatmul.mubr.f32.gmra.mxu0 %v363
    %v819 = vpop.f32.mrf.mxu0
    %v820 = vadd.f32 0.0, %v819
    %v821 = vpop.f32.mrf.mxu0
    %822 = vmatprep.mubr.f32.mxu0 0.0
    %823 = vmatmul.mubr.f32.gmra.mxu0 %v366
    %v824 = vpop.f32.mrf.mxu0
    %v825 = vadd.f32 0.0, %v824
    %v826 = vpop.f32.mrf.mxu0
    %827 = vmatprep.mubr.f32.mxu0 0.0
    %828 = vmatmul.mubr.f32.gmra.mxu0 %v369
    %v829 = vpop.f32.mrf.mxu0
    %v830 = vadd.f32 0.0, %v829
    %v831 = vpop.f32.mrf.mxu0
    %832 = vmatprep.mubr.f32.mxu0 0.0
    %833 = vmatmul.mubr.f32.gmra.mxu0 %v372
    %v834 = vpop.f32.mrf.mxu0
    %v835 = vadd.f32 0.0, %v834
    %v836 = vpop.f32.mrf.mxu0
    %837 = vmatprep.mubr.f32.mxu0 0.0
    %838 = vmatmul.mubr.f32.gmra.mxu0 %v375
    %v839 = vpop.f32.mrf.mxu0
    %v840 = vadd.f32 0.0, %v839
    %v841 = vpop.f32.mrf.mxu0
    %842 = vmatprep.mubr.f32.mxu0 0.0
    %843 = vmatmul.mubr.f32.gmra.mxu0 %v378
    %v844 = vpop.f32.mrf.mxu0
    %v845 = vadd.f32 0.0, %v844
    %v846 = vpop.f32.mrf.mxu0
    %847 = vmatprep.mubr.f32.mxu0 0.0
    %848 = vmatmul.mubr.f32.gmra.mxu0 %v381
    %v849 = vpop.f32.mrf.mxu0
    %v850 = vadd.f32 0.0, %v849
    %v851 = vpop.f32.mrf.mxu0
    %852 = vmatprep.mubr.f32.mxu0 0.0
    %853 = vmatmul.mubr.f32.gmra.mxu0 %v384
    %v854 = vpop.f32.mrf.mxu0
    %v855 = vadd.f32 0.0, %v854
    %v856 = vpop.f32.mrf.mxu0
    %857 = vmatprep.mubr.f32.mxu0 0.0
    %858 = vmatmul.mubr.f32.gmra.mxu0 %v387
    %v859 = vpop.f32.mrf.mxu0
    %v860 = vadd.f32 0.0, %v859
    %v861 = vpop.f32.mrf.mxu0
    %862 = vdwg.mxu0
    %s863 = scalar_lea.vmem %s1, 4
    %v864 = vld [vmem:[%s863] sm:$0xf]
    %v866 = vsel %vm389, %v864, 0
    %868 = vmatprep.subr.mxu0 0.0
    %869 = vmatpush1.msra.mxu0 0.0
    %870 = vmatprep.subr.mxu0 0.0
    %871 = vmatpush1.msra.mxu0 0.0
    %872 = vmatprep.subr.mxu0 0.0
    %873 = vmatpush1.msra.mxu0 0.0
    %874 = vmatprep.subr.mxu0 0.0
    %875 = vmatpush1.msra.mxu0 0.0
    %876 = vmatprep.subr.mxu0 0.0
    %877 = vmatpush1.msra.mxu0 0.0
    %878 = vmatprep.subr.mxu0 0.0
    %879 = vmatpush1.msra.mxu0 0.0
    %880 = vmatprep.subr.mxu0 0.0
    %881 = vmatpush1.msra.mxu0 0.0
    %882 = vmatprep.subr.mxu0 0.0
    %883 = vmatpush1.msra.mxu0 0.0
    %884 = vmatprep.subr.mxu0 0.0
    %885 = vmatpush1.msra.mxu0 0.0
    %886 = vmatprep.subr.mxu0 0.0
    %887 = vmatpush1.msra.mxu0 0.0
    %888 = vmatprep.subr.mxu0 0.0
    %889 = vmatpush1.msra.mxu0 0.0
    %890 = vmatprep.subr.mxu0 0.0
    %891 = vmatpush1.msra.mxu0 0.0
    %892 = vmatprep.subr.mxu0 0.0
    %893 = vmatpush1.msra.mxu0 0.0
    %894 = vmatprep.subr.mxu0 0.0
    %895 = vmatpush1.msra.mxu0 0.0
    %896 = vmatprep.subr.mxu0 0.0
    %897 = vmatpush1.msra.mxu0 0.0
    %898 = vmatprep.subr.mxu0 0.0
    %899 = vmatpush1.msra.mxu0 %v866
    %900 = vmatprep.subr.mxu0 0.0
    %901 = vmatpush2.msra.mxu0 0.0
    %902 = vmatprep.subr.mxu0 0.0
    %903 = vmatpush2.msra.mxu0 0.0
    %904 = vmatprep.subr.mxu0 0.0
    %905 = vmatpush2.msra.mxu0 0.0
    %906 = vmatprep.subr.mxu0 0.0
    %907 = vmatpush2.msra.mxu0 0.0
    %908 = vmatprep.subr.mxu0 0.0
    %909 = vmatpush2.msra.mxu0 0.0
    %910 = vmatprep.subr.mxu0 0.0
    %911 = vmatpush2.msra.mxu0 0.0
    %912 = vmatprep.subr.mxu0 0.0
    %913 = vmatpush2.msra.mxu0 0.0
    %914 = vmatprep.subr.mxu0 0.0
    %915 = vmatpush2.msra.mxu0 0.0
    %916 = vmatprep.subr.mxu0 0.0
    %917 = vmatpush2.msra.mxu0 0.0
    %918 = vmatprep.subr.mxu0 0.0
    %919 = vmatpush2.msra.mxu0 0.0
    %920 = vmatprep.subr.mxu0 0.0
    %921 = vmatpush2.msra.mxu0 0.0
    %922 = vmatprep.subr.mxu0 0.0
    %923 = vmatpush2.msra.mxu0 0.0
    %924 = vmatprep.subr.mxu0 0.0
    %925 = vmatpush2.msra.mxu0 0.0
    %926 = vmatprep.subr.mxu0 0.0
    %927 = vmatpush2.msra.mxu0 0.0
    %928 = vmatprep.subr.mxu0 0.0
    %929 = vmatpush2.msra.mxu0 0.0
    %930 = vmatprep.subr.mxu0 0.0
    %931 = vmatpush2.msra.mxu0 0.0
    %932 = vmatprep.mubr.f32.mxu0 0.0
    %933 = vmatmul.mubr.f32.gmra.mxu0 %v147
    %v934 = vpop.f32.mrf.mxu0
    %v935 = vadd.f32 0.0, %v934
    %v936 = vpop.f32.mrf.mxu0
    %937 = vmatprep.mubr.f32.mxu0 0.0
    %938 = vmatmul.mubr.f32.gmra.mxu0 %v150
    %v939 = vpop.f32.mrf.mxu0
    %v940 = vadd.f32 0.0, %v939
    %v941 = vpop.f32.mrf.mxu0
    %942 = vmatprep.mubr.f32.mxu0 0.0
    %943 = vmatmul.mubr.f32.gmra.mxu0 %v153
    %v944 = vpop.f32.mrf.mxu0
    %v945 = vadd.f32 0.0, %v944
    %v946 = vpop.f32.mrf.mxu0
    %947 = vmatprep.mubr.f32.mxu0 0.0
    %948 = vmatmul.mubr.f32.gmra.mxu0 %v156
    %v949 = vpop.f32.mrf.mxu0
    %v950 = vadd.f32 0.0, %v949
    %v951 = vpop.f32.mrf.mxu0
    %952 = vmatprep.mubr.f32.mxu0 0.0
    %953 = vmatmul.mubr.f32.gmra.mxu0 %v159
    %v954 = vpop.f32.mrf.mxu0
    %v955 = vadd.f32 0.0, %v954
    %v956 = vpop.f32.mrf.mxu0
    %957 = vmatprep.mubr.f32.mxu0 0.0
    %958 = vmatmul.mubr.f32.gmra.mxu0 %v162
    %v959 = vpop.f32.mrf.mxu0
    %v960 = vadd.f32 0.0, %v959
    %v961 = vpop.f32.mrf.mxu0
    %962 = vmatprep.mubr.f32.mxu0 0.0
    %963 = vmatmul.mubr.f32.gmra.mxu0 %v165
    %v964 = vpop.f32.mrf.mxu0
    %v965 = vadd.f32 0.0, %v964
    %v966 = vpop.f32.mrf.mxu0
    %967 = vmatprep.mubr.f32.mxu0 0.0
    %968 = vmatmul.mubr.f32.gmra.mxu0 %v168
    %v969 = vpop.f32.mrf.mxu0
    %v970 = vadd.f32 0.0, %v969
    %v971 = vpop.f32.mrf.mxu0
    %972 = vmatprep.mubr.f32.mxu0 0.0
    %973 = vmatmul.mubr.f32.gmra.mxu0 %v171
    %v974 = vpop.f32.mrf.mxu0
    %v975 = vadd.f32 0.0, %v974
    %v976 = vpop.f32.mrf.mxu0
    %977 = vmatprep.mubr.f32.mxu0 0.0
    %978 = vmatmul.mubr.f32.gmra.mxu0 %v174
    %v979 = vpop.f32.mrf.mxu0
    %v980 = vadd.f32 0.0, %v979
    %v981 = vpop.f32.mrf.mxu0
    %982 = vmatprep.mubr.f32.mxu0 0.0
    %983 = vmatmul.mubr.f32.gmra.mxu0 %v177
    %v984 = vpop.f32.mrf.mxu0
    %v985 = vadd.f32 0.0, %v984
    %v986 = vpop.f32.mrf.mxu0
    %987 = vmatprep.mubr.f32.mxu0 0.0
    %988 = vmatmul.mubr.f32.gmra.mxu0 %v180
    %v989 = vpop.f32.mrf.mxu0
    %v990 = vadd.f32 0.0, %v989
    %v991 = vpop.f32.mrf.mxu0
    %992 = vmatprep.mubr.f32.mxu0 0.0
    %993 = vmatmul.mubr.f32.gmra.mxu0 %v183
    %v994 = vpop.f32.mrf.mxu0
    %v995 = vadd.f32 0.0, %v994
    %v996 = vpop.f32.mrf.mxu0
    %997 = vmatprep.mubr.f32.mxu0 0.0
    %998 = vmatmul.mubr.f32.gmra.mxu0 %v186
    %v999 = vpop.f32.mrf.mxu0
    %v1000 = vadd.f32 0.0, %v999
    %v1001 = vpop.f32.mrf.mxu0
    %1002 = vmatprep.mubr.f32.mxu0 0.0
    %1003 = vmatmul.mubr.f32.gmra.mxu0 %v189
    %v1004 = vpop.f32.mrf.mxu0
    %v1005 = vadd.f32 0.0, %v1004
    %v1006 = vpop.f32.mrf.mxu0
    %1007 = vmatprep.mubr.f32.mxu0 0.0
    %1008 = vmatmul.mubr.f32.gmra.mxu0 %v192
    %v1009 = vpop.f32.mrf.mxu0
    %v1010 = vadd.f32 0.0, %v1009
    %v1011 = vpop.f32.mrf.mxu0
    %1012 = vmatprep.mubr.f32.mxu0 0.0
    %1013 = vmatmul.mubr.f32.gmra.mxu0 %v195
    %v1014 = vpop.f32.mrf.mxu0
    %v1015 = vadd.f32 0.0, %v1014
    %v1016 = vpop.f32.mrf.mxu0
    %1017 = vmatprep.mubr.f32.mxu0 0.0
    %1018 = vmatmul.mubr.f32.gmra.mxu0 %v198
    %v1019 = vpop.f32.mrf.mxu0
    %v1020 = vadd.f32 0.0, %v1019
    %v1021 = vpop.f32.mrf.mxu0
    %1022 = vmatprep.mubr.f32.mxu0 0.0
    %1023 = vmatmul.mubr.f32.gmra.mxu0 %v201
    %v1024 = vpop.f32.mrf.mxu0
    %v1025 = vadd.f32 0.0, %v1024
    %v1026 = vpop.f32.mrf.mxu0
    %1027 = vmatprep.mubr.f32.mxu0 0.0
    %1028 = vmatmul.mubr.f32.gmra.mxu0 %v204
    %v1029 = vpop.f32.mrf.mxu0
    %v1030 = vadd.f32 0.0, %v1029
    %v1031 = vpop.f32.mrf.mxu0
    %1032 = vmatprep.mubr.f32.mxu0 0.0
    %1033 = vmatmul.mubr.f32.gmra.mxu0 %v207
    %v1034 = vpop.f32.mrf.mxu0
    %v1035 = vadd.f32 0.0, %v1034
    %v1036 = vpop.f32.mrf.mxu0
    %1037 = vmatprep.mubr.f32.mxu0 0.0
    %1038 = vmatmul.mubr.f32.gmra.mxu0 %v210
    %v1039 = vpop.f32.mrf.mxu0
    %v1040 = vadd.f32 0.0, %v1039
    %v1041 = vpop.f32.mrf.mxu0
    %1042 = vmatprep.mubr.f32.mxu0 0.0
    %1043 = vmatmul.mubr.f32.gmra.mxu0 %v213
    %v1044 = vpop.f32.mrf.mxu0
    %v1045 = vadd.f32 0.0, %v1044
    %v1046 = vpop.f32.mrf.mxu0
    %1047 = vmatprep.mubr.f32.mxu0 0.0
    %1048 = vmatmul.mubr.f32.gmra.mxu0 %v216
    %v1049 = vpop.f32.mrf.mxu0
    %v1050 = vadd.f32 0.0, %v1049
    %v1051 = vpop.f32.mrf.mxu0
    %1052 = vmatprep.mubr.f32.mxu0 0.0
    %1053 = vmatmul.mubr.f32.gmra.mxu0 %v219
    %v1054 = vpop.f32.mrf.mxu0
    %v1055 = vadd.f32 0.0, %v1054
    %v1056 = vpop.f32.mrf.mxu0
    %1057 = vmatprep.mubr.f32.mxu0 0.0
    %1058 = vmatmul.mubr.f32.gmra.mxu0 %v222
    %v1059 = vpop.f32.mrf.mxu0
    %v1060 = vadd.f32 0.0, %v1059
    %v1061 = vpop.f32.mrf.mxu0
    %1062 = vmatprep.mubr.f32.mxu0 0.0
    %1063 = vmatmul.mubr.f32.gmra.mxu0 %v225
    %v1064 = vpop.f32.mrf.mxu0
    %v1065 = vadd.f32 0.0, %v1064
    %v1066 = vpop.f32.mrf.mxu0
    %1067 = vmatprep.mubr.f32.mxu0 0.0
    %1068 = vmatmul.mubr.f32.gmra.mxu0 %v228
    %v1069 = vpop.f32.mrf.mxu0
    %v1070 = vadd.f32 0.0, %v1069
    %v1071 = vpop.f32.mrf.mxu0
    %1072 = vmatprep.mubr.f32.mxu0 0.0
    %1073 = vmatmul.mubr.f32.gmra.mxu0 %v231
    %v1074 = vpop.f32.mrf.mxu0
    %v1075 = vadd.f32 0.0, %v1074
    %v1076 = vpop.f32.mrf.mxu0
    %1077 = vmatprep.mubr.f32.mxu0 0.0
    %1078 = vmatmul.mubr.f32.gmra.mxu0 %v234
    %v1079 = vpop.f32.mrf.mxu0
    %v1080 = vadd.f32 0.0, %v1079
    %v1081 = vpop.f32.mrf.mxu0
    %1082 = vmatprep.mubr.f32.mxu0 0.0
    %1083 = vmatmul.mubr.f32.gmra.mxu0 %v237
    %v1084 = vpop.f32.mrf.mxu0
    %v1085 = vadd.f32 0.0, %v1084
    %v1086 = vpop.f32.mrf.mxu0
    %1087 = vmatprep.mubr.f32.mxu0 0.0
    %1088 = vmatmul.mubr.f32.gmra.mxu0 %v240
    %v1089 = vpop.f32.mrf.mxu0
    %v1090 = vadd.f32 0.0, %v1089
    %v1091 = vpop.f32.mrf.mxu0
    %1092 = vmatprep.mubr.f32.mxu0 0.0
    %1093 = vmatmul.mubr.f32.gmra.mxu0 %v243
    %v1094 = vpop.f32.mrf.mxu0
    %v1095 = vadd.f32 0.0, %v1094
    %v1096 = vpop.f32.mrf.mxu0
    %1097 = vmatprep.mubr.f32.mxu0 0.0
    %1098 = vmatmul.mubr.f32.gmra.mxu0 %v246
    %v1099 = vpop.f32.mrf.mxu0
    %v1100 = vadd.f32 0.0, %v1099
    %v1101 = vpop.f32.mrf.mxu0
    %1102 = vmatprep.mubr.f32.mxu0 0.0
    %1103 = vmatmul.mubr.f32.gmra.mxu0 %v249
    %v1104 = vpop.f32.mrf.mxu0
    %v1105 = vadd.f32 0.0, %v1104
    %v1106 = vpop.f32.mrf.mxu0
    %1107 = vmatprep.mubr.f32.mxu0 0.0
    %1108 = vmatmul.mubr.f32.gmra.mxu0 %v252
    %v1109 = vpop.f32.mrf.mxu0
    %v1110 = vadd.f32 0.0, %v1109
    %v1111 = vpop.f32.mrf.mxu0
    %1112 = vmatprep.mubr.f32.mxu0 0.0
    %1113 = vmatmul.mubr.f32.gmra.mxu0 %v255
    %v1114 = vpop.f32.mrf.mxu0
    %v1115 = vadd.f32 0.0, %v1114
    %v1116 = vpop.f32.mrf.mxu0
    %1117 = vmatprep.mubr.f32.mxu0 0.0
    %1118 = vmatmul.mubr.f32.gmra.mxu0 %v258
    %v1119 = vpop.f32.mrf.mxu0
    %v1120 = vadd.f32 0.0, %v1119
    %v1121 = vpop.f32.mrf.mxu0
    %1122 = vmatprep.mubr.f32.mxu0 0.0
    %1123 = vmatmul.mubr.f32.gmra.mxu0 %v261
    %v1124 = vpop.f32.mrf.mxu0
    %v1125 = vadd.f32 0.0, %v1124
    %v1126 = vpop.f32.mrf.mxu0
    %1127 = vmatprep.mubr.f32.mxu0 0.0
    %1128 = vmatmul.mubr.f32.gmra.mxu0 %v264
    %v1129 = vpop.f32.mrf.mxu0
    %v1130 = vadd.f32 0.0, %v1129
    %v1131 = vpop.f32.mrf.mxu0
    %1132 = vmatprep.mubr.f32.mxu0 0.0
    %1133 = vmatmul.mubr.f32.gmra.mxu0 %v267
    %v1134 = vpop.f32.mrf.mxu0
    %v1135 = vadd.f32 0.0, %v1134
    %v1136 = vpop.f32.mrf.mxu0
    %1137 = vmatprep.mubr.f32.mxu0 0.0
    %1138 = vmatmul.mubr.f32.gmra.mxu0 %v270
    %v1139 = vpop.f32.mrf.mxu0
    %v1140 = vadd.f32 0.0, %v1139
    %v1141 = vpop.f32.mrf.mxu0
    %1142 = vmatprep.mubr.f32.mxu0 0.0
    %1143 = vmatmul.mubr.f32.gmra.mxu0 %v273
    %v1144 = vpop.f32.mrf.mxu0
    %v1145 = vadd.f32 0.0, %v1144
    %v1146 = vpop.f32.mrf.mxu0
    %1147 = vmatprep.mubr.f32.mxu0 0.0
    %1148 = vmatmul.mubr.f32.gmra.mxu0 %v276
    %v1149 = vpop.f32.mrf.mxu0
    %v1150 = vadd.f32 0.0, %v1149
    %v1151 = vpop.f32.mrf.mxu0
    %1152 = vmatprep.mubr.f32.mxu0 0.0
    %1153 = vmatmul.mubr.f32.gmra.mxu0 %v279
    %v1154 = vpop.f32.mrf.mxu0
    %v1155 = vadd.f32 0.0, %v1154
    %v1156 = vpop.f32.mrf.mxu0
    %1157 = vmatprep.mubr.f32.mxu0 0.0
    %1158 = vmatmul.mubr.f32.gmra.mxu0 %v282
    %v1159 = vpop.f32.mrf.mxu0
    %v1160 = vadd.f32 0.0, %v1159
    %v1161 = vpop.f32.mrf.mxu0
    %1162 = vmatprep.mubr.f32.mxu0 0.0
    %1163 = vmatmul.mubr.f32.gmra.mxu0 %v285
    %v1164 = vpop.f32.mrf.mxu0
    %v1165 = vadd.f32 0.0, %v1164
    %v1166 = vpop.f32.mrf.mxu0
    %1167 = vmatprep.mubr.f32.mxu0 0.0
    %1168 = vmatmul.mubr.f32.gmra.mxu0 %v288
    %v1169 = vpop.f32.mrf.mxu0
    %v1170 = vadd.f32 0.0, %v1169
    %v1171 = vpop.f32.mrf.mxu0
    %1172 = vmatprep.mubr.f32.mxu0 0.0
    %1173 = vmatmul.mubr.f32.gmra.mxu0 %v291
    %v1174 = vpop.f32.mrf.mxu0
    %v1175 = vadd.f32 0.0, %v1174
    %v1176 = vpop.f32.mrf.mxu0
    %1177 = vmatprep.mubr.f32.mxu0 0.0
    %1178 = vmatmul.mubr.f32.gmra.mxu0 %v294
    %v1179 = vpop.f32.mrf.mxu0
    %v1180 = vadd.f32 0.0, %v1179
    %v1181 = vpop.f32.mrf.mxu0
    %1182 = vmatprep.mubr.f32.mxu0 0.0
    %1183 = vmatmul.mubr.f32.gmra.mxu0 %v297
    %v1184 = vpop.f32.mrf.mxu0
    %v1185 = vadd.f32 0.0, %v1184
    %v1186 = vpop.f32.mrf.mxu0
    %1187 = vmatprep.mubr.f32.mxu0 0.0
    %1188 = vmatmul.mubr.f32.gmra.mxu0 %v300
    %v1189 = vpop.f32.mrf.mxu0
    %v1190 = vadd.f32 0.0, %v1189
    %v1191 = vpop.f32.mrf.mxu0
    %1192 = vmatprep.mubr.f32.mxu0 0.0
    %1193 = vmatmul.mubr.f32.gmra.mxu0 %v303
    %v1194 = vpop.f32.mrf.mxu0
    %v1195 = vadd.f32 0.0, %v1194
    %v1196 = vpop.f32.mrf.mxu0
    %1197 = vmatprep.mubr.f32.mxu0 0.0
    %1198 = vmatmul.mubr.f32.gmra.mxu0 %v306
    %v1199 = vpop.f32.mrf.mxu0
    %v1200 = vadd.f32 0.0, %v1199
    %v1201 = vpop.f32.mrf.mxu0
    %1202 = vmatprep.mubr.f32.mxu0 0.0
    %1203 = vmatmul.mubr.f32.gmra.mxu0 %v309
    %v1204 = vpop.f32.mrf.mxu0
    %v1205 = vadd.f32 0.0, %v1204
    %v1206 = vpop.f32.mrf.mxu0
    %1207 = vmatprep.mubr.f32.mxu0 0.0
    %1208 = vmatmul.mubr.f32.gmra.mxu0 %v312
    %v1209 = vpop.f32.mrf.mxu0
    %v1210 = vadd.f32 0.0, %v1209
    %v1211 = vpop.f32.mrf.mxu0
    %1212 = vmatprep.mubr.f32.mxu0 0.0
    %1213 = vmatmul.mubr.f32.gmra.mxu0 %v315
    %v1214 = vpop.f32.mrf.mxu0
    %v1215 = vadd.f32 0.0, %v1214
    %v1216 = vpop.f32.mrf.mxu0
    %1217 = vmatprep.mubr.f32.mxu0 0.0
    %1218 = vmatmul.mubr.f32.gmra.mxu0 %v318
    %v1219 = vpop.f32.mrf.mxu0
    %v1220 = vadd.f32 0.0, %v1219
    %v1221 = vpop.f32.mrf.mxu0
    %1222 = vmatprep.mubr.f32.mxu0 0.0
    %1223 = vmatmul.mubr.f32.gmra.mxu0 %v321
    %v1224 = vpop.f32.mrf.mxu0
    %v1225 = vadd.f32 0.0, %v1224
    %v1226 = vpop.f32.mrf.mxu0
    %1227 = vmatprep.mubr.f32.mxu0 0.0
    %1228 = vmatmul.mubr.f32.gmra.mxu0 %v324
    %v1229 = vpop.f32.mrf.mxu0
    %v1230 = vadd.f32 0.0, %v1229
    %v1231 = vpop.f32.mrf.mxu0
    %1232 = vmatprep.mubr.f32.mxu0 0.0
    %1233 = vmatmul.mubr.f32.gmra.mxu0 %v327
    %v1234 = vpop.f32.mrf.mxu0
    %v1235 = vadd.f32 0.0, %v1234
    %v1236 = vpop.f32.mrf.mxu0
    %1237 = vmatprep.mubr.f32.mxu0 0.0
    %1238 = vmatmul.mubr.f32.gmra.mxu0 %v330
    %v1239 = vpop.f32.mrf.mxu0
    %v1240 = vadd.f32 0.0, %v1239
    %v1241 = vpop.f32.mrf.mxu0
    %1242 = vmatprep.mubr.f32.mxu0 0.0
    %1243 = vmatmul.mubr.f32.gmra.mxu0 %v333
    %v1244 = vpop.f32.mrf.mxu0
    %v1245 = vadd.f32 0.0, %v1244
    %v1246 = vpop.f32.mrf.mxu0
    %1247 = vmatprep.mubr.f32.mxu0 0.0
    %1248 = vmatmul.mubr.f32.gmra.mxu0 %v336
    %v1249 = vpop.f32.mrf.mxu0
    %v1250 = vadd.f32 0.0, %v1249
    %v1251 = vpop.f32.mrf.mxu0
    %1252 = vmatprep.mubr.f32.mxu0 0.0
    %1253 = vmatmul.mubr.f32.gmra.mxu0 %v339
    %v1254 = vpop.f32.mrf.mxu0
    %v1255 = vadd.f32 0.0, %v1254
    %v1256 = vpop.f32.mrf.mxu0
    %1257 = vmatprep.mubr.f32.mxu0 0.0
    %1258 = vmatmul.mubr.f32.gmra.mxu0 %v342
    %v1259 = vpop.f32.mrf.mxu0
    %v1260 = vadd.f32 0.0, %v1259
    %v1261 = vpop.f32.mrf.mxu0
    %1262 = vmatprep.mubr.f32.mxu0 0.0
    %1263 = vmatmul.mubr.f32.gmra.mxu0 %v345
    %v1264 = vpop.f32.mrf.mxu0
    %v1265 = vadd.f32 0.0, %v1264
    %v1266 = vpop.f32.mrf.mxu0
    %1267 = vmatprep.mubr.f32.mxu0 0.0
    %1268 = vmatmul.mubr.f32.gmra.mxu0 %v348
    %v1269 = vpop.f32.mrf.mxu0
    %v1270 = vadd.f32 0.0, %v1269
    %v1271 = vpop.f32.mrf.mxu0
    %1272 = vmatprep.mubr.f32.mxu0 0.0
    %1273 = vmatmul.mubr.f32.gmra.mxu0 %v351
    %v1274 = vpop.f32.mrf.mxu0
    %v1275 = vadd.f32 0.0, %v1274
    %v1276 = vpop.f32.mrf.mxu0
    %1277 = vmatprep.mubr.f32.mxu0 0.0
    %1278 = vmatmul.mubr.f32.gmra.mxu0 %v354
    %v1279 = vpop.f32.mrf.mxu0
    %v1280 = vadd.f32 0.0, %v1279
    %v1281 = vpop.f32.mrf.mxu0
    %1282 = vmatprep.mubr.f32.mxu0 0.0
    %1283 = vmatmul.mubr.f32.gmra.mxu0 %v357
    %v1284 = vpop.f32.mrf.mxu0
    %v1285 = vadd.f32 0.0, %v1284
    %v1286 = vpop.f32.mrf.mxu0
    %1287 = vmatprep.mubr.f32.mxu0 0.0
    %1288 = vmatmul.mubr.f32.gmra.mxu0 %v360
    %v1289 = vpop.f32.mrf.mxu0
    %v1290 = vadd.f32 0.0, %v1289
    %v1291 = vpop.f32.mrf.mxu0
    %1292 = vmatprep.mubr.f32.mxu0 0.0
    %1293 = vmatmul.mubr.f32.gmra.mxu0 %v363
    %v1294 = vpop.f32.mrf.mxu0
    %v1295 = vadd.f32 0.0, %v1294
    %v1296 = vpop.f32.mrf.mxu0
    %1297 = vmatprep.mubr.f32.mxu0 0.0
    %1298 = vmatmul.mubr.f32.gmra.mxu0 %v366
    %v1299 = vpop.f32.mrf.mxu0
    %v1300 = vadd.f32 0.0, %v1299
    %v1301 = vpop.f32.mrf.mxu0
    %1302 = vmatprep.mubr.f32.mxu0 0.0
    %1303 = vmatmul.mubr.f32.gmra.mxu0 %v369
    %v1304 = vpop.f32.mrf.mxu0
    %v1305 = vadd.f32 0.0, %v1304
    %v1306 = vpop.f32.mrf.mxu0
    %1307 = vmatprep.mubr.f32.mxu0 0.0
    %1308 = vmatmul.mubr.f32.gmra.mxu0 %v372
    %v1309 = vpop.f32.mrf.mxu0
    %v1310 = vadd.f32 0.0, %v1309
    %v1311 = vpop.f32.mrf.mxu0
    %1312 = vmatprep.mubr.f32.mxu0 0.0
    %1313 = vmatmul.mubr.f32.gmra.mxu0 %v375
    %v1314 = vpop.f32.mrf.mxu0
    %v1315 = vadd.f32 0.0, %v1314
    %v1316 = vpop.f32.mrf.mxu0
    %1317 = vmatprep.mubr.f32.mxu0 0.0
    %1318 = vmatmul.mubr.f32.gmra.mxu0 %v378
    %v1319 = vpop.f32.mrf.mxu0
    %v1320 = vadd.f32 0.0, %v1319
    %v1321 = vpop.f32.mrf.mxu0
    %1322 = vmatprep.mubr.f32.mxu0 0.0
    %1323 = vmatmul.mubr.f32.gmra.mxu0 %v381
    %v1324 = vpop.f32.mrf.mxu0
    %v1325 = vadd.f32 0.0, %v1324
    %v1326 = vpop.f32.mrf.mxu0
    %1327 = vmatprep.mubr.f32.mxu0 0.0
    %1328 = vmatmul.mubr.f32.gmra.mxu0 %v384
    %v1329 = vpop.f32.mrf.mxu0
    %v1330 = vadd.f32 0.0, %v1329
    %v1331 = vpop.f32.mrf.mxu0
    %1332 = vmatprep.mubr.f32.mxu0 0.0
    %1333 = vmatmul.mubr.f32.gmra.mxu0 %v387
    %v1334 = vpop.f32.mrf.mxu0
    %v1335 = vadd.f32 0.0, %v1334
    %v1336 = vpop.f32.mrf.mxu0
    %1337 = vdwg.mxu0
    %s1338 = scalar_lea.vmem %s1, 8
    %v1339 = vld [vmem:[%s1338] sm:$0xf]
    %v1341 = vsel %vm389, %v1339, 0
    %1343 = vmatprep.subr.mxu0 0.0
    %1344 = vmatpush1.msra.mxu0 0.0
    %1345 = vmatprep.subr.mxu0 0.0
    %1346 = vmatpush1.msra.mxu0 0.0
    %1347 = vmatprep.subr.mxu0 0.0
    %1348 = vmatpush1.msra.mxu0 0.0
    %1349 = vmatprep.subr.mxu0 0.0
    %1350 = vmatpush1.msra.mxu0 0.0
    %1351 = vmatprep.subr.mxu0 0.0
    %1352 = vmatpush1.msra.mxu0 0.0
    %1353 = vmatprep.subr.mxu0 0.0
    %1354 = vmatpush1.msra.mxu0 0.0
    %1355 = vmatprep.subr.mxu0 0.0
    %1356 = vmatpush1.msra.mxu0 0.0
    %1357 = vmatprep.subr.mxu0 0.0
    %1358 = vmatpush1.msra.mxu0 0.0
    %1359 = vmatprep.subr.mxu0 0.0
    %1360 = vmatpush1.msra.mxu0 0.0
    %1361 = vmatprep.subr.mxu0 0.0
    %1362 = vmatpush1.msra.mxu0 0.0
    %1363 = vmatprep.subr.mxu0 0.0
    %1364 = vmatpush1.msra.mxu0 0.0
    %1365 = vmatprep.subr.mxu0 0.0
    %1366 = vmatpush1.msra.mxu0 0.0
    %1367 = vmatprep.subr.mxu0 0.0
    %1368 = vmatpush1.msra.mxu0 0.0
    %1369 = vmatprep.subr.mxu0 0.0
    %1370 = vmatpush1.msra.mxu0 0.0
    %1371 = vmatprep.subr.mxu0 0.0
    %1372 = vmatpush1.msra.mxu0 0.0
    %1373 = vmatprep.subr.mxu0 0.0
    %1374 = vmatpush1.msra.mxu0 %v1341
    %1375 = vmatprep.subr.mxu0 0.0
    %1376 = vmatpush2.msra.mxu0 0.0
    %1377 = vmatprep.subr.mxu0 0.0
    %1378 = vmatpush2.msra.mxu0 0.0
    %1379 = vmatprep.subr.mxu0 0.0
    %1380 = vmatpush2.msra.mxu0 0.0
    %1381 = vmatprep.subr.mxu0 0.0
    %1382 = vmatpush2.msra.mxu0 0.0
    %1383 = vmatprep.subr.mxu0 0.0
    %1384 = vmatpush2.msra.mxu0 0.0
    %1385 = vmatprep.subr.mxu0 0.0
    %1386 = vmatpush2.msra.mxu0 0.0
    %1387 = vmatprep.subr.mxu0 0.0
    %1388 = vmatpush2.msra.mxu0 0.0
    %1389 = vmatprep.subr.mxu0 0.0
    %1390 = vmatpush2.msra.mxu0 0.0
    %1391 = vmatprep.subr.mxu0 0.0
    %1392 = vmatpush2.msra.mxu0 0.0
    %1393 = vmatprep.subr.mxu0 0.0
    %1394 = vmatpush2.msra.mxu0 0.0
    %1395 = vmatprep.subr.mxu0 0.0
    %1396 = vmatpush2.msra.mxu0 0.0
    %1397 = vmatprep.subr.mxu0 0.0
    %1398 = vmatpush2.msra.mxu0 0.0
    %1399 = vmatprep.subr.mxu0 0.0
    %1400 = vmatpush2.msra.mxu0 0.0
    %1401 = vmatprep.subr.mxu0 0.0
    %1402 = vmatpush2.msra.mxu0 0.0
    %1403 = vmatprep.subr.mxu0 0.0
    %1404 = vmatpush2.msra.mxu0 0.0
    %1405 = vmatprep.subr.mxu0 0.0
    %1406 = vmatpush2.msra.mxu0 0.0
    %1407 = vmatprep.mubr.f32.mxu0 0.0
    %1408 = vmatmul.mubr.f32.gmra.mxu0 %v147
    %v1409 = vpop.f32.mrf.mxu0
    %v1410 = vadd.f32 0.0, %v1409
    %v1411 = vpop.f32.mrf.mxu0
    %1412 = vmatprep.mubr.f32.mxu0 0.0
    %1413 = vmatmul.mubr.f32.gmra.mxu0 %v150
    %v1414 = vpop.f32.mrf.mxu0
    %v1415 = vadd.f32 0.0, %v1414
    %v1416 = vpop.f32.mrf.mxu0
    %1417 = vmatprep.mubr.f32.mxu0 0.0
    %1418 = vmatmul.mubr.f32.gmra.mxu0 %v153
    %v1419 = vpop.f32.mrf.mxu0
    %v1420 = vadd.f32 0.0, %v1419
    %v1421 = vpop.f32.mrf.mxu0
    %1422 = vmatprep.mubr.f32.mxu0 0.0
    %1423 = vmatmul.mubr.f32.gmra.mxu0 %v156
    %v1424 = vpop.f32.mrf.mxu0
    %v1425 = vadd.f32 0.0, %v1424
    %v1426 = vpop.f32.mrf.mxu0
    %1427 = vmatprep.mubr.f32.mxu0 0.0
    %1428 = vmatmul.mubr.f32.gmra.mxu0 %v159
    %v1429 = vpop.f32.mrf.mxu0
    %v1430 = vadd.f32 0.0, %v1429
    %v1431 = vpop.f32.mrf.mxu0
    %1432 = vmatprep.mubr.f32.mxu0 0.0
    %1433 = vmatmul.mubr.f32.gmra.mxu0 %v162
    %v1434 = vpop.f32.mrf.mxu0
    %v1435 = vadd.f32 0.0, %v1434
    %v1436 = vpop.f32.mrf.mxu0
    %1437 = vmatprep.mubr.f32.mxu0 0.0
    %1438 = vmatmul.mubr.f32.gmra.mxu0 %v165
    %v1439 = vpop.f32.mrf.mxu0
    %v1440 = vadd.f32 0.0, %v1439
    %v1441 = vpop.f32.mrf.mxu0
    %1442 = vmatprep.mubr.f32.mxu0 0.0
    %1443 = vmatmul.mubr.f32.gmra.mxu0 %v168
    %v1444 = vpop.f32.mrf.mxu0
    %v1445 = vadd.f32 0.0, %v1444
    %v1446 = vpop.f32.mrf.mxu0
    %1447 = vmatprep.mubr.f32.mxu0 0.0
    %1448 = vmatmul.mubr.f32.gmra.mxu0 %v171
    %v1449 = vpop.f32.mrf.mxu0
    %v1450 = vadd.f32 0.0, %v1449
    %v1451 = vpop.f32.mrf.mxu0
    %1452 = vmatprep.mubr.f32.mxu0 0.0
    %1453 = vmatmul.mubr.f32.gmra.mxu0 %v174
    %v1454 = vpop.f32.mrf.mxu0
    %v1455 = vadd.f32 0.0, %v1454
    %v1456 = vpop.f32.mrf.mxu0
    %1457 = vmatprep.mubr.f32.mxu0 0.0
    %1458 = vmatmul.mubr.f32.gmra.mxu0 %v177
    %v1459 = vpop.f32.mrf.mxu0
    %v1460 = vadd.f32 0.0, %v1459
    %v1461 = vpop.f32.mrf.mxu0
    %1462 = vmatprep.mubr.f32.mxu0 0.0
    %1463 = vmatmul.mubr.f32.gmra.mxu0 %v180
    %v1464 = vpop.f32.mrf.mxu0
    %v1465 = vadd.f32 0.0, %v1464
    %v1466 = vpop.f32.mrf.mxu0
    %1467 = vmatprep.mubr.f32.mxu0 0.0
    %1468 = vmatmul.mubr.f32.gmra.mxu0 %v183
    %v1469 = vpop.f32.mrf.mxu0
    %v1470 = vadd.f32 0.0, %v1469
    %v1471 = vpop.f32.mrf.mxu0
    %1472 = vmatprep.mubr.f32.mxu0 0.0
    %1473 = vmatmul.mubr.f32.gmra.mxu0 %v186
    %v1474 = vpop.f32.mrf.mxu0
    %v1475 = vadd.f32 0.0, %v1474
    %v1476 = vpop.f32.mrf.mxu0
    %1477 = vmatprep.mubr.f32.mxu0 0.0
    %1478 = vmatmul.mubr.f32.gmra.mxu0 %v189
    %v1479 = vpop.f32.mrf.mxu0
    %v1480 = vadd.f32 0.0, %v1479
    %v1481 = vpop.f32.mrf.mxu0
    %1482 = vmatprep.mubr.f32.mxu0 0.0
    %1483 = vmatmul.mubr.f32.gmra.mxu0 %v192
    %v1484 = vpop.f32.mrf.mxu0
    %v1485 = vadd.f32 0.0, %v1484
    %v1486 = vpop.f32.mrf.mxu0
    %1487 = vmatprep.mubr.f32.mxu0 0.0
    %1488 = vmatmul.mubr.f32.gmra.mxu0 %v195
    %v1489 = vpop.f32.mrf.mxu0
    %v1490 = vadd.f32 0.0, %v1489
    %v1491 = vpop.f32.mrf.mxu0
    %1492 = vmatprep.mubr.f32.mxu0 0.0
    %1493 = vmatmul.mubr.f32.gmra.mxu0 %v198
    %v1494 = vpop.f32.mrf.mxu0
    %v1495 = vadd.f32 0.0, %v1494
    %v1496 = vpop.f32.mrf.mxu0
    %1497 = vmatprep.mubr.f32.mxu0 0.0
    %1498 = vmatmul.mubr.f32.gmra.mxu0 %v201
    %v1499 = vpop.f32.mrf.mxu0
    %v1500 = vadd.f32 0.0, %v1499
    %v1501 = vpop.f32.mrf.mxu0
    %1502 = vmatprep.mubr.f32.mxu0 0.0
    %1503 = vmatmul.mubr.f32.gmra.mxu0 %v204
    %v1504 = vpop.f32.mrf.mxu0
    %v1505 = vadd.f32 0.0, %v1504
    %v1506 = vpop.f32.mrf.mxu0
    %1507 = vmatprep.mubr.f32.mxu0 0.0
    %1508 = vmatmul.mubr.f32.gmra.mxu0 %v207
    %v1509 = vpop.f32.mrf.mxu0
    %v1510 = vadd.f32 0.0, %v1509
    %v1511 = vpop.f32.mrf.mxu0
    %1512 = vmatprep.mubr.f32.mxu0 0.0
    %1513 = vmatmul.mubr.f32.gmra.mxu0 %v210
    %v1514 = vpop.f32.mrf.mxu0
    %v1515 = vadd.f32 0.0, %v1514
    %v1516 = vpop.f32.mrf.mxu0
    %1517 = vmatprep.mubr.f32.mxu0 0.0
    %1518 = vmatmul.mubr.f32.gmra.mxu0 %v213
    %v1519 = vpop.f32.mrf.mxu0
    %v1520 = vadd.f32 0.0, %v1519
    %v1521 = vpop.f32.mrf.mxu0
    %1522 = vmatprep.mubr.f32.mxu0 0.0
    %1523 = vmatmul.mubr.f32.gmra.mxu0 %v216
    %v1524 = vpop.f32.mrf.mxu0
    %v1525 = vadd.f32 0.0, %v1524
    %v1526 = vpop.f32.mrf.mxu0
    %1527 = vmatprep.mubr.f32.mxu0 0.0
    %1528 = vmatmul.mubr.f32.gmra.mxu0 %v219
    %v1529 = vpop.f32.mrf.mxu0
    %v1530 = vadd.f32 0.0, %v1529
    %v1531 = vpop.f32.mrf.mxu0
    %1532 = vmatprep.mubr.f32.mxu0 0.0
    %1533 = vmatmul.mubr.f32.gmra.mxu0 %v222
    %v1534 = vpop.f32.mrf.mxu0
    %v1535 = vadd.f32 0.0, %v1534
    %v1536 = vpop.f32.mrf.mxu0
    %1537 = vmatprep.mubr.f32.mxu0 0.0
    %1538 = vmatmul.mubr.f32.gmra.mxu0 %v225
    %v1539 = vpop.f32.mrf.mxu0
    %v1540 = vadd.f32 0.0, %v1539
    %v1541 = vpop.f32.mrf.mxu0
    %1542 = vmatprep.mubr.f32.mxu0 0.0
    %1543 = vmatmul.mubr.f32.gmra.mxu0 %v228
    %v1544 = vpop.f32.mrf.mxu0
    %v1545 = vadd.f32 0.0, %v1544
    %v1546 = vpop.f32.mrf.mxu0
    %1547 = vmatprep.mubr.f32.mxu0 0.0
    %1548 = vmatmul.mubr.f32.gmra.mxu0 %v231
    %v1549 = vpop.f32.mrf.mxu0
    %v1550 = vadd.f32 0.0, %v1549
    %v1551 = vpop.f32.mrf.mxu0
    %1552 = vmatprep.mubr.f32.mxu0 0.0
    %1553 = vmatmul.mubr.f32.gmra.mxu0 %v234
    %v1554 = vpop.f32.mrf.mxu0
    %v1555 = vadd.f32 0.0, %v1554
    %v1556 = vpop.f32.mrf.mxu0
    %1557 = vmatprep.mubr.f32.mxu0 0.0
    %1558 = vmatmul.mubr.f32.gmra.mxu0 %v237
    %v1559 = vpop.f32.mrf.mxu0
    %v1560 = vadd.f32 0.0, %v1559
    %v1561 = vpop.f32.mrf.mxu0
    %1562 = vmatprep.mubr.f32.mxu0 0.0
    %1563 = vmatmul.mubr.f32.gmra.mxu0 %v240
    %v1564 = vpop.f32.mrf.mxu0
    %v1565 = vadd.f32 0.0, %v1564
    %v1566 = vpop.f32.mrf.mxu0
    %1567 = vmatprep.mubr.f32.mxu0 0.0
    %1568 = vmatmul.mubr.f32.gmra.mxu0 %v243
    %v1569 = vpop.f32.mrf.mxu0
    %v1570 = vadd.f32 0.0, %v1569
    %v1571 = vpop.f32.mrf.mxu0
    %1572 = vmatprep.mubr.f32.mxu0 0.0
    %1573 = vmatmul.mubr.f32.gmra.mxu0 %v246
    %v1574 = vpop.f32.mrf.mxu0
    %v1575 = vadd.f32 0.0, %v1574
    %v1576 = vpop.f32.mrf.mxu0
    %1577 = vmatprep.mubr.f32.mxu0 0.0
    %1578 = vmatmul.mubr.f32.gmra.mxu0 %v249
    %v1579 = vpop.f32.mrf.mxu0
    %v1580 = vadd.f32 0.0, %v1579
    %v1581 = vpop.f32.mrf.mxu0
    %1582 = vmatprep.mubr.f32.mxu0 0.0
    %1583 = vmatmul.mubr.f32.gmra.mxu0 %v252
    %v1584 = vpop.f32.mrf.mxu0
    %v1585 = vadd.f32 0.0, %v1584
    %v1586 = vpop.f32.mrf.mxu0
    %1587 = vmatprep.mubr.f32.mxu0 0.0
    %1588 = vmatmul.mubr.f32.gmra.mxu0 %v255
    %v1589 = vpop.f32.mrf.mxu0
    %v1590 = vadd.f32 0.0, %v1589
    %v1591 = vpop.f32.mrf.mxu0
    %1592 = vmatprep.mubr.f32.mxu0 0.0
    %1593 = vmatmul.mubr.f32.gmra.mxu0 %v258
    %v1594 = vpop.f32.mrf.mxu0
    %v1595 = vadd.f32 0.0, %v1594
    %v1596 = vpop.f32.mrf.mxu0
    %1597 = vmatprep.mubr.f32.mxu0 0.0
    %1598 = vmatmul.mubr.f32.gmra.mxu0 %v261
    %v1599 = vpop.f32.mrf.mxu0
    %v1600 = vadd.f32 0.0, %v1599
    %v1601 = vpop.f32.mrf.mxu0
    %1602 = vmatprep.mubr.f32.mxu0 0.0
    %1603 = vmatmul.mubr.f32.gmra.mxu0 %v264
    %v1604 = vpop.f32.mrf.mxu0
    %v1605 = vadd.f32 0.0, %v1604
    %v1606 = vpop.f32.mrf.mxu0
    %1607 = vmatprep.mubr.f32.mxu0 0.0
    %1608 = vmatmul.mubr.f32.gmra.mxu0 %v267
    %v1609 = vpop.f32.mrf.mxu0
    %v1610 = vadd.f32 0.0, %v1609
    %v1611 = vpop.f32.mrf.mxu0
    %1612 = vmatprep.mubr.f32.mxu0 0.0
    %1613 = vmatmul.mubr.f32.gmra.mxu0 %v270
    %v1614 = vpop.f32.mrf.mxu0
    %v1615 = vadd.f32 0.0, %v1614
    %v1616 = vpop.f32.mrf.mxu0
    %1617 = vmatprep.mubr.f32.mxu0 0.0
    %1618 = vmatmul.mubr.f32.gmra.mxu0 %v273
    %v1619 = vpop.f32.mrf.mxu0
    %v1620 = vadd.f32 0.0, %v1619
    %v1621 = vpop.f32.mrf.mxu0
    %1622 = vmatprep.mubr.f32.mxu0 0.0
    %1623 = vmatmul.mubr.f32.gmra.mxu0 %v276
    %v1624 = vpop.f32.mrf.mxu0
    %v1625 = vadd.f32 0.0, %v1624
    %v1626 = vpop.f32.mrf.mxu0
    %1627 = vmatprep.mubr.f32.mxu0 0.0
    %1628 = vmatmul.mubr.f32.gmra.mxu0 %v279
    %v1629 = vpop.f32.mrf.mxu0
    %v1630 = vadd.f32 0.0, %v1629
    %v1631 = vpop.f32.mrf.mxu0
    %1632 = vmatprep.mubr.f32.mxu0 0.0
    %1633 = vmatmul.mubr.f32.gmra.mxu0 %v282
    %v1634 = vpop.f32.mrf.mxu0
    %v1635 = vadd.f32 0.0, %v1634
    %v1636 = vpop.f32.mrf.mxu0
    %1637 = vmatprep.mubr.f32.mxu0 0.0
    %1638 = vmatmul.mubr.f32.gmra.mxu0 %v285
    %v1639 = vpop.f32.mrf.mxu0
    %v1640 = vadd.f32 0.0, %v1639
    %v1641 = vpop.f32.mrf.mxu0
    %1642 = vmatprep.mubr.f32.mxu0 0.0
    %1643 = vmatmul.mubr.f32.gmra.mxu0 %v288
    %v1644 = vpop.f32.mrf.mxu0
    %v1645 = vadd.f32 0.0, %v1644
    %v1646 = vpop.f32.mrf.mxu0
    %1647 = vmatprep.mubr.f32.mxu0 0.0
    %1648 = vmatmul.mubr.f32.gmra.mxu0 %v291
    %v1649 = vpop.f32.mrf.mxu0
    %v1650 = vadd.f32 0.0, %v1649
    %v1651 = vpop.f32.mrf.mxu0
    %1652 = vmatprep.mubr.f32.mxu0 0.0
    %1653 = vmatmul.mubr.f32.gmra.mxu0 %v294
    %v1654 = vpop.f32.mrf.mxu0
    %v1655 = vadd.f32 0.0, %v1654
    %v1656 = vpop.f32.mrf.mxu0
    %1657 = vmatprep.mubr.f32.mxu0 0.0
    %1658 = vmatmul.mubr.f32.gmra.mxu0 %v297
    %v1659 = vpop.f32.mrf.mxu0
    %v1660 = vadd.f32 0.0, %v1659
    %v1661 = vpop.f32.mrf.mxu0
    %1662 = vmatprep.mubr.f32.mxu0 0.0
    %1663 = vmatmul.mubr.f32.gmra.mxu0 %v300
    %v1664 = vpop.f32.mrf.mxu0
    %v1665 = vadd.f32 0.0, %v1664
    %v1666 = vpop.f32.mrf.mxu0
    %1667 = vmatprep.mubr.f32.mxu0 0.0
    %1668 = vmatmul.mubr.f32.gmra.mxu0 %v303
    %v1669 = vpop.f32.mrf.mxu0
    %v1670 = vadd.f32 0.0, %v1669
    %v1671 = vpop.f32.mrf.mxu0
    %1672 = vmatprep.mubr.f32.mxu0 0.0
    %1673 = vmatmul.mubr.f32.gmra.mxu0 %v306
    %v1674 = vpop.f32.mrf.mxu0
    %v1675 = vadd.f32 0.0, %v1674
    %v1676 = vpop.f32.mrf.mxu0
    %1677 = vmatprep.mubr.f32.mxu0 0.0
    %1678 = vmatmul.mubr.f32.gmra.mxu0 %v309
    %v1679 = vpop.f32.mrf.mxu0
    %v1680 = vadd.f32 0.0, %v1679
    %v1681 = vpop.f32.mrf.mxu0
    %1682 = vmatprep.mubr.f32.mxu0 0.0
    %1683 = vmatmul.mubr.f32.gmra.mxu0 %v312
    %v1684 = vpop.f32.mrf.mxu0
    %v1685 = vadd.f32 0.0, %v1684
    %v1686 = vpop.f32.mrf.mxu0
    %1687 = vmatprep.mubr.f32.mxu0 0.0
    %1688 = vmatmul.mubr.f32.gmra.mxu0 %v315
    %v1689 = vpop.f32.mrf.mxu0
    %v1690 = vadd.f32 0.0, %v1689
    %v1691 = vpop.f32.mrf.mxu0
    %1692 = vmatprep.mubr.f32.mxu0 0.0
    %1693 = vmatmul.mubr.f32.gmra.mxu0 %v318
    %v1694 = vpop.f32.mrf.mxu0
    %v1695 = vadd.f32 0.0, %v1694
    %v1696 = vpop.f32.mrf.mxu0
    %1697 = vmatprep.mubr.f32.mxu0 0.0
    %1698 = vmatmul.mubr.f32.gmra.mxu0 %v321
    %v1699 = vpop.f32.mrf.mxu0
    %v1700 = vadd.f32 0.0, %v1699
    %v1701 = vpop.f32.mrf.mxu0
    %1702 = vmatprep.mubr.f32.mxu0 0.0
    %1703 = vmatmul.mubr.f32.gmra.mxu0 %v324
    %v1704 = vpop.f32.mrf.mxu0
    %v1705 = vadd.f32 0.0, %v1704
    %v1706 = vpop.f32.mrf.mxu0
    %1707 = vmatprep.mubr.f32.mxu0 0.0
    %1708 = vmatmul.mubr.f32.gmra.mxu0 %v327
    %v1709 = vpop.f32.mrf.mxu0
    %v1710 = vadd.f32 0.0, %v1709
    %v1711 = vpop.f32.mrf.mxu0
    %1712 = vmatprep.mubr.f32.mxu0 0.0
    %1713 = vmatmul.mubr.f32.gmra.mxu0 %v330
    %v1714 = vpop.f32.mrf.mxu0
    %v1715 = vadd.f32 0.0, %v1714
    %v1716 = vpop.f32.mrf.mxu0
    %1717 = vmatprep.mubr.f32.mxu0 0.0
    %1718 = vmatmul.mubr.f32.gmra.mxu0 %v333
    %v1719 = vpop.f32.mrf.mxu0
    %v1720 = vadd.f32 0.0, %v1719
    %v1721 = vpop.f32.mrf.mxu0
    %1722 = vmatprep.mubr.f32.mxu0 0.0
    %1723 = vmatmul.mubr.f32.gmra.mxu0 %v336
    %v1724 = vpop.f32.mrf.mxu0
    %v1725 = vadd.f32 0.0, %v1724
    %v1726 = vpop.f32.mrf.mxu0
    %1727 = vmatprep.mubr.f32.mxu0 0.0
    %1728 = vmatmul.mubr.f32.gmra.mxu0 %v339
    %v1729 = vpop.f32.mrf.mxu0
    %v1730 = vadd.f32 0.0, %v1729
    %v1731 = vpop.f32.mrf.mxu0
    %1732 = vmatprep.mubr.f32.mxu0 0.0
    %1733 = vmatmul.mubr.f32.gmra.mxu0 %v342
    %v1734 = vpop.f32.mrf.mxu0
    %v1735 = vadd.f32 0.0, %v1734
    %v1736 = vpop.f32.mrf.mxu0
    %1737 = vmatprep.mubr.f32.mxu0 0.0
    %1738 = vmatmul.mubr.f32.gmra.mxu0 %v345
    %v1739 = vpop.f32.mrf.mxu0
    %v1740 = vadd.f32 0.0, %v1739
    %v1741 = vpop.f32.mrf.mxu0
    %1742 = vmatprep.mubr.f32.mxu0 0.0
    %1743 = vmatmul.mubr.f32.gmra.mxu0 %v348
    %v1744 = vpop.f32.mrf.mxu0
    %v1745 = vadd.f32 0.0, %v1744
    %v1746 = vpop.f32.mrf.mxu0
    %1747 = vmatprep.mubr.f32.mxu0 0.0
    %1748 = vmatmul.mubr.f32.gmra.mxu0 %v351
    %v1749 = vpop.f32.mrf.mxu0
    %v1750 = vadd.f32 0.0, %v1749
    %v1751 = vpop.f32.mrf.mxu0
    %1752 = vmatprep.mubr.f32.mxu0 0.0
    %1753 = vmatmul.mubr.f32.gmra.mxu0 %v354
    %v1754 = vpop.f32.mrf.mxu0
    %v1755 = vadd.f32 0.0, %v1754
    %v1756 = vpop.f32.mrf.mxu0
    %1757 = vmatprep.mubr.f32.mxu0 0.0
    %1758 = vmatmul.mubr.f32.gmra.mxu0 %v357
    %v1759 = vpop.f32.mrf.mxu0
    %v1760 = vadd.f32 0.0, %v1759
    %v1761 = vpop.f32.mrf.mxu0
    %1762 = vmatprep.mubr.f32.mxu0 0.0
    %1763 = vmatmul.mubr.f32.gmra.mxu0 %v360
    %v1764 = vpop.f32.mrf.mxu0
    %v1765 = vadd.f32 0.0, %v1764
    %v1766 = vpop.f32.mrf.mxu0
    %1767 = vmatprep.mubr.f32.mxu0 0.0
    %1768 = vmatmul.mubr.f32.gmra.mxu0 %v363
    %v1769 = vpop.f32.mrf.mxu0
    %v1770 = vadd.f32 0.0, %v1769
    %v1771 = vpop.f32.mrf.mxu0
    %1772 = vmatprep.mubr.f32.mxu0 0.0
    %1773 = vmatmul.mubr.f32.gmra.mxu0 %v366
    %v1774 = vpop.f32.mrf.mxu0
    %v1775 = vadd.f32 0.0, %v1774
    %v1776 = vpop.f32.mrf.mxu0
    %1777 = vmatprep.mubr.f32.mxu0 0.0
    %1778 = vmatmul.mubr.f32.gmra.mxu0 %v369
    %v1779 = vpop.f32.mrf.mxu0
    %v1780 = vadd.f32 0.0, %v1779
    %v1781 = vpop.f32.mrf.mxu0
    %1782 = vmatprep.mubr.f32.mxu0 0.0
    %1783 = vmatmul.mubr.f32.gmra.mxu0 %v372
    %v1784 = vpop.f32.mrf.mxu0
    %v1785 = vadd.f32 0.0, %v1784
    %v1786 = vpop.f32.mrf.mxu0
    %1787 = vmatprep.mubr.f32.mxu0 0.0
    %1788 = vmatmul.mubr.f32.gmra.mxu0 %v375
    %v1789 = vpop.f32.mrf.mxu0
    %v1790 = vadd.f32 0.0, %v1789
    %v1791 = vpop.f32.mrf.mxu0
    %1792 = vmatprep.mubr.f32.mxu0 0.0
    %1793 = vmatmul.mubr.f32.gmra.mxu0 %v378
    %v1794 = vpop.f32.mrf.mxu0
    %v1795 = vadd.f32 0.0, %v1794
    %v1796 = vpop.f32.mrf.mxu0
    %1797 = vmatprep.mubr.f32.mxu0 0.0
    %1798 = vmatmul.mubr.f32.gmra.mxu0 %v381
    %v1799 = vpop.f32.mrf.mxu0
    %v1800 = vadd.f32 0.0, %v1799
    %v1801 = vpop.f32.mrf.mxu0
    %1802 = vmatprep.mubr.f32.mxu0 0.0
    %1803 = vmatmul.mubr.f32.gmra.mxu0 %v384
    %v1804 = vpop.f32.mrf.mxu0
    %v1805 = vadd.f32 0.0, %v1804
    %v1806 = vpop.f32.mrf.mxu0
    %1807 = vmatprep.mubr.f32.mxu0 0.0
    %1808 = vmatmul.mubr.f32.gmra.mxu0 %v387
    %v1809 = vpop.f32.mrf.mxu0
    %v1810 = vadd.f32 0.0, %v1809
    %v1811 = vpop.f32.mrf.mxu0
    %1812 = vdwg.mxu0
    %v1813 = vrot.slane %v460, 7
    %v1814 = vrot.slane %v465, 7
    %v1815 = vrot.slane %v470, 7
    %v1816 = vrot.slane %v475, 7
    %v1817 = vrot.slane %v480, 7
    %v1818 = vrot.slane %v485, 7
    %v1819 = vrot.slane %v490, 7
    %v1820 = vrot.slane %v495, 7
    %v1821 = vrot.slane %v500, 7
    %v1822 = vrot.slane %v505, 7
    %v1823 = vrot.slane %v510, 7
    %v1824 = vrot.slane %v515, 7
    %v1825 = vrot.slane %v520, 7
    %v1826 = vrot.slane %v525, 7
    %v1827 = vrot.slane %v530, 7
    %v1828 = vrot.slane %v535, 7
    %v1829 = vrot.slane %v540, 7
    %v1830 = vrot.slane %v545, 7
    %v1831 = vrot.slane %v550, 7
    %v1832 = vrot.slane %v555, 7
    %v1833 = vrot.slane %v560, 7
    %v1834 = vrot.slane %v565, 7
    %v1835 = vrot.slane %v570, 7
    %v1836 = vrot.slane %v575, 7
    %v1837 = vrot.slane %v580, 7
    %v1838 = vrot.slane %v585, 7
    %v1839 = vrot.slane %v590, 7
    %v1840 = vrot.slane %v595, 7
    %v1841 = vrot.slane %v600, 7
    %v1842 = vrot.slane %v605, 7
    %v1843 = vrot.slane %v610, 7
    %v1844 = vrot.slane %v615, 7
    %v1845 = vrot.slane %v620, 7
    %v1846 = vrot.slane %v625, 7
    %v1847 = vrot.slane %v630, 7
    %v1848 = vrot.slane %v635, 7
    %v1849 = vrot.slane %v640, 7
    %v1850 = vrot.slane %v645, 7
    %v1851 = vrot.slane %v650, 7
    %v1852 = vrot.slane %v655, 7
    %v1853 = vrot.slane %v660, 7
    %v1854 = vrot.slane %v665, 7
    %v1855 = vrot.slane %v670, 7
    %v1856 = vrot.slane %v675, 7
    %v1857 = vrot.slane %v680, 7
    %v1858 = vrot.slane %v685, 7
    %v1859 = vrot.slane %v690, 7
    %v1860 = vrot.slane %v695, 7
    %v1861 = vrot.slane %v700, 7
    %v1862 = vrot.slane %v705, 7
    %v1863 = vrot.slane %v710, 7
    %v1864 = vrot.slane %v715, 7
    %v1865 = vrot.slane %v720, 7
    %v1866 = vrot.slane %v725, 7
    %v1867 = vrot.slane %v730, 7
    %v1868 = vrot.slane %v735, 7
    %v1869 = vrot.slane %v740, 7
    %v1870 = vrot.slane %v745, 7
    %v1871 = vrot.slane %v750, 7
    %v1872 = vrot.slane %v755, 7
    %v1873 = vrot.slane %v760, 7
    %v1874 = vrot.slane %v765, 7
    %v1875 = vrot.slane %v770, 7
    %v1876 = vrot.slane %v775, 7
    %v1877 = vrot.slane %v780, 7
    %v1878 = vrot.slane %v785, 7
    %v1879 = vrot.slane %v790, 7
    %v1880 = vrot.slane %v795, 7
    %v1881 = vrot.slane %v800, 7
    %v1882 = vrot.slane %v805, 7
    %v1883 = vrot.slane %v810, 7
    %v1884 = vrot.slane %v815, 7
    %v1885 = vrot.slane %v820, 7
    %v1886 = vrot.slane %v825, 7
    %v1887 = vrot.slane %v830, 7
    %v1888 = vrot.slane %v835, 7
    %v1889 = vrot.slane %v840, 7
    %v1890 = vrot.slane %v845, 7
    %v1891 = vrot.slane %v850, 7
    %v1892 = vrot.slane %v855, 7
    %v1893 = vrot.slane %v860, 7
    %v1894 = vlaneseq
    %v1895 = vshrl.u32 %v1894, 7
    %vm1896 = vcmp.lt.s32.totalorder %v1895, 1
    %v1897 = vsel %vm1896, %v1892, %v1893
    %v1898 = vsel %vm1896, %v1891, %v1892
    %v1899 = vsel %vm1896, %v1890, %v1891
    %v1900 = vsel %vm1896, %v1889, %v1890
    %v1901 = vsel %vm1896, %v1888, %v1889
    %v1902 = vsel %vm1896, %v1887, %v1888
    %v1903 = vsel %vm1896, %v1886, %v1887
    %v1904 = vsel %vm1896, %v1885, %v1886
    %v1905 = vsel %vm1896, %v1884, %v1885
    %v1906 = vsel %vm1896, %v1883, %v1884
    %v1907 = vsel %vm1896, %v1882, %v1883
    %v1908 = vsel %vm1896, %v1881, %v1882
    %v1909 = vsel %vm1896, %v1880, %v1881
    %v1910 = vsel %vm1896, %v1879, %v1880
    %v1911 = vsel %vm1896, %v1878, %v1879
    %v1912 = vsel %vm1896, %v1877, %v1878
    %v1913 = vsel %vm1896, %v1876, %v1877
    %v1914 = vsel %vm1896, %v1875, %v1876
    %v1915 = vsel %vm1896, %v1874, %v1875
    %v1916 = vsel %vm1896, %v1873, %v1874
    %v1917 = vsel %vm1896, %v1872, %v1873
    %v1918 = vsel %vm1896, %v1871, %v1872
    %v1919 = vsel %vm1896, %v1870, %v1871
    %v1920 = vsel %vm1896, %v1869, %v1870
    %v1921 = vsel %vm1896, %v1868, %v1869
    %v1922 = vsel %vm1896, %v1867, %v1868
    %v1923 = vsel %vm1896, %v1866, %v1867
    %v1924 = vsel %vm1896, %v1865, %v1866
    %v1925 = vsel %vm1896, %v1864, %v1865
    %v1926 = vsel %vm1896, %v1863, %v1864
    %v1927 = vsel %vm1896, %v1862, %v1863
    %v1928 = vsel %vm1896, %v1861, %v1862
    %v1929 = vsel %vm1896, %v1860, %v1861
    %v1930 = vsel %vm1896, %v1859, %v1860
    %v1931 = vsel %vm1896, %v1858, %v1859
    %v1932 = vsel %vm1896, %v1857, %v1858
    %v1933 = vsel %vm1896, %v1856, %v1857
    %v1934 = vsel %vm1896, %v1855, %v1856
    %v1935 = vsel %vm1896, %v1854, %v1855
    %v1936 = vsel %vm1896, %v1853, %v1854
    %v1937 = vsel %vm1896, %v1852, %v1853
    %v1938 = vsel %vm1896, %v1851, %v1852
    %v1939 = vsel %vm1896, %v1850, %v1851
    %v1940 = vsel %vm1896, %v1849, %v1850
    %v1941 = vsel %vm1896, %v1848, %v1849
    %v1942 = vsel %vm1896, %v1847, %v1848
    %v1943 = vsel %vm1896, %v1846, %v1847
    %v1944 = vsel %vm1896, %v1845, %v1846
    %v1945 = vsel %vm1896, %v1844, %v1845
    %v1946 = vsel %vm1896, %v1843, %v1844
    %v1947 = vsel %vm1896, %v1842, %v1843
    %v1948 = vsel %vm1896, %v1841, %v1842
    %v1949 = vsel %vm1896, %v1840, %v1841
    %v1950 = vsel %vm1896, %v1839, %v1840
    %v1951 = vsel %vm1896, %v1838, %v1839
    %v1952 = vsel %vm1896, %v1837, %v1838
    %v1953 = vsel %vm1896, %v1836, %v1837
    %v1954 = vsel %vm1896, %v1835, %v1836
    %v1955 = vsel %vm1896, %v1834, %v1835
    %v1956 = vsel %vm1896, %v1833, %v1834
    %v1957 = vsel %vm1896, %v1832, %v1833
    %v1958 = vsel %vm1896, %v1831, %v1832
    %v1959 = vsel %vm1896, %v1830, %v1831
    %v1960 = vsel %vm1896, %v1829, %v1830
    %v1961 = vsel %vm1896, %v1828, %v1829
    %v1962 = vsel %vm1896, %v1827, %v1828
    %v1963 = vsel %vm1896, %v1826, %v1827
    %v1964 = vsel %vm1896, %v1825, %v1826
    %v1965 = vsel %vm1896, %v1824, %v1825
    %v1966 = vsel %vm1896, %v1823, %v1824
    %v1967 = vsel %vm1896, %v1822, %v1823
    %v1968 = vsel %vm1896, %v1821, %v1822
    %v1969 = vsel %vm1896, %v1820, %v1821
    %v1970 = vsel %vm1896, %v1819, %v1820
    %v1971 = vsel %vm1896, %v1818, %v1819
    %v1972 = vsel %vm1896, %v1817, %v1818
    %v1973 = vsel %vm1896, %v1816, %v1817
    %v1974 = vsel %vm1896, %v1815, %v1816
    %v1975 = vsel %vm1896, %v1814, %v1815
    %v1976 = vsel %vm1896, %v1813, %v1814
    %v1977 = vsel %vm1896, %v1893, %v1813
    %v1978 = vld [vmem:[%s3] sm:$0xff]
    %v1979 = vld [vmem:[%s3 + $0x8] sm:$0xff]
    %v1980 = vld [vmem:[%s3 + $0x10] sm:$0xff]
    %v1981 = vld [vmem:[%s3 + $0x18] sm:$0xff]
    %v1982 = vld [vmem:[%s3 + $0x20] sm:$0xff]
    %v1983 = vld [vmem:[%s3 + $0x28] sm:$0xff]
    %v1984 = vld [vmem:[%s3 + $0x30] sm:$0xff]
    %v1985 = vld [vmem:[%s3 + $0x38] sm:$0xff]
    %v1986 = vld [vmem:[%s3 + $0x40] sm:$0xff]
    %v1987 = vld [vmem:[%s3 + $0x48] sm:$0xff]
    %v1988 = vld [vmem:[%s3 + $0x50] sm:$0xff]
    %v1989 = vld [vmem:[%s3 + $0x58] sm:$0xff]
    %v1990 = vld [vmem:[%s3 + $0x60] sm:$0xff]
    %v1991 = vld [vmem:[%s3 + $0x68] sm:$0xff]
    %v1992 = vld [vmem:[%s3 + $0x70] sm:$0xff]
    %v1993 = vld [vmem:[%s3 + $0x78] sm:$0xff]
    %v1994 = vld [vmem:[%s3 + $0x80] sm:$0xff]
    %v1995 = vld [vmem:[%s3 + $0x88] sm:$0xff]
    %v1996 = vld [vmem:[%s3 + $0x90] sm:$0xff]
    %v1997 = vld [vmem:[%s3 + $0x98] sm:$0xff]
    %v1998 = vld [vmem:[%s3 + $0xa0] sm:$0xff]
    %v1999 = vld [vmem:[%s3 + $0xa8] sm:$0xff]
    %v2000 = vld [vmem:[%s3 + $0xb0] sm:$0xff]
    %v2001 = vld [vmem:[%s3 + $0xb8] sm:$0xff]
    %v2002 = vld [vmem:[%s3 + $0xc0] sm:$0xff]
    %v2003 = vld [vmem:[%s3 + $0xc8] sm:$0xff]
    %v2004 = vld [vmem:[%s3 + $0xd0] sm:$0xff]
    %v2005 = vld [vmem:[%s3 + $0xd8] sm:$0xff]
    %v2006 = vld [vmem:[%s3 + $0xe0] sm:$0xff]
    %v2007 = vld [vmem:[%s3 + $0xe8] sm:$0xff]
    %v2008 = vld [vmem:[%s3 + $0xf0] sm:$0xff]
    %v2009 = vld [vmem:[%s3 + $0xf8] sm:$0xff]
    %v2010 = vld [vmem:[%s3 + $0x100] sm:$0xff]
    %v2011 = vld [vmem:[%s3 + $0x108] sm:$0xff]
    %v2012 = vld [vmem:[%s3 + $0x110] sm:$0xff]
    %v2013 = vld [vmem:[%s3 + $0x118] sm:$0xff]
    %v2014 = vld [vmem:[%s3 + $0x120] sm:$0xff]
    %v2015 = vld [vmem:[%s3 + $0x128] sm:$0xff]
    %v2016 = vld [vmem:[%s3 + $0x130] sm:$0xff]
    %v2017 = vld [vmem:[%s3 + $0x138] sm:$0xff]
    %v2018 = vld [vmem:[%s3 + $0x140] sm:$0xff]
    %v2019 = vld [vmem:[%s3 + $0x148] sm:$0xff]
    %v2020 = vld [vmem:[%s3 + $0x150] sm:$0xff]
    %v2021 = vld [vmem:[%s3 + $0x158] sm:$0xff]
    %v2022 = vld [vmem:[%s3 + $0x160] sm:$0xff]
    %v2023 = vld [vmem:[%s3 + $0x168] sm:$0xff]
    %v2024 = vld [vmem:[%s3 + $0x170] sm:$0xff]
    %v2025 = vld [vmem:[%s3 + $0x178] sm:$0xff]
    %v2026 = vld [vmem:[%s3 + $0x180] sm:$0xff]
    %v2027 = vld [vmem:[%s3 + $0x188] sm:$0xff]
    %v2028 = vld [vmem:[%s3 + $0x190] sm:$0xff]
    %v2029 = vld [vmem:[%s3 + $0x198] sm:$0xff]
    %v2030 = vld [vmem:[%s3 + $0x1a0] sm:$0xff]
    %v2031 = vld [vmem:[%s3 + $0x1a8] sm:$0xff]
    %v2032 = vld [vmem:[%s3 + $0x1b0] sm:$0xff]
    %v2033 = vld [vmem:[%s3 + $0x1b8] sm:$0xff]
    %v2034 = vld [vmem:[%s3 + $0x1c0] sm:$0xff]
    %v2035 = vld [vmem:[%s3 + $0x1c8] sm:$0xff]
    %v2036 = vld [vmem:[%s3 + $0x1d0] sm:$0xff]
    %v2037 = vld [vmem:[%s3 + $0x1d8] sm:$0xff]
    %v2038 = vld [vmem:[%s3 + $0x1e0] sm:$0xff]
    %v2039 = vld [vmem:[%s3 + $0x1e8] sm:$0xff]
    %v2040 = vld [vmem:[%s3 + $0x1f0] sm:$0xff]
    %v2041 = vld [vmem:[%s3 + $0x1f8] sm:$0xff]
    %v2042 = vld [vmem:[%s3 + $0x200] sm:$0xff]
    %v2043 = vld [vmem:[%s3 + $0x208] sm:$0xff]
    %v2044 = vld [vmem:[%s3 + $0x210] sm:$0xff]
    %v2045 = vld [vmem:[%s3 + $0x218] sm:$0xff]
    %v2046 = vld [vmem:[%s3 + $0x220] sm:$0xff]
    %v2047 = vld [vmem:[%s3 + $0x228] sm:$0xff]
    %v2048 = vld [vmem:[%s3 + $0x230] sm:$0xff]
    %v2049 = vld [vmem:[%s3 + $0x238] sm:$0xff]
    %v2050 = vld [vmem:[%s3 + $0x240] sm:$0xff]
    %v2051 = vld [vmem:[%s3 + $0x248] sm:$0xff]
    %v2052 = vld [vmem:[%s3 + $0x250] sm:$0xff]
    %v2053 = vld [vmem:[%s3 + $0x258] sm:$0xff]
    %v2054 = vld [vmem:[%s3 + $0x260] sm:$0xff]
    %v2055 = vld [vmem:[%s3 + $0x268] sm:$0xff]
    %v2056 = vld [vmem:[%s3 + $0x270] sm:$0xff]
    %v2057 = vld [vmem:[%s3 + $0x278] sm:$0xff]
    %v2058 = vld [vmem:[%s3 + $0x280] sm:$0xff]
    %2060 = vset.pattern.permute.xlu0 0
    %2061 = vperm.xlu0 %2060, %v1978
    %v2062 = vpop.permute.xlu0 %2061
    %2065 = vset.pattern.permute.xlu0 0
    %2066 = vperm.xlu0 %2065, %v1979
    %v2067 = vpop.permute.xlu0 %2066
    %2070 = vset.pattern.permute.xlu0 0
    %2071 = vperm.xlu0 %2070, %v1980
    %v2072 = vpop.permute.xlu0 %2071
    %2075 = vset.pattern.permute.xlu0 0
    %2076 = vperm.xlu0 %2075, %v1981
    %v2077 = vpop.permute.xlu0 %2076
    %2080 = vset.pattern.permute.xlu0 0
    %2081 = vperm.xlu0 %2080, %v1982
    %v2082 = vpop.permute.xlu0 %2081
    %2085 = vset.pattern.permute.xlu0 0
    %2086 = vperm.xlu0 %2085, %v1983
    %v2087 = vpop.permute.xlu0 %2086
    %2090 = vset.pattern.permute.xlu0 0
    %2091 = vperm.xlu0 %2090, %v1984
    %v2092 = vpop.permute.xlu0 %2091
    %2095 = vset.pattern.permute.xlu0 0
    %2096 = vperm.xlu0 %2095, %v1985
    %v2097 = vpop.permute.xlu0 %2096
    %2100 = vset.pattern.permute.xlu0 0
    %2101 = vperm.xlu0 %2100, %v1986
    %v2102 = vpop.permute.xlu0 %2101
    %2105 = vset.pattern.permute.xlu0 0
    %2106 = vperm.xlu0 %2105, %v1987
    %v2107 = vpop.permute.xlu0 %2106
    %2110 = vset.pattern.permute.xlu0 0
    %2111 = vperm.xlu0 %2110, %v1988
    %v2112 = vpop.permute.xlu0 %2111
    %2115 = vset.pattern.permute.xlu0 0
    %2116 = vperm.xlu0 %2115, %v1989
    %v2117 = vpop.permute.xlu0 %2116
    %2120 = vset.pattern.permute.xlu0 0
    %2121 = vperm.xlu0 %2120, %v1990
    %v2122 = vpop.permute.xlu0 %2121
    %2125 = vset.pattern.permute.xlu0 0
    %2126 = vperm.xlu0 %2125, %v1991
    %v2127 = vpop.permute.xlu0 %2126
    %2130 = vset.pattern.permute.xlu0 0
    %2131 = vperm.xlu0 %2130, %v1992
    %v2132 = vpop.permute.xlu0 %2131
    %2135 = vset.pattern.permute.xlu0 0
    %2136 = vperm.xlu0 %2135, %v1993
    %v2137 = vpop.permute.xlu0 %2136
    %2140 = vset.pattern.permute.xlu0 0
    %2141 = vperm.xlu0 %2140, %v1994
    %v2142 = vpop.permute.xlu0 %2141
    %2145 = vset.pattern.permute.xlu0 0
    %2146 = vperm.xlu0 %2145, %v1995
    %v2147 = vpop.permute.xlu0 %2146
    %2150 = vset.pattern.permute.xlu0 0
    %2151 = vperm.xlu0 %2150, %v1996
    %v2152 = vpop.permute.xlu0 %2151
    %2155 = vset.pattern.permute.xlu0 0
    %2156 = vperm.xlu0 %2155, %v1997
    %v2157 = vpop.permute.xlu0 %2156
    %2160 = vset.pattern.permute.xlu0 0
    %2161 = vperm.xlu0 %2160, %v1998
    %v2162 = vpop.permute.xlu0 %2161
    %2165 = vset.pattern.permute.xlu0 0
    %2166 = vperm.xlu0 %2165, %v1999
    %v2167 = vpop.permute.xlu0 %2166
    %2170 = vset.pattern.permute.xlu0 0
    %2171 = vperm.xlu0 %2170, %v2000
    %v2172 = vpop.permute.xlu0 %2171
    %2175 = vset.pattern.permute.xlu0 0
    %2176 = vperm.xlu0 %2175, %v2001
    %v2177 = vpop.permute.xlu0 %2176
    %2180 = vset.pattern.permute.xlu0 0
    %2181 = vperm.xlu0 %2180, %v2002
    %v2182 = vpop.permute.xlu0 %2181
    %2185 = vset.pattern.permute.xlu0 0
    %2186 = vperm.xlu0 %2185, %v2003
    %v2187 = vpop.permute.xlu0 %2186
    %2190 = vset.pattern.permute.xlu0 0
    %2191 = vperm.xlu0 %2190, %v2004
    %v2192 = vpop.permute.xlu0 %2191
    %2195 = vset.pattern.permute.xlu0 0
    %2196 = vperm.xlu0 %2195, %v2005
    %v2197 = vpop.permute.xlu0 %2196
    %2200 = vset.pattern.permute.xlu0 0
    %2201 = vperm.xlu0 %2200, %v2006
    %v2202 = vpop.permute.xlu0 %2201
    %2205 = vset.pattern.permute.xlu0 0
    %2206 = vperm.xlu0 %2205, %v2007
    %v2207 = vpop.permute.xlu0 %2206
    %2210 = vset.pattern.permute.xlu0 0
    %2211 = vperm.xlu0 %2210, %v2008
    %v2212 = vpop.permute.xlu0 %2211
    %2215 = vset.pattern.permute.xlu0 0
    %2216 = vperm.xlu0 %2215, %v2009
    %v2217 = vpop.permute.xlu0 %2216
    %2220 = vset.pattern.permute.xlu0 0
    %2221 = vperm.xlu0 %2220, %v2010
    %v2222 = vpop.permute.xlu0 %2221
    %2225 = vset.pattern.permute.xlu0 0
    %2226 = vperm.xlu0 %2225, %v2011
    %v2227 = vpop.permute.xlu0 %2226
    %2230 = vset.pattern.permute.xlu0 0
    %2231 = vperm.xlu0 %2230, %v2012
    %v2232 = vpop.permute.xlu0 %2231
    %2235 = vset.pattern.permute.xlu0 0
    %2236 = vperm.xlu0 %2235, %v2013
    %v2237 = vpop.permute.xlu0 %2236
    %2240 = vset.pattern.permute.xlu0 0
    %2241 = vperm.xlu0 %2240, %v2014
    %v2242 = vpop.permute.xlu0 %2241
    %2245 = vset.pattern.permute.xlu0 0
    %2246 = vperm.xlu0 %2245, %v2015
    %v2247 = vpop.permute.xlu0 %2246
    %2250 = vset.pattern.permute.xlu0 0
    %2251 = vperm.xlu0 %2250, %v2016
    %v2252 = vpop.permute.xlu0 %2251
    %2255 = vset.pattern.permute.xlu0 0
    %2256 = vperm.xlu0 %2255, %v2017
    %v2257 = vpop.permute.xlu0 %2256
    %2260 = vset.pattern.permute.xlu0 0
    %2261 = vperm.xlu0 %2260, %v2018
    %v2262 = vpop.permute.xlu0 %2261
    %2265 = vset.pattern.permute.xlu0 0
    %2266 = vperm.xlu0 %2265, %v2019
    %v2267 = vpop.permute.xlu0 %2266
    %2270 = vset.pattern.permute.xlu0 0
    %2271 = vperm.xlu0 %2270, %v2020
    %v2272 = vpop.permute.xlu0 %2271
    %2275 = vset.pattern.permute.xlu0 0
    %2276 = vperm.xlu0 %2275, %v2021
    %v2277 = vpop.permute.xlu0 %2276
    %2280 = vset.pattern.permute.xlu0 0
    %2281 = vperm.xlu0 %2280, %v2022
    %v2282 = vpop.permute.xlu0 %2281
    %2285 = vset.pattern.permute.xlu0 0
    %2286 = vperm.xlu0 %2285, %v2023
    %v2287 = vpop.permute.xlu0 %2286
    %2290 = vset.pattern.permute.xlu0 0
    %2291 = vperm.xlu0 %2290, %v2024
    %v2292 = vpop.permute.xlu0 %2291
    %2295 = vset.pattern.permute.xlu0 0
    %2296 = vperm.xlu0 %2295, %v2025
    %v2297 = vpop.permute.xlu0 %2296
    %2300 = vset.pattern.permute.xlu0 0
    %2301 = vperm.xlu0 %2300, %v2026
    %v2302 = vpop.permute.xlu0 %2301
    %2305 = vset.pattern.permute.xlu0 0
    %2306 = vperm.xlu0 %2305, %v2027
    %v2307 = vpop.permute.xlu0 %2306
    %2310 = vset.pattern.permute.xlu0 0
    %2311 = vperm.xlu0 %2310, %v2028
    %v2312 = vpop.permute.xlu0 %2311
    %2315 = vset.pattern.permute.xlu0 0
    %2316 = vperm.xlu0 %2315, %v2029
    %v2317 = vpop.permute.xlu0 %2316
    %2320 = vset.pattern.permute.xlu0 0
    %2321 = vperm.xlu0 %2320, %v2030
    %v2322 = vpop.permute.xlu0 %2321
    %2325 = vset.pattern.permute.xlu0 0
    %2326 = vperm.xlu0 %2325, %v2031
    %v2327 = vpop.permute.xlu0 %2326
    %2330 = vset.pattern.permute.xlu0 0
    %2331 = vperm.xlu0 %2330, %v2032
    %v2332 = vpop.permute.xlu0 %2331
    %2335 = vset.pattern.permute.xlu0 0
    %2336 = vperm.xlu0 %2335, %v2033
    %v2337 = vpop.permute.xlu0 %2336
    %2340 = vset.pattern.permute.xlu0 0
    %2341 = vperm.xlu0 %2340, %v2034
    %v2342 = vpop.permute.xlu0 %2341
    %2345 = vset.pattern.permute.xlu0 0
    %2346 = vperm.xlu0 %2345, %v2035
    %v2347 = vpop.permute.xlu0 %2346
    %2350 = vset.pattern.permute.xlu0 0
    %2351 = vperm.xlu0 %2350, %v2036
    %v2352 = vpop.permute.xlu0 %2351
    %2355 = vset.pattern.permute.xlu0 0
    %2356 = vperm.xlu0 %2355, %v2037
    %v2357 = vpop.permute.xlu0 %2356
    %2360 = vset.pattern.permute.xlu0 0
    %2361 = vperm.xlu0 %2360, %v2038
    %v2362 = vpop.permute.xlu0 %2361
    %2365 = vset.pattern.permute.xlu0 0
    %2366 = vperm.xlu0 %2365, %v2039
    %v2367 = vpop.permute.xlu0 %2366
    %2370 = vset.pattern.permute.xlu0 0
    %2371 = vperm.xlu0 %2370, %v2040
    %v2372 = vpop.permute.xlu0 %2371
    %2375 = vset.pattern.permute.xlu0 0
    %2376 = vperm.xlu0 %2375, %v2041
    %v2377 = vpop.permute.xlu0 %2376
    %2380 = vset.pattern.permute.xlu0 0
    %2381 = vperm.xlu0 %2380, %v2042
    %v2382 = vpop.permute.xlu0 %2381
    %2385 = vset.pattern.permute.xlu0 0
    %2386 = vperm.xlu0 %2385, %v2043
    %v2387 = vpop.permute.xlu0 %2386
    %2390 = vset.pattern.permute.xlu0 0
    %2391 = vperm.xlu0 %2390, %v2044
    %v2392 = vpop.permute.xlu0 %2391
    %2395 = vset.pattern.permute.xlu0 0
    %2396 = vperm.xlu0 %2395, %v2045
    %v2397 = vpop.permute.xlu0 %2396
    %2400 = vset.pattern.permute.xlu0 0
    %2401 = vperm.xlu0 %2400, %v2046
    %v2402 = vpop.permute.xlu0 %2401
    %2405 = vset.pattern.permute.xlu0 0
    %2406 = vperm.xlu0 %2405, %v2047
    %v2407 = vpop.permute.xlu0 %2406
    %2410 = vset.pattern.permute.xlu0 0
    %2411 = vperm.xlu0 %2410, %v2048
    %v2412 = vpop.permute.xlu0 %2411
    %2415 = vset.pattern.permute.xlu0 0
    %2416 = vperm.xlu0 %2415, %v2049
    %v2417 = vpop.permute.xlu0 %2416
    %2420 = vset.pattern.permute.xlu0 0
    %2421 = vperm.xlu0 %2420, %v2050
    %v2422 = vpop.permute.xlu0 %2421
    %2425 = vset.pattern.permute.xlu0 0
    %2426 = vperm.xlu0 %2425, %v2051
    %v2427 = vpop.permute.xlu0 %2426
    %2430 = vset.pattern.permute.xlu0 0
    %2431 = vperm.xlu0 %2430, %v2052
    %v2432 = vpop.permute.xlu0 %2431
    %2435 = vset.pattern.permute.xlu0 0
    %2436 = vperm.xlu0 %2435, %v2053
    %v2437 = vpop.permute.xlu0 %2436
    %2440 = vset.pattern.permute.xlu0 0
    %2441 = vperm.xlu0 %2440, %v2054
    %v2442 = vpop.permute.xlu0 %2441
    %2445 = vset.pattern.permute.xlu0 0
    %2446 = vperm.xlu0 %2445, %v2055
    %v2447 = vpop.permute.xlu0 %2446
    %2450 = vset.pattern.permute.xlu0 0
    %2451 = vperm.xlu0 %2450, %v2056
    %v2452 = vpop.permute.xlu0 %2451
    %2455 = vset.pattern.permute.xlu0 0
    %2456 = vperm.xlu0 %2455, %v2057
    %v2457 = vpop.permute.xlu0 %2456
    %2460 = vset.pattern.permute.xlu0 0
    %2461 = vperm.xlu0 %2460, %v2058
    %v2462 = vpop.permute.xlu0 %2461
    %v2464 = vmul.f32 %v1977, %v2062
    %v2465 = vmul.f32 %v1976, %v2067
    %v2466 = vmul.f32 %v1975, %v2072
    %v2467 = vmul.f32 %v1974, %v2077
    %v2468 = vmul.f32 %v1973, %v2082
    %v2469 = vmul.f32 %v1972, %v2087
    %v2470 = vmul.f32 %v1971, %v2092
    %v2471 = vmul.f32 %v1970, %v2097
    %v2472 = vmul.f32 %v1969, %v2102
    %v2473 = vmul.f32 %v1968, %v2107
    %v2474 = vmul.f32 %v1967, %v2112
    %v2475 = vmul.f32 %v1966, %v2117
    %v2476 = vmul.f32 %v1965, %v2122
    %v2477 = vmul.f32 %v1964, %v2127
    %v2478 = vmul.f32 %v1963, %v2132
    %v2479 = vmul.f32 %v1962, %v2137
    %v2480 = vmul.f32 %v1961, %v2142
    %v2481 = vmul.f32 %v1960, %v2147
    %v2482 = vmul.f32 %v1959, %v2152
    %v2483 = vmul.f32 %v1958, %v2157
    %v2484 = vmul.f32 %v1957, %v2162
    %v2485 = vmul.f32 %v1956, %v2167
    %v2486 = vmul.f32 %v1955, %v2172
    %v2487 = vmul.f32 %v1954, %v2177
    %v2488 = vmul.f32 %v1953, %v2182
    %v2489 = vmul.f32 %v1952, %v2187
    %v2490 = vmul.f32 %v1951, %v2192
    %v2491 = vmul.f32 %v1950, %v2197
    %v2492 = vmul.f32 %v1949, %v2202
    %v2493 = vmul.f32 %v1948, %v2207
    %v2494 = vmul.f32 %v1947, %v2212
    %v2495 = vmul.f32 %v1946, %v2217
    %v2496 = vmul.f32 %v1945, %v2222
    %v2497 = vmul.f32 %v1944, %v2227
    %v2498 = vmul.f32 %v1943, %v2232
    %v2499 = vmul.f32 %v1942, %v2237
    %v2500 = vmul.f32 %v1941, %v2242
    %v2501 = vmul.f32 %v1940, %v2247
    %v2502 = vmul.f32 %v1939, %v2252
    %v2503 = vmul.f32 %v1938, %v2257
    %v2504 = vmul.f32 %v1937, %v2262
    %v2505 = vmul.f32 %v1936, %v2267
    %v2506 = vmul.f32 %v1935, %v2272
    %v2507 = vmul.f32 %v1934, %v2277
    %v2508 = vmul.f32 %v1933, %v2282
    %v2509 = vmul.f32 %v1932, %v2287
    %v2510 = vmul.f32 %v1931, %v2292
    %v2511 = vmul.f32 %v1930, %v2297
    %v2512 = vmul.f32 %v1929, %v2302
    %v2513 = vmul.f32 %v1928, %v2307
    %v2514 = vmul.f32 %v1927, %v2312
    %v2515 = vmul.f32 %v1926, %v2317
    %v2516 = vmul.f32 %v1925, %v2322
    %v2517 = vmul.f32 %v1924, %v2327
    %v2518 = vmul.f32 %v1923, %v2332
    %v2519 = vmul.f32 %v1922, %v2337
    %v2520 = vmul.f32 %v1921, %v2342
    %v2521 = vmul.f32 %v1920, %v2347
    %v2522 = vmul.f32 %v1919, %v2352
    %v2523 = vmul.f32 %v1918, %v2357
    %v2524 = vmul.f32 %v1917, %v2362
    %v2525 = vmul.f32 %v1916, %v2367
    %v2526 = vmul.f32 %v1915, %v2372
    %v2527 = vmul.f32 %v1914, %v2377
    %v2528 = vmul.f32 %v1913, %v2382
    %v2529 = vmul.f32 %v1912, %v2387
    %v2530 = vmul.f32 %v1911, %v2392
    %v2531 = vmul.f32 %v1910, %v2397
    %v2532 = vmul.f32 %v1909, %v2402
    %v2533 = vmul.f32 %v1908, %v2407
    %v2534 = vmul.f32 %v1907, %v2412
    %v2535 = vmul.f32 %v1906, %v2417
    %v2536 = vmul.f32 %v1905, %v2422
    %v2537 = vmul.f32 %v1904, %v2427
    %v2538 = vmul.f32 %v1903, %v2432
    %v2539 = vmul.f32 %v1902, %v2437
    %v2540 = vmul.f32 %v1901, %v2442
    %v2541 = vmul.f32 %v1900, %v2447
    %v2542 = vmul.f32 %v1899, %v2452
    %v2543 = vmul.f32 %v1898, %v2457
    %v2544 = vmul.f32 %v1897, %v2462
    %v2545 = vadd.f32 %v2464, %v935
    %v2546 = vadd.f32 %v2465, %v940
    %v2547 = vadd.f32 %v2466, %v945
    %v2548 = vadd.f32 %v2467, %v950
    %v2549 = vadd.f32 %v2468, %v955
    %v2550 = vadd.f32 %v2469, %v960
    %v2551 = vadd.f32 %v2470, %v965
    %v2552 = vadd.f32 %v2471, %v970
    %v2553 = vadd.f32 %v2472, %v975
    %v2554 = vadd.f32 %v2473, %v980
    %v2555 = vadd.f32 %v2474, %v985
    %v2556 = vadd.f32 %v2475, %v990
    %v2557 = vadd.f32 %v2476, %v995
    %v2558 = vadd.f32 %v2477, %v1000
    %v2559 = vadd.f32 %v2478, %v1005
    %v2560 = vadd.f32 %v2479, %v1010
    %v2561 = vadd.f32 %v2480, %v1015
    %v2562 = vadd.f32 %v2481, %v1020
    %v2563 = vadd.f32 %v2482, %v1025
    %v2564 = vadd.f32 %v2483, %v1030
    %v2565 = vadd.f32 %v2484, %v1035
    %v2566 = vadd.f32 %v2485, %v1040
    %v2567 = vadd.f32 %v2486, %v1045
    %v2568 = vadd.f32 %v2487, %v1050
    %v2569 = vadd.f32 %v2488, %v1055
    %v2570 = vadd.f32 %v2489, %v1060
    %v2571 = vadd.f32 %v2490, %v1065
    %v2572 = vadd.f32 %v2491, %v1070
    %v2573 = vadd.f32 %v2492, %v1075
    %v2574 = vadd.f32 %v2493, %v1080
    %v2575 = vadd.f32 %v2494, %v1085
    %v2576 = vadd.f32 %v2495, %v1090
    %v2577 = vadd.f32 %v2496, %v1095
    %v2578 = vadd.f32 %v2497, %v1100
    %v2579 = vadd.f32 %v2498, %v1105
    %v2580 = vadd.f32 %v2499, %v1110
    %v2581 = vadd.f32 %v2500, %v1115
    %v2582 = vadd.f32 %v2501, %v1120
    %v2583 = vadd.f32 %v2502, %v1125
    %v2584 = vadd.f32 %v2503, %v1130
    %v2585 = vadd.f32 %v2504, %v1135
    %v2586 = vadd.f32 %v2505, %v1140
    %v2587 = vadd.f32 %v2506, %v1145
    %v2588 = vadd.f32 %v2507, %v1150
    %v2589 = vadd.f32 %v2508, %v1155
    %v2590 = vadd.f32 %v2509, %v1160
    %v2591 = vadd.f32 %v2510, %v1165
    %v2592 = vadd.f32 %v2511, %v1170
    %v2593 = vadd.f32 %v2512, %v1175
    %v2594 = vadd.f32 %v2513, %v1180
    %v2595 = vadd.f32 %v2514, %v1185
    %v2596 = vadd.f32 %v2515, %v1190
    %v2597 = vadd.f32 %v2516, %v1195
    %v2598 = vadd.f32 %v2517, %v1200
    %v2599 = vadd.f32 %v2518, %v1205
    %v2600 = vadd.f32 %v2519, %v1210
    %v2601 = vadd.f32 %v2520, %v1215
    %v2602 = vadd.f32 %v2521, %v1220
    %v2603 = vadd.f32 %v2522, %v1225
    %v2604 = vadd.f32 %v2523, %v1230
    %v2605 = vadd.f32 %v2524, %v1235
    %v2606 = vadd.f32 %v2525, %v1240
    %v2607 = vadd.f32 %v2526, %v1245
    %v2608 = vadd.f32 %v2527, %v1250
    %v2609 = vadd.f32 %v2528, %v1255
    %v2610 = vadd.f32 %v2529, %v1260
    %v2611 = vadd.f32 %v2530, %v1265
    %v2612 = vadd.f32 %v2531, %v1270
    %v2613 = vadd.f32 %v2532, %v1275
    %v2614 = vadd.f32 %v2533, %v1280
    %v2615 = vadd.f32 %v2534, %v1285
    %v2616 = vadd.f32 %v2535, %v1290
    %v2617 = vadd.f32 %v2536, %v1295
    %v2618 = vadd.f32 %v2537, %v1300
    %v2619 = vadd.f32 %v2538, %v1305
    %v2620 = vadd.f32 %v2539, %v1310
    %v2621 = vadd.f32 %v2540, %v1315
    %v2622 = vadd.f32 %v2541, %v1320
    %v2623 = vadd.f32 %v2542, %v1325
    %v2624 = vadd.f32 %v2543, %v1330
    %v2625 = vadd.f32 %v2544, %v1335
    %v2626 = vrot.slane %v1410, 1
    %v2627 = vrot.slane %v1415, 1
    %v2628 = vrot.slane %v1420, 1
    %v2629 = vrot.slane %v1425, 1
    %v2630 = vrot.slane %v1430, 1
    %v2631 = vrot.slane %v1435, 1
    %v2632 = vrot.slane %v1440, 1
    %v2633 = vrot.slane %v1445, 1
    %v2634 = vrot.slane %v1450, 1
    %v2635 = vrot.slane %v1455, 1
    %v2636 = vrot.slane %v1460, 1
    %v2637 = vrot.slane %v1465, 1
    %v2638 = vrot.slane %v1470, 1
    %v2639 = vrot.slane %v1475, 1
    %v2640 = vrot.slane %v1480, 1
    %v2641 = vrot.slane %v1485, 1
    %v2642 = vrot.slane %v1490, 1
    %v2643 = vrot.slane %v1495, 1
    %v2644 = vrot.slane %v1500, 1
    %v2645 = vrot.slane %v1505, 1
    %v2646 = vrot.slane %v1510, 1
    %v2647 = vrot.slane %v1515, 1
    %v2648 = vrot.slane %v1520, 1
    %v2649 = vrot.slane %v1525, 1
    %v2650 = vrot.slane %v1530, 1
    %v2651 = vrot.slane %v1535, 1
    %v2652 = vrot.slane %v1540, 1
    %v2653 = vrot.slane %v1545, 1
    %v2654 = vrot.slane %v1550, 1
    %v2655 = vrot.slane %v1555, 1
    %v2656 = vrot.slane %v1560, 1
    %v2657 = vrot.slane %v1565, 1
    %v2658 = vrot.slane %v1570, 1
    %v2659 = vrot.slane %v1575, 1
    %v2660 = vrot.slane %v1580, 1
    %v2661 = vrot.slane %v1585, 1
    %v2662 = vrot.slane %v1590, 1
    %v2663 = vrot.slane %v1595, 1
    %v2664 = vrot.slane %v1600, 1
    %v2665 = vrot.slane %v1605, 1
    %v2666 = vrot.slane %v1610, 1
    %v2667 = vrot.slane %v1615, 1
    %v2668 = vrot.slane %v1620, 1
    %v2669 = vrot.slane %v1625, 1
    %v2670 = vrot.slane %v1630, 1
    %v2671 = vrot.slane %v1635, 1
    %v2672 = vrot.slane %v1640, 1
    %v2673 = vrot.slane %v1645, 1
    %v2674 = vrot.slane %v1650, 1
    %v2675 = vrot.slane %v1655, 1
    %v2676 = vrot.slane %v1660, 1
    %v2677 = vrot.slane %v1665, 1
    %v2678 = vrot.slane %v1670, 1
    %v2679 = vrot.slane %v1675, 1
    %v2680 = vrot.slane %v1680, 1
    %v2681 = vrot.slane %v1685, 1
    %v2682 = vrot.slane %v1690, 1
    %v2683 = vrot.slane %v1695, 1
    %v2684 = vrot.slane %v1700, 1
    %v2685 = vrot.slane %v1705, 1
    %v2686 = vrot.slane %v1710, 1
    %v2687 = vrot.slane %v1715, 1
    %v2688 = vrot.slane %v1720, 1
    %v2689 = vrot.slane %v1725, 1
    %v2690 = vrot.slane %v1730, 1
    %v2691 = vrot.slane %v1735, 1
    %v2692 = vrot.slane %v1740, 1
    %v2693 = vrot.slane %v1745, 1
    %v2694 = vrot.slane %v1750, 1
    %v2695 = vrot.slane %v1755, 1
    %v2696 = vrot.slane %v1760, 1
    %v2697 = vrot.slane %v1765, 1
    %v2698 = vrot.slane %v1770, 1
    %v2699 = vrot.slane %v1775, 1
    %v2700 = vrot.slane %v1780, 1
    %v2701 = vrot.slane %v1785, 1
    %v2702 = vrot.slane %v1790, 1
    %v2703 = vrot.slane %v1795, 1
    %v2704 = vrot.slane %v1800, 1
    %v2705 = vrot.slane %v1805, 1
    %v2706 = vrot.slane %v1810, 1
    %vm2707 = vcmp.lt.s32.totalorder %v1895, 7
    %v2708 = vsel %vm2707, %v2705, %v2706
    %v2709 = vsel %vm2707, %v2704, %v2705
    %v2710 = vsel %vm2707, %v2703, %v2704
    %v2711 = vsel %vm2707, %v2702, %v2703
    %v2712 = vsel %vm2707, %v2701, %v2702
    %v2713 = vsel %vm2707, %v2700, %v2701
    %v2714 = vsel %vm2707, %v2699, %v2700
    %v2715 = vsel %vm2707, %v2698, %v2699
    %v2716 = vsel %vm2707, %v2697, %v2698
    %v2717 = vsel %vm2707, %v2696, %v2697
    %v2718 = vsel %vm2707, %v2695, %v2696
    %v2719 = vsel %vm2707, %v2694, %v2695
    %v2720 = vsel %vm2707, %v2693, %v2694
    %v2721 = vsel %vm2707, %v2692, %v2693
    %v2722 = vsel %vm2707, %v2691, %v2692
    %v2723 = vsel %vm2707, %v2690, %v2691
    %v2724 = vsel %vm2707, %v2689, %v2690
    %v2725 = vsel %vm2707, %v2688, %v2689
    %v2726 = vsel %vm2707, %v2687, %v2688
    %v2727 = vsel %vm2707, %v2686, %v2687
    %v2728 = vsel %vm2707, %v2685, %v2686
    %v2729 = vsel %vm2707, %v2684, %v2685
    %v2730 = vsel %vm2707, %v2683, %v2684
    %v2731 = vsel %vm2707, %v2682, %v2683
    %v2732 = vsel %vm2707, %v2681, %v2682
    %v2733 = vsel %vm2707, %v2680, %v2681
    %v2734 = vsel %vm2707, %v2679, %v2680
    %v2735 = vsel %vm2707, %v2678, %v2679
    %v2736 = vsel %vm2707, %v2677, %v2678
    %v2737 = vsel %vm2707, %v2676, %v2677
    %v2738 = vsel %vm2707, %v2675, %v2676
    %v2739 = vsel %vm2707, %v2674, %v2675
    %v2740 = vsel %vm2707, %v2673, %v2674
    %v2741 = vsel %vm2707, %v2672, %v2673
    %v2742 = vsel %vm2707, %v2671, %v2672
    %v2743 = vsel %vm2707, %v2670, %v2671
    %v2744 = vsel %vm2707, %v2669, %v2670
    %v2745 = vsel %vm2707, %v2668, %v2669
    %v2746 = vsel %vm2707, %v2667, %v2668
    %v2747 = vsel %vm2707, %v2666, %v2667
    %v2748 = vsel %vm2707, %v2665, %v2666
    %v2749 = vsel %vm2707, %v2664, %v2665
    %v2750 = vsel %vm2707, %v2663, %v2664
    %v2751 = vsel %vm2707, %v2662, %v2663
    %v2752 = vsel %vm2707, %v2661, %v2662
    %v2753 = vsel %vm2707, %v2660, %v2661
    %v2754 = vsel %vm2707, %v2659, %v2660
    %v2755 = vsel %vm2707, %v2658, %v2659
    %v2756 = vsel %vm2707, %v2657, %v2658
    %v2757 = vsel %vm2707, %v2656, %v2657
    %v2758 = vsel %vm2707, %v2655, %v2656
    %v2759 = vsel %vm2707, %v2654, %v2655
    %v2760 = vsel %vm2707, %v2653, %v2654
    %v2761 = vsel %vm2707, %v2652, %v2653
    %v2762 = vsel %vm2707, %v2651, %v2652
    %v2763 = vsel %vm2707, %v2650, %v2651
    %v2764 = vsel %vm2707, %v2649, %v2650
    %v2765 = vsel %vm2707, %v2648, %v2649
    %v2766 = vsel %vm2707, %v2647, %v2648
    %v2767 = vsel %vm2707, %v2646, %v2647
    %v2768 = vsel %vm2707, %v2645, %v2646
    %v2769 = vsel %vm2707, %v2644, %v2645
    %v2770 = vsel %vm2707, %v2643, %v2644
    %v2771 = vsel %vm2707, %v2642, %v2643
    %v2772 = vsel %vm2707, %v2641, %v2642
    %v2773 = vsel %vm2707, %v2640, %v2641
    %v2774 = vsel %vm2707, %v2639, %v2640
    %v2775 = vsel %vm2707, %v2638, %v2639
    %v2776 = vsel %vm2707, %v2637, %v2638
    %v2777 = vsel %vm2707, %v2636, %v2637
    %v2778 = vsel %vm2707, %v2635, %v2636
    %v2779 = vsel %vm2707, %v2634, %v2635
    %v2780 = vsel %vm2707, %v2633, %v2634
    %v2781 = vsel %vm2707, %v2632, %v2633
    %v2782 = vsel %vm2707, %v2631, %v2632
    %v2783 = vsel %vm2707, %v2630, %v2631
    %v2784 = vsel %vm2707, %v2629, %v2630
    %v2785 = vsel %vm2707, %v2628, %v2629
    %v2786 = vsel %vm2707, %v2627, %v2628
    %v2787 = vsel %vm2707, %v2626, %v2627
    %v2788 = vsel %vm2707, %v2706, %v2626
    %v2789 = vld [vmem:[%s4] sm:$0xff]
    %v2790 = vld [vmem:[%s4 + $0x8] sm:$0xff]
    %v2791 = vld [vmem:[%s4 + $0x10] sm:$0xff]
    %v2792 = vld [vmem:[%s4 + $0x18] sm:$0xff]
    %v2793 = vld [vmem:[%s4 + $0x20] sm:$0xff]
    %v2794 = vld [vmem:[%s4 + $0x28] sm:$0xff]
    %v2795 = vld [vmem:[%s4 + $0x30] sm:$0xff]
    %v2796 = vld [vmem:[%s4 + $0x38] sm:$0xff]
    %v2797 = vld [vmem:[%s4 + $0x40] sm:$0xff]
    %v2798 = vld [vmem:[%s4 + $0x48] sm:$0xff]
    %v2799 = vld [vmem:[%s4 + $0x50] sm:$0xff]
    %v2800 = vld [vmem:[%s4 + $0x58] sm:$0xff]
    %v2801 = vld [vmem:[%s4 + $0x60] sm:$0xff]
    %v2802 = vld [vmem:[%s4 + $0x68] sm:$0xff]
    %v2803 = vld [vmem:[%s4 + $0x70] sm:$0xff]
    %v2804 = vld [vmem:[%s4 + $0x78] sm:$0xff]
    %v2805 = vld [vmem:[%s4 + $0x80] sm:$0xff]
    %v2806 = vld [vmem:[%s4 + $0x88] sm:$0xff]
    %v2807 = vld [vmem:[%s4 + $0x90] sm:$0xff]
    %v2808 = vld [vmem:[%s4 + $0x98] sm:$0xff]
    %v2809 = vld [vmem:[%s4 + $0xa0] sm:$0xff]
    %v2810 = vld [vmem:[%s4 + $0xa8] sm:$0xff]
    %v2811 = vld [vmem:[%s4 + $0xb0] sm:$0xff]
    %v2812 = vld [vmem:[%s4 + $0xb8] sm:$0xff]
    %v2813 = vld [vmem:[%s4 + $0xc0] sm:$0xff]
    %v2814 = vld [vmem:[%s4 + $0xc8] sm:$0xff]
    %v2815 = vld [vmem:[%s4 + $0xd0] sm:$0xff]
    %v2816 = vld [vmem:[%s4 + $0xd8] sm:$0xff]
    %v2817 = vld [vmem:[%s4 + $0xe0] sm:$0xff]
    %v2818 = vld [vmem:[%s4 + $0xe8] sm:$0xff]
    %v2819 = vld [vmem:[%s4 + $0xf0] sm:$0xff]
    %v2820 = vld [vmem:[%s4 + $0xf8] sm:$0xff]
    %v2821 = vld [vmem:[%s4 + $0x100] sm:$0xff]
    %v2822 = vld [vmem:[%s4 + $0x108] sm:$0xff]
    %v2823 = vld [vmem:[%s4 + $0x110] sm:$0xff]
    %v2824 = vld [vmem:[%s4 + $0x118] sm:$0xff]
    %v2825 = vld [vmem:[%s4 + $0x120] sm:$0xff]
    %v2826 = vld [vmem:[%s4 + $0x128] sm:$0xff]
    %v2827 = vld [vmem:[%s4 + $0x130] sm:$0xff]
    %v2828 = vld [vmem:[%s4 + $0x138] sm:$0xff]
    %v2829 = vld [vmem:[%s4 + $0x140] sm:$0xff]
    %v2830 = vld [vmem:[%s4 + $0x148] sm:$0xff]
    %v2831 = vld [vmem:[%s4 + $0x150] sm:$0xff]
    %v2832 = vld [vmem:[%s4 + $0x158] sm:$0xff]
    %v2833 = vld [vmem:[%s4 + $0x160] sm:$0xff]
    %v2834 = vld [vmem:[%s4 + $0x168] sm:$0xff]
    %v2835 = vld [vmem:[%s4 + $0x170] sm:$0xff]
    %v2836 = vld [vmem:[%s4 + $0x178] sm:$0xff]
    %v2837 = vld [vmem:[%s4 + $0x180] sm:$0xff]
    %v2838 = vld [vmem:[%s4 + $0x188] sm:$0xff]
    %v2839 = vld [vmem:[%s4 + $0x190] sm:$0xff]
    %v2840 = vld [vmem:[%s4 + $0x198] sm:$0xff]
    %v2841 = vld [vmem:[%s4 + $0x1a0] sm:$0xff]
    %v2842 = vld [vmem:[%s4 + $0x1a8] sm:$0xff]
    %v2843 = vld [vmem:[%s4 + $0x1b0] sm:$0xff]
    %v2844 = vld [vmem:[%s4 + $0x1b8] sm:$0xff]
    %v2845 = vld [vmem:[%s4 + $0x1c0] sm:$0xff]
    %v2846 = vld [vmem:[%s4 + $0x1c8] sm:$0xff]
    %v2847 = vld [vmem:[%s4 + $0x1d0] sm:$0xff]
    %v2848 = vld [vmem:[%s4 + $0x1d8] sm:$0xff]
    %v2849 = vld [vmem:[%s4 + $0x1e0] sm:$0xff]
    %v2850 = vld [vmem:[%s4 + $0x1e8] sm:$0xff]
    %v2851 = vld [vmem:[%s4 + $0x1f0] sm:$0xff]
    %v2852 = vld [vmem:[%s4 + $0x1f8] sm:$0xff]
    %v2853 = vld [vmem:[%s4 + $0x200] sm:$0xff]
    %v2854 = vld [vmem:[%s4 + $0x208] sm:$0xff]
    %v2855 = vld [vmem:[%s4 + $0x210] sm:$0xff]
    %v2856 = vld [vmem:[%s4 + $0x218] sm:$0xff]
    %v2857 = vld [vmem:[%s4 + $0x220] sm:$0xff]
    %v2858 = vld [vmem:[%s4 + $0x228] sm:$0xff]
    %v2859 = vld [vmem:[%s4 + $0x230] sm:$0xff]
    %v2860 = vld [vmem:[%s4 + $0x238] sm:$0xff]
    %v2861 = vld [vmem:[%s4 + $0x240] sm:$0xff]
    %v2862 = vld [vmem:[%s4 + $0x248] sm:$0xff]
    %v2863 = vld [vmem:[%s4 + $0x250] sm:$0xff]
    %v2864 = vld [vmem:[%s4 + $0x258] sm:$0xff]
    %v2865 = vld [vmem:[%s4 + $0x260] sm:$0xff]
    %v2866 = vld [vmem:[%s4 + $0x268] sm:$0xff]
    %v2867 = vld [vmem:[%s4 + $0x270] sm:$0xff]
    %v2868 = vld [vmem:[%s4 + $0x278] sm:$0xff]
    %v2869 = vld [vmem:[%s4 + $0x280] sm:$0xff]
    %2871 = vset.pattern.permute.xlu0 0
    %2872 = vperm.xlu0 %2871, %v2789
    %v2873 = vpop.permute.xlu0 %2872
    %2876 = vset.pattern.permute.xlu0 0
    %2877 = vperm.xlu0 %2876, %v2790
    %v2878 = vpop.permute.xlu0 %2877
    %2881 = vset.pattern.permute.xlu0 0
    %2882 = vperm.xlu0 %2881, %v2791
    %v2883 = vpop.permute.xlu0 %2882
    %2886 = vset.pattern.permute.xlu0 0
    %2887 = vperm.xlu0 %2886, %v2792
    %v2888 = vpop.permute.xlu0 %2887
    %2891 = vset.pattern.permute.xlu0 0
    %2892 = vperm.xlu0 %2891, %v2793
    %v2893 = vpop.permute.xlu0 %2892
    %2896 = vset.pattern.permute.xlu0 0
    %2897 = vperm.xlu0 %2896, %v2794
    %v2898 = vpop.permute.xlu0 %2897
    %2901 = vset.pattern.permute.xlu0 0
    %2902 = vperm.xlu0 %2901, %v2795
    %v2903 = vpop.permute.xlu0 %2902
    %2906 = vset.pattern.permute.xlu0 0
    %2907 = vperm.xlu0 %2906, %v2796
    %v2908 = vpop.permute.xlu0 %2907
    %2911 = vset.pattern.permute.xlu0 0
    %2912 = vperm.xlu0 %2911, %v2797
    %v2913 = vpop.permute.xlu0 %2912
    %2916 = vset.pattern.permute.xlu0 0
    %2917 = vperm.xlu0 %2916, %v2798
    %v2918 = vpop.permute.xlu0 %2917
    %2921 = vset.pattern.permute.xlu0 0
    %2922 = vperm.xlu0 %2921, %v2799
    %v2923 = vpop.permute.xlu0 %2922
    %2926 = vset.pattern.permute.xlu0 0
    %2927 = vperm.xlu0 %2926, %v2800
    %v2928 = vpop.permute.xlu0 %2927
    %2931 = vset.pattern.permute.xlu0 0
    %2932 = vperm.xlu0 %2931, %v2801
    %v2933 = vpop.permute.xlu0 %2932
    %2936 = vset.pattern.permute.xlu0 0
    %2937 = vperm.xlu0 %2936, %v2802
    %v2938 = vpop.permute.xlu0 %2937
    %2941 = vset.pattern.permute.xlu0 0
    %2942 = vperm.xlu0 %2941, %v2803
    %v2943 = vpop.permute.xlu0 %2942
    %2946 = vset.pattern.permute.xlu0 0
    %2947 = vperm.xlu0 %2946, %v2804
    %v2948 = vpop.permute.xlu0 %2947
    %2951 = vset.pattern.permute.xlu0 0
    %2952 = vperm.xlu0 %2951, %v2805
    %v2953 = vpop.permute.xlu0 %2952
    %2956 = vset.pattern.permute.xlu0 0
    %2957 = vperm.xlu0 %2956, %v2806
    %v2958 = vpop.permute.xlu0 %2957
    %2961 = vset.pattern.permute.xlu0 0
    %2962 = vperm.xlu0 %2961, %v2807
    %v2963 = vpop.permute.xlu0 %2962
    %2966 = vset.pattern.permute.xlu0 0
    %2967 = vperm.xlu0 %2966, %v2808
    %v2968 = vpop.permute.xlu0 %2967
    %2971 = vset.pattern.permute.xlu0 0
    %2972 = vperm.xlu0 %2971, %v2809
    %v2973 = vpop.permute.xlu0 %2972
    %2976 = vset.pattern.permute.xlu0 0
    %2977 = vperm.xlu0 %2976, %v2810
    %v2978 = vpop.permute.xlu0 %2977
    %2981 = vset.pattern.permute.xlu0 0
    %2982 = vperm.xlu0 %2981, %v2811
    %v2983 = vpop.permute.xlu0 %2982
    %2986 = vset.pattern.permute.xlu0 0
    %2987 = vperm.xlu0 %2986, %v2812
    %v2988 = vpop.permute.xlu0 %2987
    %2991 = vset.pattern.permute.xlu0 0
    %2992 = vperm.xlu0 %2991, %v2813
    %v2993 = vpop.permute.xlu0 %2992
    %2996 = vset.pattern.permute.xlu0 0
    %2997 = vperm.xlu0 %2996, %v2814
    %v2998 = vpop.permute.xlu0 %2997
    %3001 = vset.pattern.permute.xlu0 0
    %3002 = vperm.xlu0 %3001, %v2815
    %v3003 = vpop.permute.xlu0 %3002
    %3006 = vset.pattern.permute.xlu0 0
    %3007 = vperm.xlu0 %3006, %v2816
    %v3008 = vpop.permute.xlu0 %3007
    %3011 = vset.pattern.permute.xlu0 0
    %3012 = vperm.xlu0 %3011, %v2817
    %v3013 = vpop.permute.xlu0 %3012
    %3016 = vset.pattern.permute.xlu0 0
    %3017 = vperm.xlu0 %3016, %v2818
    %v3018 = vpop.permute.xlu0 %3017
    %3021 = vset.pattern.permute.xlu0 0
    %3022 = vperm.xlu0 %3021, %v2819
    %v3023 = vpop.permute.xlu0 %3022
    %3026 = vset.pattern.permute.xlu0 0
    %3027 = vperm.xlu0 %3026, %v2820
    %v3028 = vpop.permute.xlu0 %3027
    %3031 = vset.pattern.permute.xlu0 0
    %3032 = vperm.xlu0 %3031, %v2821
    %v3033 = vpop.permute.xlu0 %3032
    %3036 = vset.pattern.permute.xlu0 0
    %3037 = vperm.xlu0 %3036, %v2822
    %v3038 = vpop.permute.xlu0 %3037
    %3041 = vset.pattern.permute.xlu0 0
    %3042 = vperm.xlu0 %3041, %v2823
    %v3043 = vpop.permute.xlu0 %3042
    %3046 = vset.pattern.permute.xlu0 0
    %3047 = vperm.xlu0 %3046, %v2824
    %v3048 = vpop.permute.xlu0 %3047
    %3051 = vset.pattern.permute.xlu0 0
    %3052 = vperm.xlu0 %3051, %v2825
    %v3053 = vpop.permute.xlu0 %3052
    %3056 = vset.pattern.permute.xlu0 0
    %3057 = vperm.xlu0 %3056, %v2826
    %v3058 = vpop.permute.xlu0 %3057
    %3061 = vset.pattern.permute.xlu0 0
    %3062 = vperm.xlu0 %3061, %v2827
    %v3063 = vpop.permute.xlu0 %3062
    %3066 = vset.pattern.permute.xlu0 0
    %3067 = vperm.xlu0 %3066, %v2828
    %v3068 = vpop.permute.xlu0 %3067
    %3071 = vset.pattern.permute.xlu0 0
    %3072 = vperm.xlu0 %3071, %v2829
    %v3073 = vpop.permute.xlu0 %3072
    %3076 = vset.pattern.permute.xlu0 0
    %3077 = vperm.xlu0 %3076, %v2830
    %v3078 = vpop.permute.xlu0 %3077
    %3081 = vset.pattern.permute.xlu0 0
    %3082 = vperm.xlu0 %3081, %v2831
    %v3083 = vpop.permute.xlu0 %3082
    %3086 = vset.pattern.permute.xlu0 0
    %3087 = vperm.xlu0 %3086, %v2832
    %v3088 = vpop.permute.xlu0 %3087
    %3091 = vset.pattern.permute.xlu0 0
    %3092 = vperm.xlu0 %3091, %v2833
    %v3093 = vpop.permute.xlu0 %3092
    %3096 = vset.pattern.permute.xlu0 0
    %3097 = vperm.xlu0 %3096, %v2834
    %v3098 = vpop.permute.xlu0 %3097
    %3101 = vset.pattern.permute.xlu0 0
    %3102 = vperm.xlu0 %3101, %v2835
    %v3103 = vpop.permute.xlu0 %3102
    %3106 = vset.pattern.permute.xlu0 0
    %3107 = vperm.xlu0 %3106, %v2836
    %v3108 = vpop.permute.xlu0 %3107
    %3111 = vset.pattern.permute.xlu0 0
    %3112 = vperm.xlu0 %3111, %v2837
    %v3113 = vpop.permute.xlu0 %3112
    %3116 = vset.pattern.permute.xlu0 0
    %3117 = vperm.xlu0 %3116, %v2838
    %v3118 = vpop.permute.xlu0 %3117
    %3121 = vset.pattern.permute.xlu0 0
    %3122 = vperm.xlu0 %3121, %v2839
    %v3123 = vpop.permute.xlu0 %3122
    %3126 = vset.pattern.permute.xlu0 0
    %3127 = vperm.xlu0 %3126, %v2840
    %v3128 = vpop.permute.xlu0 %3127
    %3131 = vset.pattern.permute.xlu0 0
    %3132 = vperm.xlu0 %3131, %v2841
    %v3133 = vpop.permute.xlu0 %3132
    %3136 = vset.pattern.permute.xlu0 0
    %3137 = vperm.xlu0 %3136, %v2842
    %v3138 = vpop.permute.xlu0 %3137
    %3141 = vset.pattern.permute.xlu0 0
    %3142 = vperm.xlu0 %3141, %v2843
    %v3143 = vpop.permute.xlu0 %3142
    %3146 = vset.pattern.permute.xlu0 0
    %3147 = vperm.xlu0 %3146, %v2844
    %v3148 = vpop.permute.xlu0 %3147
    %3151 = vset.pattern.permute.xlu0 0
    %3152 = vperm.xlu0 %3151, %v2845
    %v3153 = vpop.permute.xlu0 %3152
    %3156 = vset.pattern.permute.xlu0 0
    %3157 = vperm.xlu0 %3156, %v2846
    %v3158 = vpop.permute.xlu0 %3157
    %3161 = vset.pattern.permute.xlu0 0
    %3162 = vperm.xlu0 %3161, %v2847
    %v3163 = vpop.permute.xlu0 %3162
    %3166 = vset.pattern.permute.xlu0 0
    %3167 = vperm.xlu0 %3166, %v2848
    %v3168 = vpop.permute.xlu0 %3167
    %3171 = vset.pattern.permute.xlu0 0
    %3172 = vperm.xlu0 %3171, %v2849
    %v3173 = vpop.permute.xlu0 %3172
    %3176 = vset.pattern.permute.xlu0 0
    %3177 = vperm.xlu0 %3176, %v2850
    %v3178 = vpop.permute.xlu0 %3177
    %3181 = vset.pattern.permute.xlu0 0
    %3182 = vperm.xlu0 %3181, %v2851
    %v3183 = vpop.permute.xlu0 %3182
    %3186 = vset.pattern.permute.xlu0 0
    %3187 = vperm.xlu0 %3186, %v2852
    %v3188 = vpop.permute.xlu0 %3187
    %3191 = vset.pattern.permute.xlu0 0
    %3192 = vperm.xlu0 %3191, %v2853
    %v3193 = vpop.permute.xlu0 %3192
    %3196 = vset.pattern.permute.xlu0 0
    %3197 = vperm.xlu0 %3196, %v2854
    %v3198 = vpop.permute.xlu0 %3197
    %3201 = vset.pattern.permute.xlu0 0
    %3202 = vperm.xlu0 %3201, %v2855
    %v3203 = vpop.permute.xlu0 %3202
    %3206 = vset.pattern.permute.xlu0 0
    %3207 = vperm.xlu0 %3206, %v2856
    %v3208 = vpop.permute.xlu0 %3207
    %3211 = vset.pattern.permute.xlu0 0
    %3212 = vperm.xlu0 %3211, %v2857
    %v3213 = vpop.permute.xlu0 %3212
    %3216 = vset.pattern.permute.xlu0 0
    %3217 = vperm.xlu0 %3216, %v2858
    %v3218 = vpop.permute.xlu0 %3217
    %3221 = vset.pattern.permute.xlu0 0
    %3222 = vperm.xlu0 %3221, %v2859
    %v3223 = vpop.permute.xlu0 %3222
    %3226 = vset.pattern.permute.xlu0 0
    %3227 = vperm.xlu0 %3226, %v2860
    %v3228 = vpop.permute.xlu0 %3227
    %3231 = vset.pattern.permute.xlu0 0
    %3232 = vperm.xlu0 %3231, %v2861
    %v3233 = vpop.permute.xlu0 %3232
    %3236 = vset.pattern.permute.xlu0 0
    %3237 = vperm.xlu0 %3236, %v2862
    %v3238 = vpop.permute.xlu0 %3237
    %3241 = vset.pattern.permute.xlu0 0
    %3242 = vperm.xlu0 %3241, %v2863
    %v3243 = vpop.permute.xlu0 %3242
    %3246 = vset.pattern.permute.xlu0 0
    %3247 = vperm.xlu0 %3246, %v2864
    %v3248 = vpop.permute.xlu0 %3247
    %3251 = vset.pattern.permute.xlu0 0
    %3252 = vperm.xlu0 %3251, %v2865
    %v3253 = vpop.permute.xlu0 %3252
    %3256 = vset.pattern.permute.xlu0 0
    %3257 = vperm.xlu0 %3256, %v2866
    %v3258 = vpop.permute.xlu0 %3257
    %3261 = vset.pattern.permute.xlu0 0
    %3262 = vperm.xlu0 %3261, %v2867
    %v3263 = vpop.permute.xlu0 %3262
    %3266 = vset.pattern.permute.xlu0 0
    %3267 = vperm.xlu0 %3266, %v2868
    %v3268 = vpop.permute.xlu0 %3267
    %3271 = vset.pattern.permute.xlu0 0
    %3272 = vperm.xlu0 %3271, %v2869
    %v3273 = vpop.permute.xlu0 %3272
    %v3275 = vmul.f32 %v2787, %v2873
    %v3276 = vmul.f32 %v2786, %v2878
    %v3277 = vmul.f32 %v2785, %v2883
    %v3278 = vmul.f32 %v2784, %v2888
    %v3279 = vmul.f32 %v2783, %v2893
    %v3280 = vmul.f32 %v2782, %v2898
    %v3281 = vmul.f32 %v2781, %v2903
    %v3282 = vmul.f32 %v2780, %v2908
    %v3283 = vmul.f32 %v2779, %v2913
    %v3284 = vmul.f32 %v2778, %v2918
    %v3285 = vmul.f32 %v2777, %v2923
    %v3286 = vmul.f32 %v2776, %v2928
    %v3287 = vmul.f32 %v2775, %v2933
    %v3288 = vmul.f32 %v2774, %v2938
    %v3289 = vmul.f32 %v2773, %v2943
    %v3290 = vmul.f32 %v2772, %v2948
    %v3291 = vmul.f32 %v2771, %v2953
    %v3292 = vmul.f32 %v2770, %v2958
    %v3293 = vmul.f32 %v2769, %v2963
    %v3294 = vmul.f32 %v2768, %v2968
    %v3295 = vmul.f32 %v2767, %v2973
    %v3296 = vmul.f32 %v2766, %v2978
    %v3297 = vmul.f32 %v2765, %v2983
    %v3298 = vmul.f32 %v2764, %v2988
    %v3299 = vmul.f32 %v2763, %v2993
    %v3300 = vmul.f32 %v2762, %v2998
    %v3301 = vmul.f32 %v2761, %v3003
    %v3302 = vmul.f32 %v2760, %v3008
    %v3303 = vmul.f32 %v2759, %v3013
    %v3304 = vmul.f32 %v2758, %v3018
    %v3305 = vmul.f32 %v2757, %v3023
    %v3306 = vmul.f32 %v2756, %v3028
    %v3307 = vmul.f32 %v2755, %v3033
    %v3308 = vmul.f32 %v2754, %v3038
    %v3309 = vmul.f32 %v2753, %v3043
    %v3310 = vmul.f32 %v2752, %v3048
    %v3311 = vmul.f32 %v2751, %v3053
    %v3312 = vmul.f32 %v2750, %v3058
    %v3313 = vmul.f32 %v2749, %v3063
    %v3314 = vmul.f32 %v2748, %v3068
    %v3315 = vmul.f32 %v2747, %v3073
    %v3316 = vmul.f32 %v2746, %v3078
    %v3317 = vmul.f32 %v2745, %v3083
    %v3318 = vmul.f32 %v2744, %v3088
    %v3319 = vmul.f32 %v2743, %v3093
    %v3320 = vmul.f32 %v2742, %v3098
    %v3321 = vmul.f32 %v2741, %v3103
    %v3322 = vmul.f32 %v2740, %v3108
    %v3323 = vmul.f32 %v2739, %v3113
    %v3324 = vmul.f32 %v2738, %v3118
    %v3325 = vmul.f32 %v2737, %v3123
    %v3326 = vmul.f32 %v2736, %v3128
    %v3327 = vmul.f32 %v2735, %v3133
    %v3328 = vmul.f32 %v2734, %v3138
    %v3329 = vmul.f32 %v2733, %v3143
    %v3330 = vmul.f32 %v2732, %v3148
    %v3331 = vmul.f32 %v2731, %v3153
    %v3332 = vmul.f32 %v2730, %v3158
    %v3333 = vmul.f32 %v2729, %v3163
    %v3334 = vmul.f32 %v2728, %v3168
    %v3335 = vmul.f32 %v2727, %v3173
    %v3336 = vmul.f32 %v2726, %v3178
    %v3337 = vmul.f32 %v2725, %v3183
    %v3338 = vmul.f32 %v2724, %v3188
    %v3339 = vmul.f32 %v2723, %v3193
    %v3340 = vmul.f32 %v2722, %v3198
    %v3341 = vmul.f32 %v2721, %v3203
    %v3342 = vmul.f32 %v2720, %v3208
    %v3343 = vmul.f32 %v2719, %v3213
    %v3344 = vmul.f32 %v2718, %v3218
    %v3345 = vmul.f32 %v2717, %v3223
    %v3346 = vmul.f32 %v2716, %v3228
    %v3347 = vmul.f32 %v2715, %v3233
    %v3348 = vmul.f32 %v2714, %v3238
    %v3349 = vmul.f32 %v2713, %v3243
    %v3350 = vmul.f32 %v2712, %v3248
    %v3351 = vmul.f32 %v2711, %v3253
    %v3352 = vmul.f32 %v2710, %v3258
    %v3353 = vmul.f32 %v2709, %v3263
    %v3354 = vmul.f32 %v2708, %v3268
    %v3355 = vmul.f32 %v2788, %v3273
    %v3356 = vadd.f32 %v2545, %v3275
    %v3357 = vadd.f32 %v2546, %v3276
    %v3358 = vadd.f32 %v2547, %v3277
    %v3359 = vadd.f32 %v2548, %v3278
    %v3360 = vadd.f32 %v2549, %v3279
    %v3361 = vadd.f32 %v2550, %v3280
    %v3362 = vadd.f32 %v2551, %v3281
    %v3363 = vadd.f32 %v2552, %v3282
    %v3364 = vadd.f32 %v2553, %v3283
    %v3365 = vadd.f32 %v2554, %v3284
    %v3366 = vadd.f32 %v2555, %v3285
    %v3367 = vadd.f32 %v2556, %v3286
    %v3368 = vadd.f32 %v2557, %v3287
    %v3369 = vadd.f32 %v2558, %v3288
    %v3370 = vadd.f32 %v2559, %v3289
    %v3371 = vadd.f32 %v2560, %v3290
    %v3372 = vadd.f32 %v2561, %v3291
    %v3373 = vadd.f32 %v2562, %v3292
    %v3374 = vadd.f32 %v2563, %v3293
    %v3375 = vadd.f32 %v2564, %v3294
    %v3376 = vadd.f32 %v2565, %v3295
    %v3377 = vadd.f32 %v2566, %v3296
    %v3378 = vadd.f32 %v2567, %v3297
    %v3379 = vadd.f32 %v2568, %v3298
    %v3380 = vadd.f32 %v2569, %v3299
    %v3381 = vadd.f32 %v2570, %v3300
    %v3382 = vadd.f32 %v2571, %v3301
    %v3383 = vadd.f32 %v2572, %v3302
    %v3384 = vadd.f32 %v2573, %v3303
    %v3385 = vadd.f32 %v2574, %v3304
    %v3386 = vadd.f32 %v2575, %v3305
    %v3387 = vadd.f32 %v2576, %v3306
    %v3388 = vadd.f32 %v2577, %v3307
    %v3389 = vadd.f32 %v2578, %v3308
    %v3390 = vadd.f32 %v2579, %v3309
    %v3391 = vadd.f32 %v2580, %v3310
    %v3392 = vadd.f32 %v2581, %v3311
    %v3393 = vadd.f32 %v2582, %v3312
    %v3394 = vadd.f32 %v2583, %v3313
    %v3395 = vadd.f32 %v2584, %v3314
    %v3396 = vadd.f32 %v2585, %v3315
    %v3397 = vadd.f32 %v2586, %v3316
    %v3398 = vadd.f32 %v2587, %v3317
    %v3399 = vadd.f32 %v2588, %v3318
    %v3400 = vadd.f32 %v2589, %v3319
    %v3401 = vadd.f32 %v2590, %v3320
    %v3402 = vadd.f32 %v2591, %v3321
    %v3403 = vadd.f32 %v2592, %v3322
    %v3404 = vadd.f32 %v2593, %v3323
    %v3405 = vadd.f32 %v2594, %v3324
    %v3406 = vadd.f32 %v2595, %v3325
    %v3407 = vadd.f32 %v2596, %v3326
    %v3408 = vadd.f32 %v2597, %v3327
    %v3409 = vadd.f32 %v2598, %v3328
    %v3410 = vadd.f32 %v2599, %v3329
    %v3411 = vadd.f32 %v2600, %v3330
    %v3412 = vadd.f32 %v2601, %v3331
    %v3413 = vadd.f32 %v2602, %v3332
    %v3414 = vadd.f32 %v2603, %v3333
    %v3415 = vadd.f32 %v2604, %v3334
    %v3416 = vadd.f32 %v2605, %v3335
    %v3417 = vadd.f32 %v2606, %v3336
    %v3418 = vadd.f32 %v2607, %v3337
    %v3419 = vadd.f32 %v2608, %v3338
    %v3420 = vadd.f32 %v2609, %v3339
    %v3421 = vadd.f32 %v2610, %v3340
    %v3422 = vadd.f32 %v2611, %v3341
    %v3423 = vadd.f32 %v2612, %v3342
    %v3424 = vadd.f32 %v2613, %v3343
    %v3425 = vadd.f32 %v2614, %v3344
    %v3426 = vadd.f32 %v2615, %v3345
    %v3427 = vadd.f32 %v2616, %v3346
    %v3428 = vadd.f32 %v2617, %v3347
    %v3429 = vadd.f32 %v2618, %v3348
    %v3430 = vadd.f32 %v2619, %v3349
    %v3431 = vadd.f32 %v2620, %v3350
    %v3432 = vadd.f32 %v2621, %v3351
    %v3433 = vadd.f32 %v2622, %v3352
    %v3434 = vadd.f32 %v2623, %v3353
    %v3435 = vadd.f32 %v2624, %v3354
    %v3436 = vadd.f32 %v2625, %v3355
    %v3437 = vld [vmem:[%s2] sm:$0x1]
    %v3439 = vlaneseq
    %v3440 = vshrl.u32 %v3439, 7
    %v3441 = vsub.s32 0, %v3440
    %v3442 = vrot.slane %v3437, %v3441
    %v3444 = vadd.f32 %v3356, %v3442
    %v3445 = vadd.f32 %v3357, %v3442
    %v3446 = vadd.f32 %v3358, %v3442
    %v3447 = vadd.f32 %v3359, %v3442
    %v3448 = vadd.f32 %v3360, %v3442
    %v3449 = vadd.f32 %v3361, %v3442
    %v3450 = vadd.f32 %v3362, %v3442
    %v3451 = vadd.f32 %v3363, %v3442
    %v3452 = vadd.f32 %v3364, %v3442
    %v3453 = vadd.f32 %v3365, %v3442
    %v3454 = vadd.f32 %v3366, %v3442
    %v3455 = vadd.f32 %v3367, %v3442
    %v3456 = vadd.f32 %v3368, %v3442
    %v3457 = vadd.f32 %v3369, %v3442
    %v3458 = vadd.f32 %v3370, %v3442
    %v3459 = vadd.f32 %v3371, %v3442
    %v3460 = vadd.f32 %v3372, %v3442
    %v3461 = vadd.f32 %v3373, %v3442
    %v3462 = vadd.f32 %v3374, %v3442
    %v3463 = vadd.f32 %v3375, %v3442
    %v3464 = vadd.f32 %v3376, %v3442
    %v3465 = vadd.f32 %v3377, %v3442
    %v3466 = vadd.f32 %v3378, %v3442
    %v3467 = vadd.f32 %v3379, %v3442
    %v3468 = vadd.f32 %v3380, %v3442
    %v3469 = vadd.f32 %v3381, %v3442
    %v3470 = vadd.f32 %v3382, %v3442
    %v3471 = vadd.f32 %v3383, %v3442
    %v3472 = vadd.f32 %v3384, %v3442
    %v3473 = vadd.f32 %v3385, %v3442
    %v3474 = vadd.f32 %v3386, %v3442
    %v3475 = vadd.f32 %v3387, %v3442
    %v3476 = vadd.f32 %v3388, %v3442
    %v3477 = vadd.f32 %v3389, %v3442
    %v3478 = vadd.f32 %v3390, %v3442
    %v3479 = vadd.f32 %v3391, %v3442
    %v3480 = vadd.f32 %v3392, %v3442
    %v3481 = vadd.f32 %v3393, %v3442
    %v3482 = vadd.f32 %v3394, %v3442
    %v3483 = vadd.f32 %v3395, %v3442
    %v3484 = vadd.f32 %v3396, %v3442
    %v3485 = vadd.f32 %v3397, %v3442
    %v3486 = vadd.f32 %v3398, %v3442
    %v3487 = vadd.f32 %v3399, %v3442
    %v3488 = vadd.f32 %v3400, %v3442
    %v3489 = vadd.f32 %v3401, %v3442
    %v3490 = vadd.f32 %v3402, %v3442
    %v3491 = vadd.f32 %v3403, %v3442
    %v3492 = vadd.f32 %v3404, %v3442
    %v3493 = vadd.f32 %v3405, %v3442
    %v3494 = vadd.f32 %v3406, %v3442
    %v3495 = vadd.f32 %v3407, %v3442
    %v3496 = vadd.f32 %v3408, %v3442
    %v3497 = vadd.f32 %v3409, %v3442
    %v3498 = vadd.f32 %v3410, %v3442
    %v3499 = vadd.f32 %v3411, %v3442
    %v3500 = vadd.f32 %v3412, %v3442
    %v3501 = vadd.f32 %v3413, %v3442
    %v3502 = vadd.f32 %v3414, %v3442
    %v3503 = vadd.f32 %v3415, %v3442
    %v3504 = vadd.f32 %v3416, %v3442
    %v3505 = vadd.f32 %v3417, %v3442
    %v3506 = vadd.f32 %v3418, %v3442
    %v3507 = vadd.f32 %v3419, %v3442
    %v3508 = vadd.f32 %v3420, %v3442
    %v3509 = vadd.f32 %v3421, %v3442
    %v3510 = vadd.f32 %v3422, %v3442
    %v3511 = vadd.f32 %v3423, %v3442
    %v3512 = vadd.f32 %v3424, %v3442
    %v3513 = vadd.f32 %v3425, %v3442
    %v3514 = vadd.f32 %v3426, %v3442
    %v3515 = vadd.f32 %v3427, %v3442
    %v3516 = vadd.f32 %v3428, %v3442
    %v3517 = vadd.f32 %v3429, %v3442
    %v3518 = vadd.f32 %v3430, %v3442
    %v3519 = vadd.f32 %v3431, %v3442
    %v3520 = vadd.f32 %v3432, %v3442
    %v3521 = vadd.f32 %v3433, %v3442
    %v3522 = vadd.f32 %v3434, %v3442
    %v3523 = vadd.f32 %v3435, %v3442
    %v3524 = vadd.f32 %v3436, %v3442
    %v3525 = vmax.f32 %v3444, 0.0
    %v3526 = vmax.f32 %v3445, 0.0
    %v3527 = vmax.f32 %v3446, 0.0
    %v3528 = vmax.f32 %v3447, 0.0
    %v3529 = vmax.f32 %v3448, 0.0
    %v3530 = vmax.f32 %v3449, 0.0
    %v3531 = vmax.f32 %v3450, 0.0
    %v3532 = vmax.f32 %v3451, 0.0
    %v3533 = vmax.f32 %v3452, 0.0
    %v3534 = vmax.f32 %v3453, 0.0
    %v3535 = vmax.f32 %v3454, 0.0
    %v3536 = vmax.f32 %v3455, 0.0
    %v3537 = vmax.f32 %v3456, 0.0
    %v3538 = vmax.f32 %v3457, 0.0
    %v3539 = vmax.f32 %v3458, 0.0
    %v3540 = vmax.f32 %v3459, 0.0
    %v3541 = vmax.f32 %v3460, 0.0
    %v3542 = vmax.f32 %v3461, 0.0
    %v3543 = vmax.f32 %v3462, 0.0
    %v3544 = vmax.f32 %v3463, 0.0
    %v3545 = vmax.f32 %v3464, 0.0
    %v3546 = vmax.f32 %v3465, 0.0
    %v3547 = vmax.f32 %v3466, 0.0
    %v3548 = vmax.f32 %v3467, 0.0
    %v3549 = vmax.f32 %v3468, 0.0
    %v3550 = vmax.f32 %v3469, 0.0
    %v3551 = vmax.f32 %v3470, 0.0
    %v3552 = vmax.f32 %v3471, 0.0
    %v3553 = vmax.f32 %v3472, 0.0
    %v3554 = vmax.f32 %v3473, 0.0
    %v3555 = vmax.f32 %v3474, 0.0
    %v3556 = vmax.f32 %v3475, 0.0
    %v3557 = vmax.f32 %v3476, 0.0
    %v3558 = vmax.f32 %v3477, 0.0
    %v3559 = vmax.f32 %v3478, 0.0
    %v3560 = vmax.f32 %v3479, 0.0
    %v3561 = vmax.f32 %v3480, 0.0
    %v3562 = vmax.f32 %v3481, 0.0
    %v3563 = vmax.f32 %v3482, 0.0
    %v3564 = vmax.f32 %v3483, 0.0
    %v3565 = vmax.f32 %v3484, 0.0
    %v3566 = vmax.f32 %v3485, 0.0
    %v3567 = vmax.f32 %v3486, 0.0
    %v3568 = vmax.f32 %v3487, 0.0
    %v3569 = vmax.f32 %v3488, 0.0
    %v3570 = vmax.f32 %v3489, 0.0
    %v3571 = vmax.f32 %v3490, 0.0
    %v3572 = vmax.f32 %v3491, 0.0
    %v3573 = vmax.f32 %v3492, 0.0
    %v3574 = vmax.f32 %v3493, 0.0
    %v3575 = vmax.f32 %v3494, 0.0
    %v3576 = vmax.f32 %v3495, 0.0
    %v3577 = vmax.f32 %v3496, 0.0
    %v3578 = vmax.f32 %v3497, 0.0
    %v3579 = vmax.f32 %v3498, 0.0
    %v3580 = vmax.f32 %v3499, 0.0
    %v3581 = vmax.f32 %v3500, 0.0
    %v3582 = vmax.f32 %v3501, 0.0
    %v3583 = vmax.f32 %v3502, 0.0
    %v3584 = vmax.f32 %v3503, 0.0
    %v3585 = vmax.f32 %v3504, 0.0
    %v3586 = vmax.f32 %v3505, 0.0
    %v3587 = vmax.f32 %v3506, 0.0
    %v3588 = vmax.f32 %v3507, 0.0
    %v3589 = vmax.f32 %v3508, 0.0
    %v3590 = vmax.f32 %v3509, 0.0
    %v3591 = vmax.f32 %v3510, 0.0
    %v3592 = vmax.f32 %v3511, 0.0
    %v3593 = vmax.f32 %v3512, 0.0
    %v3594 = vmax.f32 %v3513, 0.0
    %v3595 = vmax.f32 %v3514, 0.0
    %v3596 = vmax.f32 %v3515, 0.0
    %v3597 = vmax.f32 %v3516, 0.0
    %v3598 = vmax.f32 %v3517, 0.0
    %v3599 = vmax.f32 %v3518, 0.0
    %v3600 = vmax.f32 %v3519, 0.0
    %v3601 = vmax.f32 %v3520, 0.0
    %v3602 = vmax.f32 %v3521, 0.0
    %v3603 = vmax.f32 %v3522, 0.0
    %v3604 = vmax.f32 %v3523, 0.0
    %v3605 = vmax.f32 %v3524, 0.0
    %vm3606 = vcmask 261120
    %3607 = vst.msk [vmem:[#allocation2] sm:$0xff] %vm3606, %v3525
    %3608 = vst.msk [vmem:[#allocation2 + $0x8] sm:$0xff] %vm3606, %v3526
    %3609 = vst.msk [vmem:[#allocation2 + $0x10] sm:$0xff] %vm3606, %v3527
    %3610 = vst.msk [vmem:[#allocation2 + $0x18] sm:$0xff] %vm3606, %v3528
    %3611 = vst.msk [vmem:[#allocation2 + $0x20] sm:$0xff] %vm3606, %v3529
    %3612 = vst.msk [vmem:[#allocation2 + $0x28] sm:$0xff] %vm3606, %v3530
    %3613 = vst.msk [vmem:[#allocation2 + $0x30] sm:$0xff] %vm3606, %v3531
    %3614 = vst.msk [vmem:[#allocation2 + $0x38] sm:$0xff] %vm3606, %v3532
    %3615 = vst.msk [vmem:[#allocation2 + $0x40] sm:$0xff] %vm3606, %v3533
    %3616 = vst.msk [vmem:[#allocation2 + $0x48] sm:$0xff] %vm3606, %v3534
    %3617 = vst.msk [vmem:[#allocation2 + $0x50] sm:$0xff] %vm3606, %v3535
    %3618 = vst.msk [vmem:[#allocation2 + $0x58] sm:$0xff] %vm3606, %v3536
    %3619 = vst.msk [vmem:[#allocation2 + $0x60] sm:$0xff] %vm3606, %v3537
    %3620 = vst.msk [vmem:[#allocation2 + $0x68] sm:$0xff] %vm3606, %v3538
    %3621 = vst.msk [vmem:[#allocation2 + $0x70] sm:$0xff] %vm3606, %v3539
    %3622 = vst.msk [vmem:[#allocation2 + $0x78] sm:$0xff] %vm3606, %v3540
    %3623 = vst.msk [vmem:[#allocation2 + $0x80] sm:$0xff] %vm3606, %v3541
    %3624 = vst.msk [vmem:[#allocation2 + $0x88] sm:$0xff] %vm3606, %v3542
    %3625 = vst.msk [vmem:[#allocation2 + $0x90] sm:$0xff] %vm3606, %v3543
    %3626 = vst.msk [vmem:[#allocation2 + $0x98] sm:$0xff] %vm3606, %v3544
    %3627 = vst.msk [vmem:[#allocation2 + $0xa0] sm:$0xff] %vm3606, %v3545
    %3628 = vst.msk [vmem:[#allocation2 + $0xa8] sm:$0xff] %vm3606, %v3546
    %3629 = vst.msk [vmem:[#allocation2 + $0xb0] sm:$0xff] %vm3606, %v3547
    %3630 = vst.msk [vmem:[#allocation2 + $0xb8] sm:$0xff] %vm3606, %v3548
    %3631 = vst.msk [vmem:[#allocation2 + $0xc0] sm:$0xff] %vm3606, %v3549
    %3632 = vst.msk [vmem:[#allocation2 + $0xc8] sm:$0xff] %vm3606, %v3550
    %3633 = vst.msk [vmem:[#allocation2 + $0xd0] sm:$0xff] %vm3606, %v3551
    %3634 = vst.msk [vmem:[#allocation2 + $0xd8] sm:$0xff] %vm3606, %v3552
    %3635 = vst.msk [vmem:[#allocation2 + $0xe0] sm:$0xff] %vm3606, %v3553
    %3636 = vst.msk [vmem:[#allocation2 + $0xe8] sm:$0xff] %vm3606, %v3554
    %3637 = vst.msk [vmem:[#allocation2 + $0xf0] sm:$0xff] %vm3606, %v3555
    %3638 = vst.msk [vmem:[#allocation2 + $0xf8] sm:$0xff] %vm3606, %v3556
    %3639 = vst.msk [vmem:[#allocation2 + $0x100] sm:$0xff] %vm3606, %v3557
    %3640 = vst.msk [vmem:[#allocation2 + $0x108] sm:$0xff] %vm3606, %v3558
    %3641 = vst.msk [vmem:[#allocation2 + $0x110] sm:$0xff] %vm3606, %v3559
    %3642 = vst.msk [vmem:[#allocation2 + $0x118] sm:$0xff] %vm3606, %v3560
    %3643 = vst.msk [vmem:[#allocation2 + $0x120] sm:$0xff] %vm3606, %v3561
    %3644 = vst.msk [vmem:[#allocation2 + $0x128] sm:$0xff] %vm3606, %v3562
    %3645 = vst.msk [vmem:[#allocation2 + $0x130] sm:$0xff] %vm3606, %v3563
    %3646 = vst.msk [vmem:[#allocation2 + $0x138] sm:$0xff] %vm3606, %v3564
    %3647 = vst.msk [vmem:[#allocation2 + $0x140] sm:$0xff] %vm3606, %v3565
    %3648 = vst.msk [vmem:[#allocation2 + $0x148] sm:$0xff] %vm3606, %v3566
    %3649 = vst.msk [vmem:[#allocation2 + $0x150] sm:$0xff] %vm3606, %v3567
    %3650 = vst.msk [vmem:[#allocation2 + $0x158] sm:$0xff] %vm3606, %v3568
    %3651 = vst.msk [vmem:[#allocation2 + $0x160] sm:$0xff] %vm3606, %v3569
    %3652 = vst.msk [vmem:[#allocation2 + $0x168] sm:$0xff] %vm3606, %v3570
    %3653 = vst.msk [vmem:[#allocation2 + $0x170] sm:$0xff] %vm3606, %v3571
    %3654 = vst.msk [vmem:[#allocation2 + $0x178] sm:$0xff] %vm3606, %v3572
    %3655 = vst.msk [vmem:[#allocation2 + $0x180] sm:$0xff] %vm3606, %v3573
    %3656 = vst.msk [vmem:[#allocation2 + $0x188] sm:$0xff] %vm3606, %v3574
    %3657 = vst.msk [vmem:[#allocation2 + $0x190] sm:$0xff] %vm3606, %v3575
    %3658 = vst.msk [vmem:[#allocation2 + $0x198] sm:$0xff] %vm3606, %v3576
    %3659 = vst.msk [vmem:[#allocation2 + $0x1a0] sm:$0xff] %vm3606, %v3577
    %3660 = vst.msk [vmem:[#allocation2 + $0x1a8] sm:$0xff] %vm3606, %v3578
    %3661 = vst.msk [vmem:[#allocation2 + $0x1b0] sm:$0xff] %vm3606, %v3579
    %3662 = vst.msk [vmem:[#allocation2 + $0x1b8] sm:$0xff] %vm3606, %v3580
    %3663 = vst.msk [vmem:[#allocation2 + $0x1c0] sm:$0xff] %vm3606, %v3581
    %3664 = vst.msk [vmem:[#allocation2 + $0x1c8] sm:$0xff] %vm3606, %v3582
    %3665 = vst.msk [vmem:[#allocation2 + $0x1d0] sm:$0xff] %vm3606, %v3583
    %3666 = vst.msk [vmem:[#allocation2 + $0x1d8] sm:$0xff] %vm3606, %v3584
    %3667 = vst.msk [vmem:[#allocation2 + $0x1e0] sm:$0xff] %vm3606, %v3585
    %3668 = vst.msk [vmem:[#allocation2 + $0x1e8] sm:$0xff] %vm3606, %v3586
    %3669 = vst.msk [vmem:[#allocation2 + $0x1f0] sm:$0xff] %vm3606, %v3587
    %3670 = vst.msk [vmem:[#allocation2 + $0x1f8] sm:$0xff] %vm3606, %v3588
    %3671 = vst.msk [vmem:[#allocation2 + $0x200] sm:$0xff] %vm3606, %v3589
    %3672 = vst.msk [vmem:[#allocation2 + $0x208] sm:$0xff] %vm3606, %v3590
    %3673 = vst.msk [vmem:[#allocation2 + $0x210] sm:$0xff] %vm3606, %v3591
    %3674 = vst.msk [vmem:[#allocation2 + $0x218] sm:$0xff] %vm3606, %v3592
    %3675 = vst.msk [vmem:[#allocation2 + $0x220] sm:$0xff] %vm3606, %v3593
    %3676 = vst.msk [vmem:[#allocation2 + $0x228] sm:$0xff] %vm3606, %v3594
    %3677 = vst.msk [vmem:[#allocation2 + $0x230] sm:$0xff] %vm3606, %v3595
    %3678 = vst.msk [vmem:[#allocation2 + $0x238] sm:$0xff] %vm3606, %v3596
    %3679 = vst.msk [vmem:[#allocation2 + $0x240] sm:$0xff] %vm3606, %v3597
    %3680 = vst.msk [vmem:[#allocation2 + $0x248] sm:$0xff] %vm3606, %v3598
    %3681 = vst.msk [vmem:[#allocation2 + $0x250] sm:$0xff] %vm3606, %v3599
    %3682 = vst.msk [vmem:[#allocation2 + $0x258] sm:$0xff] %vm3606, %v3600
    %3683 = vst.msk [vmem:[#allocation2 + $0x260] sm:$0xff] %vm3606, %v3601
    %3684 = vst.msk [vmem:[#allocation2 + $0x268] sm:$0xff] %vm3606, %v3602
    %3685 = vst.msk [vmem:[#allocation2 + $0x270] sm:$0xff] %vm3606, %v3603
    %3686 = vst.msk [vmem:[#allocation2 + $0x278] sm:$0xff] %vm3606, %v3604
    %3687 = vst.msk [vmem:[#allocation2 + $0x280] sm:$0xff] %vm3606, %v3605
    %v3688 = vld [vmem:[#allocation2] ss:$3 sm:$0xff]
    %s3689 = scalar_lea.vmem [#allocation2], 24
    %v3690 = vld [vmem:[%s3689] ss:$3 sm:$0xff]
    %s3691 = scalar_lea.vmem [#allocation2], 48
    %v3692 = vld [vmem:[%s3691] ss:$3 sm:$0xff]
    %s3693 = scalar_lea.vmem [#allocation2], 72
    %v3694 = vld [vmem:[%s3693] ss:$3 sm:$0xff]
    %s3695 = scalar_lea.vmem [#allocation2], 96
    %v3696 = vld [vmem:[%s3695] ss:$3 sm:$0xff]
    %s3697 = scalar_lea.vmem [#allocation2], 120
    %v3698 = vld [vmem:[%s3697] ss:$3 sm:$0xff]
    %s3699 = scalar_lea.vmem [#allocation2], 144
    %v3700 = vld [vmem:[%s3699] ss:$3 sm:$0xff]
    %s3701 = scalar_lea.vmem [#allocation2], 168
    %v3702 = vld [vmem:[%s3701] ss:$3 sm:$0xff]
    %s3703 = scalar_lea.vmem [#allocation2], 192
    %v3704 = vld [vmem:[%s3703] ss:$3 sm:$0xff]
    %s3705 = scalar_lea.vmem [#allocation2], 216
    %v3706 = vld [vmem:[%s3705] ss:$3 sm:$0xff]
    %s3707 = scalar_lea.vmem [#allocation2], 240
    %v3708 = vld [vmem:[%s3707] ss:$3 sm:$0xff]
    %s3709 = scalar_lea.vmem [#allocation2], 264
    %v3710 = vld [vmem:[%s3709] ss:$3 sm:$0xff]
    %s3711 = scalar_lea.vmem [#allocation2], 288
    %v3712 = vld [vmem:[%s3711] ss:$3 sm:$0xff]
    %s3713 = scalar_lea.vmem [#allocation2], 312
    %v3714 = vld [vmem:[%s3713] ss:$3 sm:$0xff]
    %s3715 = scalar_lea.vmem [#allocation2], 336
    %v3716 = vld [vmem:[%s3715] ss:$3 sm:$0xff]
    %s3717 = scalar_lea.vmem [#allocation2], 360
    %v3718 = vld [vmem:[%s3717] ss:$3 sm:$0xff]
    %s3719 = scalar_lea.vmem [#allocation2], 384
    %v3720 = vld [vmem:[%s3719] ss:$3 sm:$0xff]
    %s3721 = scalar_lea.vmem [#allocation2], 408
    %v3722 = vld [vmem:[%s3721] ss:$3 sm:$0xff]
    %s3723 = scalar_lea.vmem [#allocation2], 432
    %v3724 = vld [vmem:[%s3723] ss:$3 sm:$0xff]
    %s3725 = scalar_lea.vmem [#allocation2], 456
    %v3726 = vld [vmem:[%s3725] ss:$3 sm:$0xff]
    %s3727 = scalar_lea.vmem [#allocation2], 480
    %v3728 = vld [vmem:[%s3727] ss:$3 sm:$0xff]
    %s3729 = scalar_lea.vmem [#allocation2], 504
    %v3730 = vld [vmem:[%s3729] ss:$3 sm:$0xff]
    %s3731 = scalar_lea.vmem [#allocation2], 528
    %v3732 = vld [vmem:[%s3731] ss:$3 sm:$0xff]
    %s3733 = scalar_lea.vmem [#allocation2], 552
    %v3734 = vld [vmem:[%s3733] ss:$3 sm:$0xff]
    %s3735 = scalar_lea.vmem [#allocation2], 576
    %v3736 = vld [vmem:[%s3735] ss:$3 sm:$0xff]
    %s3737 = scalar_lea.vmem [#allocation2], 600
    %v3738 = vld [vmem:[%s3737] ss:$3 sm:$0xff]
    %s3739 = scalar_lea.vmem [#allocation2], 624
    %v3740 = vld [vmem:[%s3739] ss:$3 sm:$0xff]
    %s3741 = scalar_lea.vmem [#allocation2], 1
    %v3742 = vld [vmem:[%s3741] ss:$3 sm:$0xff]
    %s3743 = scalar_lea.vmem [#allocation2], 25
    %v3744 = vld [vmem:[%s3743] ss:$3 sm:$0xff]
    %s3745 = scalar_lea.vmem [#allocation2], 49
    %v3746 = vld [vmem:[%s3745] ss:$3 sm:$0xff]
    %s3747 = scalar_lea.vmem [#allocation2], 73
    %v3748 = vld [vmem:[%s3747] ss:$3 sm:$0xff]
    %s3749 = scalar_lea.vmem [#allocation2], 97
    %v3750 = vld [vmem:[%s3749] ss:$3 sm:$0xff]
    %s3751 = scalar_lea.vmem [#allocation2], 121
    %v3752 = vld [vmem:[%s3751] ss:$3 sm:$0xff]
    %s3753 = scalar_lea.vmem [#allocation2], 145
    %v3754 = vld [vmem:[%s3753] ss:$3 sm:$0xff]
    %s3755 = scalar_lea.vmem [#allocation2], 169
    %v3756 = vld [vmem:[%s3755] ss:$3 sm:$0xff]
    %s3757 = scalar_lea.vmem [#allocation2], 193
    %v3758 = vld [vmem:[%s3757] ss:$3 sm:$0xff]
    %s3759 = scalar_lea.vmem [#allocation2], 217
    %v3760 = vld [vmem:[%s3759] ss:$3 sm:$0xff]
    %s3761 = scalar_lea.vmem [#allocation2], 241
    %v3762 = vld [vmem:[%s3761] ss:$3 sm:$0xff]
    %s3763 = scalar_lea.vmem [#allocation2], 265
    %v3764 = vld [vmem:[%s3763] ss:$3 sm:$0xff]
    %s3765 = scalar_lea.vmem [#allocation2], 289
    %v3766 = vld [vmem:[%s3765] ss:$3 sm:$0xff]
    %s3767 = scalar_lea.vmem [#allocation2], 313
    %v3768 = vld [vmem:[%s3767] ss:$3 sm:$0xff]
    %s3769 = scalar_lea.vmem [#allocation2], 337
    %v3770 = vld [vmem:[%s3769] ss:$3 sm:$0xff]
    %s3771 = scalar_lea.vmem [#allocation2], 361
    %v3772 = vld [vmem:[%s3771] ss:$3 sm:$0xff]
    %s3773 = scalar_lea.vmem [#allocation2], 385
    %v3774 = vld [vmem:[%s3773] ss:$3 sm:$0xff]
    %s3775 = scalar_lea.vmem [#allocation2], 409
    %v3776 = vld [vmem:[%s3775] ss:$3 sm:$0xff]
    %s3777 = scalar_lea.vmem [#allocation2], 433
    %v3778 = vld [vmem:[%s3777] ss:$3 sm:$0xff]
    %s3779 = scalar_lea.vmem [#allocation2], 457
    %v3780 = vld [vmem:[%s3779] ss:$3 sm:$0xff]
    %s3781 = scalar_lea.vmem [#allocation2], 481
    %v3782 = vld [vmem:[%s3781] ss:$3 sm:$0xff]
    %s3783 = scalar_lea.vmem [#allocation2], 505
    %v3784 = vld [vmem:[%s3783] ss:$3 sm:$0xff]
    %s3785 = scalar_lea.vmem [#allocation2], 529
    %v3786 = vld [vmem:[%s3785] ss:$3 sm:$0xff]
    %s3787 = scalar_lea.vmem [#allocation2], 553
    %v3788 = vld [vmem:[%s3787] ss:$3 sm:$0xff]
    %s3789 = scalar_lea.vmem [#allocation2], 577
    %v3790 = vld [vmem:[%s3789] ss:$3 sm:$0xff]
    %s3791 = scalar_lea.vmem [#allocation2], 601
    %v3792 = vld [vmem:[%s3791] ss:$3 sm:$0xff]
    %s3793 = scalar_lea.vmem [#allocation2], 625
    %v3794 = vld [vmem:[%s3793] ss:$3 sm:$0xff]
    %v3795 = vmax.f32 %v3688, %v3742
    %v3796 = vmax.f32 %v3690, %v3744
    %v3797 = vmax.f32 %v3692, %v3746
    %v3798 = vmax.f32 %v3694, %v3748
    %v3799 = vmax.f32 %v3696, %v3750
    %v3800 = vmax.f32 %v3698, %v3752
    %v3801 = vmax.f32 %v3700, %v3754
    %v3802 = vmax.f32 %v3702, %v3756
    %v3803 = vmax.f32 %v3704, %v3758
    %v3804 = vmax.f32 %v3706, %v3760
    %v3805 = vmax.f32 %v3708, %v3762
    %v3806 = vmax.f32 %v3710, %v3764
    %v3807 = vmax.f32 %v3712, %v3766
    %v3808 = vmax.f32 %v3714, %v3768
    %v3809 = vmax.f32 %v3716, %v3770
    %v3810 = vmax.f32 %v3718, %v3772
    %v3811 = vmax.f32 %v3720, %v3774
    %v3812 = vmax.f32 %v3722, %v3776
    %v3813 = vmax.f32 %v3724, %v3778
    %v3814 = vmax.f32 %v3726, %v3780
    %v3815 = vmax.f32 %v3728, %v3782
    %v3816 = vmax.f32 %v3730, %v3784
    %v3817 = vmax.f32 %v3732, %v3786
    %v3818 = vmax.f32 %v3734, %v3788
    %v3819 = vmax.f32 %v3736, %v3790
    %v3820 = vmax.f32 %v3738, %v3792
    %v3821 = vmax.f32 %v3740, %v3794
    %s3822 = scalar_lea.vmem [#allocation2], 2
    %v3823 = vld [vmem:[%s3822] ss:$3 sm:$0xff]
    %s3824 = scalar_lea.vmem [#allocation2], 26
    %v3825 = vld [vmem:[%s3824] ss:$3 sm:$0xff]
    %s3826 = scalar_lea.vmem [#allocation2], 50
    %v3827 = vld [vmem:[%s3826] ss:$3 sm:$0xff]
    %s3828 = scalar_lea.vmem [#allocation2], 74
    %v3829 = vld [vmem:[%s3828] ss:$3 sm:$0xff]
    %s3830 = scalar_lea.vmem [#allocation2], 98
    %v3831 = vld [vmem:[%s3830] ss:$3 sm:$0xff]
    %s3832 = scalar_lea.vmem [#allocation2], 122
    %v3833 = vld [vmem:[%s3832] ss:$3 sm:$0xff]
    %s3834 = scalar_lea.vmem [#allocation2], 146
    %v3835 = vld [vmem:[%s3834] ss:$3 sm:$0xff]
    %s3836 = scalar_lea.vmem [#allocation2], 170
    %v3837 = vld [vmem:[%s3836] ss:$3 sm:$0xff]
    %s3838 = scalar_lea.vmem [#allocation2], 194
    %v3839 = vld [vmem:[%s3838] ss:$3 sm:$0xff]
    %s3840 = scalar_lea.vmem [#allocation2], 218
    %v3841 = vld [vmem:[%s3840] ss:$3 sm:$0xff]
    %s3842 = scalar_lea.vmem [#allocation2], 242
    %v3843 = vld [vmem:[%s3842] ss:$3 sm:$0xff]
    %s3844 = scalar_lea.vmem [#allocation2], 266
    %v3845 = vld [vmem:[%s3844] ss:$3 sm:$0xff]
    %s3846 = scalar_lea.vmem [#allocation2], 290
    %v3847 = vld [vmem:[%s3846] ss:$3 sm:$0xff]
    %s3848 = scalar_lea.vmem [#allocation2], 314
    %v3849 = vld [vmem:[%s3848] ss:$3 sm:$0xff]
    %s3850 = scalar_lea.vmem [#allocation2], 338
    %v3851 = vld [vmem:[%s3850] ss:$3 sm:$0xff]
    %s3852 = scalar_lea.vmem [#allocation2], 362
    %v3853 = vld [vmem:[%s3852] ss:$3 sm:$0xff]
    %s3854 = scalar_lea.vmem [#allocation2], 386
    %v3855 = vld [vmem:[%s3854] ss:$3 sm:$0xff]
    %s3856 = scalar_lea.vmem [#allocation2], 410
    %v3857 = vld [vmem:[%s3856] ss:$3 sm:$0xff]
    %s3858 = scalar_lea.vmem [#allocation2], 434
    %v3859 = vld [vmem:[%s3858] ss:$3 sm:$0xff]
    %s3860 = scalar_lea.vmem [#allocation2], 458
    %v3861 = vld [vmem:[%s3860] ss:$3 sm:$0xff]
    %s3862 = scalar_lea.vmem [#allocation2], 482
    %v3863 = vld [vmem:[%s3862] ss:$3 sm:$0xff]
    %s3864 = scalar_lea.vmem [#allocation2], 506
    %v3865 = vld [vmem:[%s3864] ss:$3 sm:$0xff]
    %s3866 = scalar_lea.vmem [#allocation2], 530
    %v3867 = vld [vmem:[%s3866] ss:$3 sm:$0xff]
    %s3868 = scalar_lea.vmem [#allocation2], 554
    %v3869 = vld [vmem:[%s3868] ss:$3 sm:$0xff]
    %s3870 = scalar_lea.vmem [#allocation2], 578
    %v3871 = vld [vmem:[%s3870] ss:$3 sm:$0xff]
    %s3872 = scalar_lea.vmem [#allocation2], 602
    %v3873 = vld [vmem:[%s3872] ss:$3 sm:$0xff]
    %s3874 = scalar_lea.vmem [#allocation2], 626
    %v3875 = vld [vmem:[%s3874] ss:$3 sm:$0xff]
    %v3876 = vmax.f32 %v3795, %v3823
    %v3877 = vmax.f32 %v3796, %v3825
    %v3878 = vmax.f32 %v3797, %v3827
    %v3879 = vmax.f32 %v3798, %v3829
    %v3880 = vmax.f32 %v3799, %v3831
    %v3881 = vmax.f32 %v3800, %v3833
    %v3882 = vmax.f32 %v3801, %v3835
    %v3883 = vmax.f32 %v3802, %v3837
    %v3884 = vmax.f32 %v3803, %v3839
    %v3885 = vmax.f32 %v3804, %v3841
    %v3886 = vmax.f32 %v3805, %v3843
    %v3887 = vmax.f32 %v3806, %v3845
    %v3888 = vmax.f32 %v3807, %v3847
    %v3889 = vmax.f32 %v3808, %v3849
    %v3890 = vmax.f32 %v3809, %v3851
    %v3891 = vmax.f32 %v3810, %v3853
    %v3892 = vmax.f32 %v3811, %v3855
    %v3893 = vmax.f32 %v3812, %v3857
    %v3894 = vmax.f32 %v3813, %v3859
    %v3895 = vmax.f32 %v3814, %v3861
    %v3896 = vmax.f32 %v3815, %v3863
    %v3897 = vmax.f32 %v3816, %v3865
    %v3898 = vmax.f32 %v3817, %v3867
    %v3899 = vmax.f32 %v3818, %v3869
    %v3900 = vmax.f32 %v3819, %v3871
    %v3901 = vmax.f32 %v3820, %v3873
    %v3902 = vmax.f32 %v3821, %v3875
    %v3903 = vld [vmem:[%s5] sm:$0xff]
    %v3904 = vld [vmem:[%s5 + $0x8] sm:$0xff]
    %v3905 = vld [vmem:[%s5 + $0x10] sm:$0xff]
    %v3906 = vld [vmem:[%s5 + $0x18] sm:$0xff]
    %v3908 = vsel %vm3606, %v3876, 0
    %v3911 = vsel %vm3606, %v3877, 0
    %v3914 = vsel %vm3606, %v3878, 0
    %v3917 = vsel %vm3606, %v3879, 0
    %v3920 = vsel %vm3606, %v3880, 0
    %v3923 = vsel %vm3606, %v3881, 0
    %v3926 = vsel %vm3606, %v3882, 0
    %v3929 = vsel %vm3606, %v3883, 0
    %v3932 = vsel %vm3606, %v3884, 0
    %v3935 = vsel %vm3606, %v3885, 0
    %v3938 = vsel %vm3606, %v3886, 0
    %v3941 = vsel %vm3606, %v3887, 0
    %v3944 = vsel %vm3606, %v3888, 0
    %v3947 = vsel %vm3606, %v3889, 0
    %v3950 = vsel %vm3606, %v3890, 0
    %v3953 = vsel %vm3606, %v3891, 0
    %v3956 = vsel %vm3606, %v3892, 0
    %v3959 = vsel %vm3606, %v3893, 0
    %v3962 = vsel %vm3606, %v3894, 0
    %v3965 = vsel %vm3606, %v3895, 0
    %v3968 = vsel %vm3606, %v3896, 0
    %v3971 = vsel %vm3606, %v3897, 0
    %v3974 = vsel %vm3606, %v3898, 0
    %v3977 = vsel %vm3606, %v3899, 0
    %v3980 = vsel %vm3606, %v3900, 0
    %v3983 = vsel %vm3606, %v3901, 0
    %v3986 = vsel %vm3606, %v3902, 0
    %3988 = vmatprep.subr.mxu0 0.0
    %3989 = vmatpush1.msra.mxu0 0.0
    %3990 = vmatprep.subr.mxu0 0.0
    %3991 = vmatpush1.msra.mxu0 0.0
    %3992 = vmatprep.subr.mxu0 0.0
    %3993 = vmatpush1.msra.mxu0 0.0
    %3994 = vmatprep.subr.mxu0 0.0
    %3995 = vmatpush1.msra.mxu0 0.0
    %3996 = vmatprep.subr.mxu0 0.0
    %3997 = vmatpush1.msra.mxu0 0.0
    %3998 = vmatprep.subr.mxu0 0.0
    %3999 = vmatpush1.msra.mxu0 0.0
    %4000 = vmatprep.subr.mxu0 0.0
    %4001 = vmatpush1.msra.mxu0 0.0
    %4002 = vmatprep.subr.mxu0 0.0
    %4003 = vmatpush1.msra.mxu0 0.0
    %4004 = vmatprep.subr.mxu0 0.0
    %4005 = vmatpush1.msra.mxu0 0.0
    %4006 = vmatprep.subr.mxu0 0.0
    %4007 = vmatpush1.msra.mxu0 0.0
    %4008 = vmatprep.subr.mxu0 0.0
    %4009 = vmatpush1.msra.mxu0 0.0
    %4010 = vmatprep.subr.mxu0 0.0
    %4011 = vmatpush1.msra.mxu0 0.0
    %4012 = vmatprep.subr.mxu0 0.0
    %4013 = vmatpush1.msra.mxu0 %v3906
    %4014 = vmatprep.subr.mxu0 0.0
    %4015 = vmatpush1.msra.mxu0 %v3905
    %4016 = vmatprep.subr.mxu0 0.0
    %4017 = vmatpush1.msra.mxu0 %v3904
    %4018 = vmatprep.subr.mxu0 0.0
    %4019 = vmatpush1.msra.mxu0 %v3903
    %4020 = vmatprep.subr.mxu0 0.0
    %4021 = vmatpush2.msra.mxu0 0.0
    %4022 = vmatprep.subr.mxu0 0.0
    %4023 = vmatpush2.msra.mxu0 0.0
    %4024 = vmatprep.subr.mxu0 0.0
    %4025 = vmatpush2.msra.mxu0 0.0
    %4026 = vmatprep.subr.mxu0 0.0
    %4027 = vmatpush2.msra.mxu0 0.0
    %4028 = vmatprep.subr.mxu0 0.0
    %4029 = vmatpush2.msra.mxu0 0.0
    %4030 = vmatprep.subr.mxu0 0.0
    %4031 = vmatpush2.msra.mxu0 0.0
    %4032 = vmatprep.subr.mxu0 0.0
    %4033 = vmatpush2.msra.mxu0 0.0
    %4034 = vmatprep.subr.mxu0 0.0
    %4035 = vmatpush2.msra.mxu0 0.0
    %4036 = vmatprep.subr.mxu0 0.0
    %4037 = vmatpush2.msra.mxu0 0.0
    %4038 = vmatprep.subr.mxu0 0.0
    %4039 = vmatpush2.msra.mxu0 0.0
    %4040 = vmatprep.subr.mxu0 0.0
    %4041 = vmatpush2.msra.mxu0 0.0
    %4042 = vmatprep.subr.mxu0 0.0
    %4043 = vmatpush2.msra.mxu0 0.0
    %4044 = vmatprep.subr.mxu0 0.0
    %4045 = vmatpush2.msra.mxu0 0.0
    %4046 = vmatprep.subr.mxu0 0.0
    %4047 = vmatpush2.msra.mxu0 0.0
    %4048 = vmatprep.subr.mxu0 0.0
    %4049 = vmatpush2.msra.mxu0 0.0
    %4050 = vmatprep.subr.mxu0 0.0
    %4051 = vmatpush2.msra.mxu0 0.0
    %4052 = vmatprep.mubr.f32.mxu0 0.0
    %4053 = vmatmul.mubr.f32.gmra.mxu0 %v3908
    %v4054 = vpop.f32.mrf.mxu0
    %v4055 = vadd.f32 0.0, %v4054
    %v4056 = vpop.f32.mrf.mxu0
    %4057 = vmatprep.mubr.f32.mxu0 0.0
    %4058 = vmatmul.mubr.f32.gmra.mxu0 %v3911
    %v4059 = vpop.f32.mrf.mxu0
    %v4060 = vadd.f32 0.0, %v4059
    %v4061 = vpop.f32.mrf.mxu0
    %4062 = vmatprep.mubr.f32.mxu0 0.0
    %4063 = vmatmul.mubr.f32.gmra.mxu0 %v3914
    %v4064 = vpop.f32.mrf.mxu0
    %v4065 = vadd.f32 0.0, %v4064
    %v4066 = vpop.f32.mrf.mxu0
    %4067 = vmatprep.mubr.f32.mxu0 0.0
    %4068 = vmatmul.mubr.f32.gmra.mxu0 %v3917
    %v4069 = vpop.f32.mrf.mxu0
    %v4070 = vadd.f32 0.0, %v4069
    %v4071 = vpop.f32.mrf.mxu0
    %4072 = vmatprep.mubr.f32.mxu0 0.0
    %4073 = vmatmul.mubr.f32.gmra.mxu0 %v3920
    %v4074 = vpop.f32.mrf.mxu0
    %v4075 = vadd.f32 0.0, %v4074
    %v4076 = vpop.f32.mrf.mxu0
    %4077 = vmatprep.mubr.f32.mxu0 0.0
    %4078 = vmatmul.mubr.f32.gmra.mxu0 %v3923
    %v4079 = vpop.f32.mrf.mxu0
    %v4080 = vadd.f32 0.0, %v4079
    %v4081 = vpop.f32.mrf.mxu0
    %4082 = vmatprep.mubr.f32.mxu0 0.0
    %4083 = vmatmul.mubr.f32.gmra.mxu0 %v3926
    %v4084 = vpop.f32.mrf.mxu0
    %v4085 = vadd.f32 0.0, %v4084
    %v4086 = vpop.f32.mrf.mxu0
    %4087 = vmatprep.mubr.f32.mxu0 0.0
    %4088 = vmatmul.mubr.f32.gmra.mxu0 %v3929
    %v4089 = vpop.f32.mrf.mxu0
    %v4090 = vadd.f32 0.0, %v4089
    %v4091 = vpop.f32.mrf.mxu0
    %4092 = vmatprep.mubr.f32.mxu0 0.0
    %4093 = vmatmul.mubr.f32.gmra.mxu0 %v3932
    %v4094 = vpop.f32.mrf.mxu0
    %v4095 = vadd.f32 0.0, %v4094
    %v4096 = vpop.f32.mrf.mxu0
    %4097 = vmatprep.mubr.f32.mxu0 0.0
    %4098 = vmatmul.mubr.f32.gmra.mxu0 %v3935
    %v4099 = vpop.f32.mrf.mxu0
    %v4100 = vadd.f32 0.0, %v4099
    %v4101 = vpop.f32.mrf.mxu0
    %4102 = vmatprep.mubr.f32.mxu0 0.0
    %4103 = vmatmul.mubr.f32.gmra.mxu0 %v3938
    %v4104 = vpop.f32.mrf.mxu0
    %v4105 = vadd.f32 0.0, %v4104
    %v4106 = vpop.f32.mrf.mxu0
    %4107 = vmatprep.mubr.f32.mxu0 0.0
    %4108 = vmatmul.mubr.f32.gmra.mxu0 %v3941
    %v4109 = vpop.f32.mrf.mxu0
    %v4110 = vadd.f32 0.0, %v4109
    %v4111 = vpop.f32.mrf.mxu0
    %4112 = vmatprep.mubr.f32.mxu0 0.0
    %4113 = vmatmul.mubr.f32.gmra.mxu0 %v3944
    %v4114 = vpop.f32.mrf.mxu0
    %v4115 = vadd.f32 0.0, %v4114
    %v4116 = vpop.f32.mrf.mxu0
    %4117 = vmatprep.mubr.f32.mxu0 0.0
    %4118 = vmatmul.mubr.f32.gmra.mxu0 %v3947
    %v4119 = vpop.f32.mrf.mxu0
    %v4120 = vadd.f32 0.0, %v4119
    %v4121 = vpop.f32.mrf.mxu0
    %4122 = vmatprep.mubr.f32.mxu0 0.0
    %4123 = vmatmul.mubr.f32.gmra.mxu0 %v3950
    %v4124 = vpop.f32.mrf.mxu0
    %v4125 = vadd.f32 0.0, %v4124
    %v4126 = vpop.f32.mrf.mxu0
    %4127 = vmatprep.mubr.f32.mxu0 0.0
    %4128 = vmatmul.mubr.f32.gmra.mxu0 %v3953
    %v4129 = vpop.f32.mrf.mxu0
    %v4130 = vadd.f32 0.0, %v4129
    %v4131 = vpop.f32.mrf.mxu0
    %4132 = vmatprep.mubr.f32.mxu0 0.0
    %4133 = vmatmul.mubr.f32.gmra.mxu0 %v3956
    %v4134 = vpop.f32.mrf.mxu0
    %v4135 = vadd.f32 0.0, %v4134
    %v4136 = vpop.f32.mrf.mxu0
    %4137 = vmatprep.mubr.f32.mxu0 0.0
    %4138 = vmatmul.mubr.f32.gmra.mxu0 %v3959
    %v4139 = vpop.f32.mrf.mxu0
    %v4140 = vadd.f32 0.0, %v4139
    %v4141 = vpop.f32.mrf.mxu0
    %4142 = vmatprep.mubr.f32.mxu0 0.0
    %4143 = vmatmul.mubr.f32.gmra.mxu0 %v3962
    %v4144 = vpop.f32.mrf.mxu0
    %v4145 = vadd.f32 0.0, %v4144
    %v4146 = vpop.f32.mrf.mxu0
    %4147 = vmatprep.mubr.f32.mxu0 0.0
    %4148 = vmatmul.mubr.f32.gmra.mxu0 %v3965
    %v4149 = vpop.f32.mrf.mxu0
    %v4150 = vadd.f32 0.0, %v4149
    %v4151 = vpop.f32.mrf.mxu0
    %4152 = vmatprep.mubr.f32.mxu0 0.0
    %4153 = vmatmul.mubr.f32.gmra.mxu0 %v3968
    %v4154 = vpop.f32.mrf.mxu0
    %v4155 = vadd.f32 0.0, %v4154
    %v4156 = vpop.f32.mrf.mxu0
    %4157 = vmatprep.mubr.f32.mxu0 0.0
    %4158 = vmatmul.mubr.f32.gmra.mxu0 %v3971
    %v4159 = vpop.f32.mrf.mxu0
    %v4160 = vadd.f32 0.0, %v4159
    %v4161 = vpop.f32.mrf.mxu0
    %4162 = vmatprep.mubr.f32.mxu0 0.0
    %4163 = vmatmul.mubr.f32.gmra.mxu0 %v3974
    %v4164 = vpop.f32.mrf.mxu0
    %v4165 = vadd.f32 0.0, %v4164
    %v4166 = vpop.f32.mrf.mxu0
    %4167 = vmatprep.mubr.f32.mxu0 0.0
    %4168 = vmatmul.mubr.f32.gmra.mxu0 %v3977
    %v4169 = vpop.f32.mrf.mxu0
    %v4170 = vadd.f32 0.0, %v4169
    %v4171 = vpop.f32.mrf.mxu0
    %4172 = vmatprep.mubr.f32.mxu0 0.0
    %4173 = vmatmul.mubr.f32.gmra.mxu0 %v3980
    %v4174 = vpop.f32.mrf.mxu0
    %v4175 = vadd.f32 0.0, %v4174
    %v4176 = vpop.f32.mrf.mxu0
    %4177 = vmatprep.mubr.f32.mxu0 0.0
    %4178 = vmatmul.mubr.f32.gmra.mxu0 %v3983
    %v4179 = vpop.f32.mrf.mxu0
    %v4180 = vadd.f32 0.0, %v4179
    %v4181 = vpop.f32.mrf.mxu0
    %4182 = vmatprep.mubr.f32.mxu0 0.0
    %4183 = vmatmul.mubr.f32.gmra.mxu0 %v3986
    %v4184 = vpop.f32.mrf.mxu0
    %v4185 = vadd.f32 0.0, %v4184
    %v4186 = vpop.f32.mrf.mxu0
    %4187 = vdwg.mxu0
    %s4188 = scalar_lea.vmem %s5, 32
    %v4189 = vld [vmem:[%s4188] sm:$0xff]
    %v4190 = vld [vmem:[%s4188 + $0x8] sm:$0xff]
    %v4191 = vld [vmem:[%s4188 + $0x10] sm:$0xff]
    %v4192 = vld [vmem:[%s4188 + $0x18] sm:$0xff]
    %4193 = vmatprep.subr.mxu0 0.0
    %4194 = vmatpush1.msra.mxu0 0.0
    %4195 = vmatprep.subr.mxu0 0.0
    %4196 = vmatpush1.msra.mxu0 0.0
    %4197 = vmatprep.subr.mxu0 0.0
    %4198 = vmatpush1.msra.mxu0 0.0
    %4199 = vmatprep.subr.mxu0 0.0
    %4200 = vmatpush1.msra.mxu0 0.0
    %4201 = vmatprep.subr.mxu0 0.0
    %4202 = vmatpush1.msra.mxu0 0.0
    %4203 = vmatprep.subr.mxu0 0.0
    %4204 = vmatpush1.msra.mxu0 0.0
    %4205 = vmatprep.subr.mxu0 0.0
    %4206 = vmatpush1.msra.mxu0 0.0
    %4207 = vmatprep.subr.mxu0 0.0
    %4208 = vmatpush1.msra.mxu0 0.0
    %4209 = vmatprep.subr.mxu0 0.0
    %4210 = vmatpush1.msra.mxu0 0.0
    %4211 = vmatprep.subr.mxu0 0.0
    %4212 = vmatpush1.msra.mxu0 0.0
    %4213 = vmatprep.subr.mxu0 0.0
    %4214 = vmatpush1.msra.mxu0 0.0
    %4215 = vmatprep.subr.mxu0 0.0
    %4216 = vmatpush1.msra.mxu0 0.0
    %4217 = vmatprep.subr.mxu0 0.0
    %4218 = vmatpush1.msra.mxu0 %v4192
    %4219 = vmatprep.subr.mxu0 0.0
    %4220 = vmatpush1.msra.mxu0 %v4191
    %4221 = vmatprep.subr.mxu0 0.0
    %4222 = vmatpush1.msra.mxu0 %v4190
    %4223 = vmatprep.subr.mxu0 0.0
    %4224 = vmatpush1.msra.mxu0 %v4189
    %4225 = vmatprep.subr.mxu0 0.0
    %4226 = vmatpush2.msra.mxu0 0.0
    %4227 = vmatprep.subr.mxu0 0.0
    %4228 = vmatpush2.msra.mxu0 0.0
    %4229 = vmatprep.subr.mxu0 0.0
    %4230 = vmatpush2.msra.mxu0 0.0
    %4231 = vmatprep.subr.mxu0 0.0
    %4232 = vmatpush2.msra.mxu0 0.0
    %4233 = vmatprep.subr.mxu0 0.0
    %4234 = vmatpush2.msra.mxu0 0.0
    %4235 = vmatprep.subr.mxu0 0.0
    %4236 = vmatpush2.msra.mxu0 0.0
    %4237 = vmatprep.subr.mxu0 0.0
    %4238 = vmatpush2.msra.mxu0 0.0
    %4239 = vmatprep.subr.mxu0 0.0
    %4240 = vmatpush2.msra.mxu0 0.0
    %4241 = vmatprep.subr.mxu0 0.0
    %4242 = vmatpush2.msra.mxu0 0.0
    %4243 = vmatprep.subr.mxu0 0.0
    %4244 = vmatpush2.msra.mxu0 0.0
    %4245 = vmatprep.subr.mxu0 0.0
    %4246 = vmatpush2.msra.mxu0 0.0
    %4247 = vmatprep.subr.mxu0 0.0
    %4248 = vmatpush2.msra.mxu0 0.0
    %4249 = vmatprep.subr.mxu0 0.0
    %4250 = vmatpush2.msra.mxu0 0.0
    %4251 = vmatprep.subr.mxu0 0.0
    %4252 = vmatpush2.msra.mxu0 0.0
    %4253 = vmatprep.subr.mxu0 0.0
    %4254 = vmatpush2.msra.mxu0 0.0
    %4255 = vmatprep.subr.mxu0 0.0
    %4256 = vmatpush2.msra.mxu0 0.0
    %4257 = vmatprep.mubr.f32.mxu0 0.0
    %4258 = vmatmul.mubr.f32.gmra.mxu0 %v3908
    %v4259 = vpop.f32.mrf.mxu0
    %v4260 = vadd.f32 0.0, %v4259
    %v4261 = vpop.f32.mrf.mxu0
    %4262 = vmatprep.mubr.f32.mxu0 0.0
    %4263 = vmatmul.mubr.f32.gmra.mxu0 %v3911
    %v4264 = vpop.f32.mrf.mxu0
    %v4265 = vadd.f32 0.0, %v4264
    %v4266 = vpop.f32.mrf.mxu0
    %4267 = vmatprep.mubr.f32.mxu0 0.0
    %4268 = vmatmul.mubr.f32.gmra.mxu0 %v3914
    %v4269 = vpop.f32.mrf.mxu0
    %v4270 = vadd.f32 0.0, %v4269
    %v4271 = vpop.f32.mrf.mxu0
    %4272 = vmatprep.mubr.f32.mxu0 0.0
    %4273 = vmatmul.mubr.f32.gmra.mxu0 %v3917
    %v4274 = vpop.f32.mrf.mxu0
    %v4275 = vadd.f32 0.0, %v4274
    %v4276 = vpop.f32.mrf.mxu0
    %4277 = vmatprep.mubr.f32.mxu0 0.0
    %4278 = vmatmul.mubr.f32.gmra.mxu0 %v3920
    %v4279 = vpop.f32.mrf.mxu0
    %v4280 = vadd.f32 0.0, %v4279
    %v4281 = vpop.f32.mrf.mxu0
    %4282 = vmatprep.mubr.f32.mxu0 0.0
    %4283 = vmatmul.mubr.f32.gmra.mxu0 %v3923
    %v4284 = vpop.f32.mrf.mxu0
    %v4285 = vadd.f32 0.0, %v4284
    %v4286 = vpop.f32.mrf.mxu0
    %4287 = vmatprep.mubr.f32.mxu0 0.0
    %4288 = vmatmul.mubr.f32.gmra.mxu0 %v3926
    %v4289 = vpop.f32.mrf.mxu0
    %v4290 = vadd.f32 0.0, %v4289
    %v4291 = vpop.f32.mrf.mxu0
    %4292 = vmatprep.mubr.f32.mxu0 0.0
    %4293 = vmatmul.mubr.f32.gmra.mxu0 %v3929
    %v4294 = vpop.f32.mrf.mxu0
    %v4295 = vadd.f32 0.0, %v4294
    %v4296 = vpop.f32.mrf.mxu0
    %4297 = vmatprep.mubr.f32.mxu0 0.0
    %4298 = vmatmul.mubr.f32.gmra.mxu0 %v3932
    %v4299 = vpop.f32.mrf.mxu0
    %v4300 = vadd.f32 0.0, %v4299
    %v4301 = vpop.f32.mrf.mxu0
    %4302 = vmatprep.mubr.f32.mxu0 0.0
    %4303 = vmatmul.mubr.f32.gmra.mxu0 %v3935
    %v4304 = vpop.f32.mrf.mxu0
    %v4305 = vadd.f32 0.0, %v4304
    %v4306 = vpop.f32.mrf.mxu0
    %4307 = vmatprep.mubr.f32.mxu0 0.0
    %4308 = vmatmul.mubr.f32.gmra.mxu0 %v3938
    %v4309 = vpop.f32.mrf.mxu0
    %v4310 = vadd.f32 0.0, %v4309
    %v4311 = vpop.f32.mrf.mxu0
    %4312 = vmatprep.mubr.f32.mxu0 0.0
    %4313 = vmatmul.mubr.f32.gmra.mxu0 %v3941
    %v4314 = vpop.f32.mrf.mxu0
    %v4315 = vadd.f32 0.0, %v4314
    %v4316 = vpop.f32.mrf.mxu0
    %4317 = vmatprep.mubr.f32.mxu0 0.0
    %4318 = vmatmul.mubr.f32.gmra.mxu0 %v3944
    %v4319 = vpop.f32.mrf.mxu0
    %v4320 = vadd.f32 0.0, %v4319
    %v4321 = vpop.f32.mrf.mxu0
    %4322 = vmatprep.mubr.f32.mxu0 0.0
    %4323 = vmatmul.mubr.f32.gmra.mxu0 %v3947
    %v4324 = vpop.f32.mrf.mxu0
    %v4325 = vadd.f32 0.0, %v4324
    %v4326 = vpop.f32.mrf.mxu0
    %4327 = vmatprep.mubr.f32.mxu0 0.0
    %4328 = vmatmul.mubr.f32.gmra.mxu0 %v3950
    %v4329 = vpop.f32.mrf.mxu0
    %v4330 = vadd.f32 0.0, %v4329
    %v4331 = vpop.f32.mrf.mxu0
    %4332 = vmatprep.mubr.f32.mxu0 0.0
    %4333 = vmatmul.mubr.f32.gmra.mxu0 %v3953
    %v4334 = vpop.f32.mrf.mxu0
    %v4335 = vadd.f32 0.0, %v4334
    %v4336 = vpop.f32.mrf.mxu0
    %4337 = vmatprep.mubr.f32.mxu0 0.0
    %4338 = vmatmul.mubr.f32.gmra.mxu0 %v3956
    %v4339 = vpop.f32.mrf.mxu0
    %v4340 = vadd.f32 0.0, %v4339
    %v4341 = vpop.f32.mrf.mxu0
    %4342 = vmatprep.mubr.f32.mxu0 0.0
    %4343 = vmatmul.mubr.f32.gmra.mxu0 %v3959
    %v4344 = vpop.f32.mrf.mxu0
    %v4345 = vadd.f32 0.0, %v4344
    %v4346 = vpop.f32.mrf.mxu0
    %4347 = vmatprep.mubr.f32.mxu0 0.0
    %4348 = vmatmul.mubr.f32.gmra.mxu0 %v3962
    %v4349 = vpop.f32.mrf.mxu0
    %v4350 = vadd.f32 0.0, %v4349
    %v4351 = vpop.f32.mrf.mxu0
    %4352 = vmatprep.mubr.f32.mxu0 0.0
    %4353 = vmatmul.mubr.f32.gmra.mxu0 %v3965
    %v4354 = vpop.f32.mrf.mxu0
    %v4355 = vadd.f32 0.0, %v4354
    %v4356 = vpop.f32.mrf.mxu0
    %4357 = vmatprep.mubr.f32.mxu0 0.0
    %4358 = vmatmul.mubr.f32.gmra.mxu0 %v3968
    %v4359 = vpop.f32.mrf.mxu0
    %v4360 = vadd.f32 0.0, %v4359
    %v4361 = vpop.f32.mrf.mxu0
    %4362 = vmatprep.mubr.f32.mxu0 0.0
    %4363 = vmatmul.mubr.f32.gmra.mxu0 %v3971
    %v4364 = vpop.f32.mrf.mxu0
    %v4365 = vadd.f32 0.0, %v4364
    %v4366 = vpop.f32.mrf.mxu0
    %4367 = vmatprep.mubr.f32.mxu0 0.0
    %4368 = vmatmul.mubr.f32.gmra.mxu0 %v3974
    %v4369 = vpop.f32.mrf.mxu0
    %v4370 = vadd.f32 0.0, %v4369
    %v4371 = vpop.f32.mrf.mxu0
    %4372 = vmatprep.mubr.f32.mxu0 0.0
    %4373 = vmatmul.mubr.f32.gmra.mxu0 %v3977
    %v4374 = vpop.f32.mrf.mxu0
    %v4375 = vadd.f32 0.0, %v4374
    %v4376 = vpop.f32.mrf.mxu0
    %4377 = vmatprep.mubr.f32.mxu0 0.0
    %4378 = vmatmul.mubr.f32.gmra.mxu0 %v3980
    %v4379 = vpop.f32.mrf.mxu0
    %v4380 = vadd.f32 0.0, %v4379
    %v4381 = vpop.f32.mrf.mxu0
    %4382 = vmatprep.mubr.f32.mxu0 0.0
    %4383 = vmatmul.mubr.f32.gmra.mxu0 %v3983
    %v4384 = vpop.f32.mrf.mxu0
    %v4385 = vadd.f32 0.0, %v4384
    %v4386 = vpop.f32.mrf.mxu0
    %4387 = vmatprep.mubr.f32.mxu0 0.0
    %4388 = vmatmul.mubr.f32.gmra.mxu0 %v3986
    %v4389 = vpop.f32.mrf.mxu0
    %v4390 = vadd.f32 0.0, %v4389
    %v4391 = vpop.f32.mrf.mxu0
    %4392 = vdwg.mxu0
    %s4393 = scalar_lea.vmem %s5, 64
    %v4394 = vld [vmem:[%s4393] sm:$0xff]
    %v4395 = vld [vmem:[%s4393 + $0x8] sm:$0xff]
    %v4396 = vld [vmem:[%s4393 + $0x10] sm:$0xff]
    %v4397 = vld [vmem:[%s4393 + $0x18] sm:$0xff]
    %4398 = vmatprep.subr.mxu0 0.0
    %4399 = vmatpush1.msra.mxu0 0.0
    %4400 = vmatprep.subr.mxu0 0.0
    %4401 = vmatpush1.msra.mxu0 0.0
    %4402 = vmatprep.subr.mxu0 0.0
    %4403 = vmatpush1.msra.mxu0 0.0
    %4404 = vmatprep.subr.mxu0 0.0
    %4405 = vmatpush1.msra.mxu0 0.0
    %4406 = vmatprep.subr.mxu0 0.0
    %4407 = vmatpush1.msra.mxu0 0.0
    %4408 = vmatprep.subr.mxu0 0.0
    %4409 = vmatpush1.msra.mxu0 0.0
    %4410 = vmatprep.subr.mxu0 0.0
    %4411 = vmatpush1.msra.mxu0 0.0
    %4412 = vmatprep.subr.mxu0 0.0
    %4413 = vmatpush1.msra.mxu0 0.0
    %4414 = vmatprep.subr.mxu0 0.0
    %4415 = vmatpush1.msra.mxu0 0.0
    %4416 = vmatprep.subr.mxu0 0.0
    %4417 = vmatpush1.msra.mxu0 0.0
    %4418 = vmatprep.subr.mxu0 0.0
    %4419 = vmatpush1.msra.mxu0 0.0
    %4420 = vmatprep.subr.mxu0 0.0
    %4421 = vmatpush1.msra.mxu0 0.0
    %4422 = vmatprep.subr.mxu0 0.0
    %4423 = vmatpush1.msra.mxu0 %v4397
    %4424 = vmatprep.subr.mxu0 0.0
    %4425 = vmatpush1.msra.mxu0 %v4396
    %4426 = vmatprep.subr.mxu0 0.0
    %4427 = vmatpush1.msra.mxu0 %v4395
    %4428 = vmatprep.subr.mxu0 0.0
    %4429 = vmatpush1.msra.mxu0 %v4394
    %4430 = vmatprep.subr.mxu0 0.0
    %4431 = vmatpush2.msra.mxu0 0.0
    %4432 = vmatprep.subr.mxu0 0.0
    %4433 = vmatpush2.msra.mxu0 0.0
    %4434 = vmatprep.subr.mxu0 0.0
    %4435 = vmatpush2.msra.mxu0 0.0
    %4436 = vmatprep.subr.mxu0 0.0
    %4437 = vmatpush2.msra.mxu0 0.0
    %4438 = vmatprep.subr.mxu0 0.0
    %4439 = vmatpush2.msra.mxu0 0.0
    %4440 = vmatprep.subr.mxu0 0.0
    %4441 = vmatpush2.msra.mxu0 0.0
    %4442 = vmatprep.subr.mxu0 0.0
    %4443 = vmatpush2.msra.mxu0 0.0
    %4444 = vmatprep.subr.mxu0 0.0
    %4445 = vmatpush2.msra.mxu0 0.0
    %4446 = vmatprep.subr.mxu0 0.0
    %4447 = vmatpush2.msra.mxu0 0.0
    %4448 = vmatprep.subr.mxu0 0.0
    %4449 = vmatpush2.msra.mxu0 0.0
    %4450 = vmatprep.subr.mxu0 0.0
    %4451 = vmatpush2.msra.mxu0 0.0
    %4452 = vmatprep.subr.mxu0 0.0
    %4453 = vmatpush2.msra.mxu0 0.0
    %4454 = vmatprep.subr.mxu0 0.0
    %4455 = vmatpush2.msra.mxu0 0.0
    %4456 = vmatprep.subr.mxu0 0.0
    %4457 = vmatpush2.msra.mxu0 0.0
    %4458 = vmatprep.subr.mxu0 0.0
    %4459 = vmatpush2.msra.mxu0 0.0
    %4460 = vmatprep.subr.mxu0 0.0
    %4461 = vmatpush2.msra.mxu0 0.0
    %4462 = vmatprep.mubr.f32.mxu0 0.0
    %4463 = vmatmul.mubr.f32.gmra.mxu0 %v3908
    %v4464 = vpop.f32.mrf.mxu0
    %v4465 = vadd.f32 0.0, %v4464
    %v4466 = vpop.f32.mrf.mxu0
    %4467 = vmatprep.mubr.f32.mxu0 0.0
    %4468 = vmatmul.mubr.f32.gmra.mxu0 %v3911
    %v4469 = vpop.f32.mrf.mxu0
    %v4470 = vadd.f32 0.0, %v4469
    %v4471 = vpop.f32.mrf.mxu0
    %4472 = vmatprep.mubr.f32.mxu0 0.0
    %4473 = vmatmul.mubr.f32.gmra.mxu0 %v3914
    %v4474 = vpop.f32.mrf.mxu0
    %v4475 = vadd.f32 0.0, %v4474
    %v4476 = vpop.f32.mrf.mxu0
    %4477 = vmatprep.mubr.f32.mxu0 0.0
    %4478 = vmatmul.mubr.f32.gmra.mxu0 %v3917
    %v4479 = vpop.f32.mrf.mxu0
    %v4480 = vadd.f32 0.0, %v4479
    %v4481 = vpop.f32.mrf.mxu0
    %4482 = vmatprep.mubr.f32.mxu0 0.0
    %4483 = vmatmul.mubr.f32.gmra.mxu0 %v3920
    %v4484 = vpop.f32.mrf.mxu0
    %v4485 = vadd.f32 0.0, %v4484
    %v4486 = vpop.f32.mrf.mxu0
    %4487 = vmatprep.mubr.f32.mxu0 0.0
    %4488 = vmatmul.mubr.f32.gmra.mxu0 %v3923
    %v4489 = vpop.f32.mrf.mxu0
    %v4490 = vadd.f32 0.0, %v4489
    %v4491 = vpop.f32.mrf.mxu0
    %4492 = vmatprep.mubr.f32.mxu0 0.0
    %4493 = vmatmul.mubr.f32.gmra.mxu0 %v3926
    %v4494 = vpop.f32.mrf.mxu0
    %v4495 = vadd.f32 0.0, %v4494
    %v4496 = vpop.f32.mrf.mxu0
    %4497 = vmatprep.mubr.f32.mxu0 0.0
    %4498 = vmatmul.mubr.f32.gmra.mxu0 %v3929
    %v4499 = vpop.f32.mrf.mxu0
    %v4500 = vadd.f32 0.0, %v4499
    %v4501 = vpop.f32.mrf.mxu0
    %4502 = vmatprep.mubr.f32.mxu0 0.0
    %4503 = vmatmul.mubr.f32.gmra.mxu0 %v3932
    %v4504 = vpop.f32.mrf.mxu0
    %v4505 = vadd.f32 0.0, %v4504
    %v4506 = vpop.f32.mrf.mxu0
    %4507 = vmatprep.mubr.f32.mxu0 0.0
    %4508 = vmatmul.mubr.f32.gmra.mxu0 %v3935
    %v4509 = vpop.f32.mrf.mxu0
    %v4510 = vadd.f32 0.0, %v4509
    %v4511 = vpop.f32.mrf.mxu0
    %4512 = vmatprep.mubr.f32.mxu0 0.0
    %4513 = vmatmul.mubr.f32.gmra.mxu0 %v3938
    %v4514 = vpop.f32.mrf.mxu0
    %v4515 = vadd.f32 0.0, %v4514
    %v4516 = vpop.f32.mrf.mxu0
    %4517 = vmatprep.mubr.f32.mxu0 0.0
    %4518 = vmatmul.mubr.f32.gmra.mxu0 %v3941
    %v4519 = vpop.f32.mrf.mxu0
    %v4520 = vadd.f32 0.0, %v4519
    %v4521 = vpop.f32.mrf.mxu0
    %4522 = vmatprep.mubr.f32.mxu0 0.0
    %4523 = vmatmul.mubr.f32.gmra.mxu0 %v3944
    %v4524 = vpop.f32.mrf.mxu0
    %v4525 = vadd.f32 0.0, %v4524
    %v4526 = vpop.f32.mrf.mxu0
    %4527 = vmatprep.mubr.f32.mxu0 0.0
    %4528 = vmatmul.mubr.f32.gmra.mxu0 %v3947
    %v4529 = vpop.f32.mrf.mxu0
    %v4530 = vadd.f32 0.0, %v4529
    %v4531 = vpop.f32.mrf.mxu0
    %4532 = vmatprep.mubr.f32.mxu0 0.0
    %4533 = vmatmul.mubr.f32.gmra.mxu0 %v3950
    %v4534 = vpop.f32.mrf.mxu0
    %v4535 = vadd.f32 0.0, %v4534
    %v4536 = vpop.f32.mrf.mxu0
    %4537 = vmatprep.mubr.f32.mxu0 0.0
    %4538 = vmatmul.mubr.f32.gmra.mxu0 %v3953
    %v4539 = vpop.f32.mrf.mxu0
    %v4540 = vadd.f32 0.0, %v4539
    %v4541 = vpop.f32.mrf.mxu0
    %4542 = vmatprep.mubr.f32.mxu0 0.0
    %4543 = vmatmul.mubr.f32.gmra.mxu0 %v3956
    %v4544 = vpop.f32.mrf.mxu0
    %v4545 = vadd.f32 0.0, %v4544
    %v4546 = vpop.f32.mrf.mxu0
    %4547 = vmatprep.mubr.f32.mxu0 0.0
    %4548 = vmatmul.mubr.f32.gmra.mxu0 %v3959
    %v4549 = vpop.f32.mrf.mxu0
    %v4550 = vadd.f32 0.0, %v4549
    %v4551 = vpop.f32.mrf.mxu0
    %4552 = vmatprep.mubr.f32.mxu0 0.0
    %4553 = vmatmul.mubr.f32.gmra.mxu0 %v3962
    %v4554 = vpop.f32.mrf.mxu0
    %v4555 = vadd.f32 0.0, %v4554
    %v4556 = vpop.f32.mrf.mxu0
    %4557 = vmatprep.mubr.f32.mxu0 0.0
    %4558 = vmatmul.mubr.f32.gmra.mxu0 %v3965
    %v4559 = vpop.f32.mrf.mxu0
    %v4560 = vadd.f32 0.0, %v4559
    %v4561 = vpop.f32.mrf.mxu0
    %4562 = vmatprep.mubr.f32.mxu0 0.0
    %4563 = vmatmul.mubr.f32.gmra.mxu0 %v3968
    %v4564 = vpop.f32.mrf.mxu0
    %v4565 = vadd.f32 0.0, %v4564
    %v4566 = vpop.f32.mrf.mxu0
    %4567 = vmatprep.mubr.f32.mxu0 0.0
    %4568 = vmatmul.mubr.f32.gmra.mxu0 %v3971
    %v4569 = vpop.f32.mrf.mxu0
    %v4570 = vadd.f32 0.0, %v4569
    %v4571 = vpop.f32.mrf.mxu0
    %4572 = vmatprep.mubr.f32.mxu0 0.0
    %4573 = vmatmul.mubr.f32.gmra.mxu0 %v3974
    %v4574 = vpop.f32.mrf.mxu0
    %v4575 = vadd.f32 0.0, %v4574
    %v4576 = vpop.f32.mrf.mxu0
    %4577 = vmatprep.mubr.f32.mxu0 0.0
    %4578 = vmatmul.mubr.f32.gmra.mxu0 %v3977
    %v4579 = vpop.f32.mrf.mxu0
    %v4580 = vadd.f32 0.0, %v4579
    %v4581 = vpop.f32.mrf.mxu0
    %4582 = vmatprep.mubr.f32.mxu0 0.0
    %4583 = vmatmul.mubr.f32.gmra.mxu0 %v3980
    %v4584 = vpop.f32.mrf.mxu0
    %v4585 = vadd.f32 0.0, %v4584
    %v4586 = vpop.f32.mrf.mxu0
    %4587 = vmatprep.mubr.f32.mxu0 0.0
    %4588 = vmatmul.mubr.f32.gmra.mxu0 %v3983
    %v4589 = vpop.f32.mrf.mxu0
    %v4590 = vadd.f32 0.0, %v4589
    %v4591 = vpop.f32.mrf.mxu0
    %4592 = vmatprep.mubr.f32.mxu0 0.0
    %4593 = vmatmul.mubr.f32.gmra.mxu0 %v3986
    %v4594 = vpop.f32.mrf.mxu0
    %v4595 = vadd.f32 0.0, %v4594
    %v4596 = vpop.f32.mrf.mxu0
    %4597 = vdwg.mxu0
    %v4598 = vrot.slane %v4055, 7
    %v4599 = vrot.slane %v4060, 7
    %v4600 = vrot.slane %v4065, 7
    %v4601 = vrot.slane %v4070, 7
    %v4602 = vrot.slane %v4075, 7
    %v4603 = vrot.slane %v4080, 7
    %v4604 = vrot.slane %v4085, 7
    %v4605 = vrot.slane %v4090, 7
    %v4606 = vrot.slane %v4095, 7
    %v4607 = vrot.slane %v4100, 7
    %v4608 = vrot.slane %v4105, 7
    %v4609 = vrot.slane %v4110, 7
    %v4610 = vrot.slane %v4115, 7
    %v4611 = vrot.slane %v4120, 7
    %v4612 = vrot.slane %v4125, 7
    %v4613 = vrot.slane %v4130, 7
    %v4614 = vrot.slane %v4135, 7
    %v4615 = vrot.slane %v4140, 7
    %v4616 = vrot.slane %v4145, 7
    %v4617 = vrot.slane %v4150, 7
    %v4618 = vrot.slane %v4155, 7
    %v4619 = vrot.slane %v4160, 7
    %v4620 = vrot.slane %v4165, 7
    %v4621 = vrot.slane %v4170, 7
    %v4622 = vrot.slane %v4175, 7
    %v4623 = vrot.slane %v4180, 7
    %v4624 = vrot.slane %v4185, 7
    %v4625 = vsel %vm1896, %v4623, %v4624
    %v4626 = vsel %vm1896, %v4622, %v4623
    %v4627 = vsel %vm1896, %v4621, %v4622
    %v4628 = vsel %vm1896, %v4620, %v4621
    %v4629 = vsel %vm1896, %v4619, %v4620
    %v4630 = vsel %vm1896, %v4618, %v4619
    %v4631 = vsel %vm1896, %v4617, %v4618
    %v4632 = vsel %vm1896, %v4616, %v4617
    %v4633 = vsel %vm1896, %v4615, %v4616
    %v4634 = vsel %vm1896, %v4614, %v4615
    %v4635 = vsel %vm1896, %v4613, %v4614
    %v4636 = vsel %vm1896, %v4612, %v4613
    %v4637 = vsel %vm1896, %v4611, %v4612
    %v4638 = vsel %vm1896, %v4610, %v4611
    %v4639 = vsel %vm1896, %v4609, %v4610
    %v4640 = vsel %vm1896, %v4608, %v4609
    %v4641 = vsel %vm1896, %v4607, %v4608
    %v4642 = vsel %vm1896, %v4606, %v4607
    %v4643 = vsel %vm1896, %v4605, %v4606
    %v4644 = vsel %vm1896, %v4604, %v4605
    %v4645 = vsel %vm1896, %v4603, %v4604
    %v4646 = vsel %vm1896, %v4602, %v4603
    %v4647 = vsel %vm1896, %v4601, %v4602
    %v4648 = vsel %vm1896, %v4600, %v4601
    %v4649 = vsel %vm1896, %v4599, %v4600
    %v4650 = vsel %vm1896, %v4598, %v4599
    %v4651 = vsel %vm1896, %v4624, %v4598
    %v4652 = vld [vmem:[%s7] sm:$0xff]
    %v4653 = vld [vmem:[%s7 + $0x8] sm:$0xff]
    %v4654 = vld [vmem:[%s7 + $0x10] sm:$0xff]
    %v4655 = vld [vmem:[%s7 + $0x18] sm:$0xff]
    %v4656 = vld [vmem:[%s7 + $0x20] sm:$0xff]
    %v4657 = vld [vmem:[%s7 + $0x28] sm:$0xff]
    %v4658 = vld [vmem:[%s7 + $0x30] sm:$0xff]
    %v4659 = vld [vmem:[%s7 + $0x38] sm:$0xff]
    %v4660 = vld [vmem:[%s7 + $0x40] sm:$0xff]
    %v4661 = vld [vmem:[%s7 + $0x48] sm:$0xff]
    %v4662 = vld [vmem:[%s7 + $0x50] sm:$0xff]
    %v4663 = vld [vmem:[%s7 + $0x58] sm:$0xff]
    %v4664 = vld [vmem:[%s7 + $0x60] sm:$0xff]
    %v4665 = vld [vmem:[%s7 + $0x68] sm:$0xff]
    %v4666 = vld [vmem:[%s7 + $0x70] sm:$0xff]
    %v4667 = vld [vmem:[%s7 + $0x78] sm:$0xff]
    %v4668 = vld [vmem:[%s7 + $0x80] sm:$0xff]
    %v4669 = vld [vmem:[%s7 + $0x88] sm:$0xff]
    %v4670 = vld [vmem:[%s7 + $0x90] sm:$0xff]
    %v4671 = vld [vmem:[%s7 + $0x98] sm:$0xff]
    %v4672 = vld [vmem:[%s7 + $0xa0] sm:$0xff]
    %v4673 = vld [vmem:[%s7 + $0xa8] sm:$0xff]
    %v4674 = vld [vmem:[%s7 + $0xb0] sm:$0xff]
    %v4675 = vld [vmem:[%s7 + $0xb8] sm:$0xff]
    %v4676 = vld [vmem:[%s7 + $0xc0] sm:$0xff]
    %v4677 = vld [vmem:[%s7 + $0xc8] sm:$0xff]
    %v4678 = vld [vmem:[%s7 + $0xd0] sm:$0xff]
    %4680 = vset.pattern.permute.xlu0 0
    %4681 = vperm.xlu0 %4680, %v4652
    %v4682 = vpop.permute.xlu0 %4681
    %4685 = vset.pattern.permute.xlu0 0
    %4686 = vperm.xlu0 %4685, %v4653
    %v4687 = vpop.permute.xlu0 %4686
    %4690 = vset.pattern.permute.xlu0 0
    %4691 = vperm.xlu0 %4690, %v4654
    %v4692 = vpop.permute.xlu0 %4691
    %4695 = vset.pattern.permute.xlu0 0
    %4696 = vperm.xlu0 %4695, %v4655
    %v4697 = vpop.permute.xlu0 %4696
    %4700 = vset.pattern.permute.xlu0 0
    %4701 = vperm.xlu0 %4700, %v4656
    %v4702 = vpop.permute.xlu0 %4701
    %4705 = vset.pattern.permute.xlu0 0
    %4706 = vperm.xlu0 %4705, %v4657
    %v4707 = vpop.permute.xlu0 %4706
    %4710 = vset.pattern.permute.xlu0 0
    %4711 = vperm.xlu0 %4710, %v4658
    %v4712 = vpop.permute.xlu0 %4711
    %4715 = vset.pattern.permute.xlu0 0
    %4716 = vperm.xlu0 %4715, %v4659
    %v4717 = vpop.permute.xlu0 %4716
    %4720 = vset.pattern.permute.xlu0 0
    %4721 = vperm.xlu0 %4720, %v4660
    %v4722 = vpop.permute.xlu0 %4721
    %4725 = vset.pattern.permute.xlu0 0
    %4726 = vperm.xlu0 %4725, %v4661
    %v4727 = vpop.permute.xlu0 %4726
    %4730 = vset.pattern.permute.xlu0 0
    %4731 = vperm.xlu0 %4730, %v4662
    %v4732 = vpop.permute.xlu0 %4731
    %4735 = vset.pattern.permute.xlu0 0
    %4736 = vperm.xlu0 %4735, %v4663
    %v4737 = vpop.permute.xlu0 %4736
    %4740 = vset.pattern.permute.xlu0 0
    %4741 = vperm.xlu0 %4740, %v4664
    %v4742 = vpop.permute.xlu0 %4741
    %4745 = vset.pattern.permute.xlu0 0
    %4746 = vperm.xlu0 %4745, %v4665
    %v4747 = vpop.permute.xlu0 %4746
    %4750 = vset.pattern.permute.xlu0 0
    %4751 = vperm.xlu0 %4750, %v4666
    %v4752 = vpop.permute.xlu0 %4751
    %4755 = vset.pattern.permute.xlu0 0
    %4756 = vperm.xlu0 %4755, %v4667
    %v4757 = vpop.permute.xlu0 %4756
    %4760 = vset.pattern.permute.xlu0 0
    %4761 = vperm.xlu0 %4760, %v4668
    %v4762 = vpop.permute.xlu0 %4761
    %4765 = vset.pattern.permute.xlu0 0
    %4766 = vperm.xlu0 %4765, %v4669
    %v4767 = vpop.permute.xlu0 %4766
    %4770 = vset.pattern.permute.xlu0 0
    %4771 = vperm.xlu0 %4770, %v4670
    %v4772 = vpop.permute.xlu0 %4771
    %4775 = vset.pattern.permute.xlu0 0
    %4776 = vperm.xlu0 %4775, %v4671
    %v4777 = vpop.permute.xlu0 %4776
    %4780 = vset.pattern.permute.xlu0 0
    %4781 = vperm.xlu0 %4780, %v4672
    %v4782 = vpop.permute.xlu0 %4781
    %4785 = vset.pattern.permute.xlu0 0
    %4786 = vperm.xlu0 %4785, %v4673
    %v4787 = vpop.permute.xlu0 %4786
    %4790 = vset.pattern.permute.xlu0 0
    %4791 = vperm.xlu0 %4790, %v4674
    %v4792 = vpop.permute.xlu0 %4791
    %4795 = vset.pattern.permute.xlu0 0
    %4796 = vperm.xlu0 %4795, %v4675
    %v4797 = vpop.permute.xlu0 %4796
    %4800 = vset.pattern.permute.xlu0 0
    %4801 = vperm.xlu0 %4800, %v4676
    %v4802 = vpop.permute.xlu0 %4801
    %4805 = vset.pattern.permute.xlu0 0
    %4806 = vperm.xlu0 %4805, %v4677
    %v4807 = vpop.permute.xlu0 %4806
    %4810 = vset.pattern.permute.xlu0 0
    %4811 = vperm.xlu0 %4810, %v4678
    %v4812 = vpop.permute.xlu0 %4811
    %v4814 = vmul.f32 %v4651, %v4682
    %v4815 = vmul.f32 %v4650, %v4687
    %v4816 = vmul.f32 %v4649, %v4692
    %v4817 = vmul.f32 %v4648, %v4697
    %v4818 = vmul.f32 %v4647, %v4702
    %v4819 = vmul.f32 %v4646, %v4707
    %v4820 = vmul.f32 %v4645, %v4712
    %v4821 = vmul.f32 %v4644, %v4717
    %v4822 = vmul.f32 %v4643, %v4722
    %v4823 = vmul.f32 %v4642, %v4727
    %v4824 = vmul.f32 %v4641, %v4732
    %v4825 = vmul.f32 %v4640, %v4737
    %v4826 = vmul.f32 %v4639, %v4742
    %v4827 = vmul.f32 %v4638, %v4747
    %v4828 = vmul.f32 %v4637, %v4752
    %v4829 = vmul.f32 %v4636, %v4757
    %v4830 = vmul.f32 %v4635, %v4762
    %v4831 = vmul.f32 %v4634, %v4767
    %v4832 = vmul.f32 %v4633, %v4772
    %v4833 = vmul.f32 %v4632, %v4777
    %v4834 = vmul.f32 %v4631, %v4782
    %v4835 = vmul.f32 %v4630, %v4787
    %v4836 = vmul.f32 %v4629, %v4792
    %v4837 = vmul.f32 %v4628, %v4797
    %v4838 = vmul.f32 %v4627, %v4802
    %v4839 = vmul.f32 %v4626, %v4807
    %v4840 = vmul.f32 %v4625, %v4812
    %v4841 = vadd.f32 %v4814, %v4260
    %v4842 = vadd.f32 %v4815, %v4265
    %v4843 = vadd.f32 %v4816, %v4270
    %v4844 = vadd.f32 %v4817, %v4275
    %v4845 = vadd.f32 %v4818, %v4280
    %v4846 = vadd.f32 %v4819, %v4285
    %v4847 = vadd.f32 %v4820, %v4290
    %v4848 = vadd.f32 %v4821, %v4295
    %v4849 = vadd.f32 %v4822, %v4300
    %v4850 = vadd.f32 %v4823, %v4305
    %v4851 = vadd.f32 %v4824, %v4310
    %v4852 = vadd.f32 %v4825, %v4315
    %v4853 = vadd.f32 %v4826, %v4320
    %v4854 = vadd.f32 %v4827, %v4325
    %v4855 = vadd.f32 %v4828, %v4330
    %v4856 = vadd.f32 %v4829, %v4335
    %v4857 = vadd.f32 %v4830, %v4340
    %v4858 = vadd.f32 %v4831, %v4345
    %v4859 = vadd.f32 %v4832, %v4350
    %v4860 = vadd.f32 %v4833, %v4355
    %v4861 = vadd.f32 %v4834, %v4360
    %v4862 = vadd.f32 %v4835, %v4365
    %v4863 = vadd.f32 %v4836, %v4370
    %v4864 = vadd.f32 %v4837, %v4375
    %v4865 = vadd.f32 %v4838, %v4380
    %v4866 = vadd.f32 %v4839, %v4385
    %v4867 = vadd.f32 %v4840, %v4390
    %v4868 = vrot.slane %v4465, 1
    %v4869 = vrot.slane %v4470, 1
    %v4870 = vrot.slane %v4475, 1
    %v4871 = vrot.slane %v4480, 1
    %v4872 = vrot.slane %v4485, 1
    %v4873 = vrot.slane %v4490, 1
    %v4874 = vrot.slane %v4495, 1
    %v4875 = vrot.slane %v4500, 1
    %v4876 = vrot.slane %v4505, 1
    %v4877 = vrot.slane %v4510, 1
    %v4878 = vrot.slane %v4515, 1
    %v4879 = vrot.slane %v4520, 1
    %v4880 = vrot.slane %v4525, 1
    %v4881 = vrot.slane %v4530, 1
    %v4882 = vrot.slane %v4535, 1
    %v4883 = vrot.slane %v4540, 1
    %v4884 = vrot.slane %v4545, 1
    %v4885 = vrot.slane %v4550, 1
    %v4886 = vrot.slane %v4555, 1
    %v4887 = vrot.slane %v4560, 1
    %v4888 = vrot.slane %v4565, 1
    %v4889 = vrot.slane %v4570, 1
    %v4890 = vrot.slane %v4575, 1
    %v4891 = vrot.slane %v4580, 1
    %v4892 = vrot.slane %v4585, 1
    %v4893 = vrot.slane %v4590, 1
    %v4894 = vrot.slane %v4595, 1
    %v4895 = vsel %vm2707, %v4893, %v4894
    %v4896 = vsel %vm2707, %v4892, %v4893
    %v4897 = vsel %vm2707, %v4891, %v4892
    %v4898 = vsel %vm2707, %v4890, %v4891
    %v4899 = vsel %vm2707, %v4889, %v4890
    %v4900 = vsel %vm2707, %v4888, %v4889
    %v4901 = vsel %vm2707, %v4887, %v4888
    %v4902 = vsel %vm2707, %v4886, %v4887
    %v4903 = vsel %vm2707, %v4885, %v4886
    %v4904 = vsel %vm2707, %v4884, %v4885
    %v4905 = vsel %vm2707, %v4883, %v4884
    %v4906 = vsel %vm2707, %v4882, %v4883
    %v4907 = vsel %vm2707, %v4881, %v4882
    %v4908 = vsel %vm2707, %v4880, %v4881
    %v4909 = vsel %vm2707, %v4879, %v4880
    %v4910 = vsel %vm2707, %v4878, %v4879
    %v4911 = vsel %vm2707, %v4877, %v4878
    %v4912 = vsel %vm2707, %v4876, %v4877
    %v4913 = vsel %vm2707, %v4875, %v4876
    %v4914 = vsel %vm2707, %v4874, %v4875
    %v4915 = vsel %vm2707, %v4873, %v4874
    %v4916 = vsel %vm2707, %v4872, %v4873
    %v4917 = vsel %vm2707, %v4871, %v4872
    %v4918 = vsel %vm2707, %v4870, %v4871
    %v4919 = vsel %vm2707, %v4869, %v4870
    %v4920 = vsel %vm2707, %v4868, %v4869
    %v4921 = vsel %vm2707, %v4894, %v4868
    %v4922 = vld [vmem:[%s8] sm:$0xff]
    %v4923 = vld [vmem:[%s8 + $0x8] sm:$0xff]
    %v4924 = vld [vmem:[%s8 + $0x10] sm:$0xff]
    %v4925 = vld [vmem:[%s8 + $0x18] sm:$0xff]
    %v4926 = vld [vmem:[%s8 + $0x20] sm:$0xff]
    %v4927 = vld [vmem:[%s8 + $0x28] sm:$0xff]
    %v4928 = vld [vmem:[%s8 + $0x30] sm:$0xff]
    %v4929 = vld [vmem:[%s8 + $0x38] sm:$0xff]
    %v4930 = vld [vmem:[%s8 + $0x40] sm:$0xff]
    %v4931 = vld [vmem:[%s8 + $0x48] sm:$0xff]
    %v4932 = vld [vmem:[%s8 + $0x50] sm:$0xff]
    %v4933 = vld [vmem:[%s8 + $0x58] sm:$0xff]
    %v4934 = vld [vmem:[%s8 + $0x60] sm:$0xff]
    %v4935 = vld [vmem:[%s8 + $0x68] sm:$0xff]
    %v4936 = vld [vmem:[%s8 + $0x70] sm:$0xff]
    %v4937 = vld [vmem:[%s8 + $0x78] sm:$0xff]
    %v4938 = vld [vmem:[%s8 + $0x80] sm:$0xff]
    %v4939 = vld [vmem:[%s8 + $0x88] sm:$0xff]
    %v4940 = vld [vmem:[%s8 + $0x90] sm:$0xff]
    %v4941 = vld [vmem:[%s8 + $0x98] sm:$0xff]
    %v4942 = vld [vmem:[%s8 + $0xa0] sm:$0xff]
    %v4943 = vld [vmem:[%s8 + $0xa8] sm:$0xff]
    %v4944 = vld [vmem:[%s8 + $0xb0] sm:$0xff]
    %v4945 = vld [vmem:[%s8 + $0xb8] sm:$0xff]
    %v4946 = vld [vmem:[%s8 + $0xc0] sm:$0xff]
    %v4947 = vld [vmem:[%s8 + $0xc8] sm:$0xff]
    %v4948 = vld [vmem:[%s8 + $0xd0] sm:$0xff]
    %4950 = vset.pattern.permute.xlu0 0
    %4951 = vperm.xlu0 %4950, %v4922
    %v4952 = vpop.permute.xlu0 %4951
    %4955 = vset.pattern.permute.xlu0 0
    %4956 = vperm.xlu0 %4955, %v4923
    %v4957 = vpop.permute.xlu0 %4956
    %4960 = vset.pattern.permute.xlu0 0
    %4961 = vperm.xlu0 %4960, %v4924
    %v4962 = vpop.permute.xlu0 %4961
    %4965 = vset.pattern.permute.xlu0 0
    %4966 = vperm.xlu0 %4965, %v4925
    %v4967 = vpop.permute.xlu0 %4966
    %4970 = vset.pattern.permute.xlu0 0
    %4971 = vperm.xlu0 %4970, %v4926
    %v4972 = vpop.permute.xlu0 %4971
    %4975 = vset.pattern.permute.xlu0 0
    %4976 = vperm.xlu0 %4975, %v4927
    %v4977 = vpop.permute.xlu0 %4976
    %4980 = vset.pattern.permute.xlu0 0
    %4981 = vperm.xlu0 %4980, %v4928
    %v4982 = vpop.permute.xlu0 %4981
    %4985 = vset.pattern.permute.xlu0 0
    %4986 = vperm.xlu0 %4985, %v4929
    %v4987 = vpop.permute.xlu0 %4986
    %4990 = vset.pattern.permute.xlu0 0
    %4991 = vperm.xlu0 %4990, %v4930
    %v4992 = vpop.permute.xlu0 %4991
    %4995 = vset.pattern.permute.xlu0 0
    %4996 = vperm.xlu0 %4995, %v4931
    %v4997 = vpop.permute.xlu0 %4996
    %5000 = vset.pattern.permute.xlu0 0
    %5001 = vperm.xlu0 %5000, %v4932
    %v5002 = vpop.permute.xlu0 %5001
    %5005 = vset.pattern.permute.xlu0 0
    %5006 = vperm.xlu0 %5005, %v4933
    %v5007 = vpop.permute.xlu0 %5006
    %5010 = vset.pattern.permute.xlu0 0
    %5011 = vperm.xlu0 %5010, %v4934
    %v5012 = vpop.permute.xlu0 %5011
    %5015 = vset.pattern.permute.xlu0 0
    %5016 = vperm.xlu0 %5015, %v4935
    %v5017 = vpop.permute.xlu0 %5016
    %5020 = vset.pattern.permute.xlu0 0
    %5021 = vperm.xlu0 %5020, %v4936
    %v5022 = vpop.permute.xlu0 %5021
    %5025 = vset.pattern.permute.xlu0 0
    %5026 = vperm.xlu0 %5025, %v4937
    %v5027 = vpop.permute.xlu0 %5026
    %5030 = vset.pattern.permute.xlu0 0
    %5031 = vperm.xlu0 %5030, %v4938
    %v5032 = vpop.permute.xlu0 %5031
    %5035 = vset.pattern.permute.xlu0 0
    %5036 = vperm.xlu0 %5035, %v4939
    %v5037 = vpop.permute.xlu0 %5036
    %5040 = vset.pattern.permute.xlu0 0
    %5041 = vperm.xlu0 %5040, %v4940
    %v5042 = vpop.permute.xlu0 %5041
    %5045 = vset.pattern.permute.xlu0 0
    %5046 = vperm.xlu0 %5045, %v4941
    %v5047 = vpop.permute.xlu0 %5046
    %5050 = vset.pattern.permute.xlu0 0
    %5051 = vperm.xlu0 %5050, %v4942
    %v5052 = vpop.permute.xlu0 %5051
    %5055 = vset.pattern.permute.xlu0 0
    %5056 = vperm.xlu0 %5055, %v4943
    %v5057 = vpop.permute.xlu0 %5056
    %5060 = vset.pattern.permute.xlu0 0
    %5061 = vperm.xlu0 %5060, %v4944
    %v5062 = vpop.permute.xlu0 %5061
    %5065 = vset.pattern.permute.xlu0 0
    %5066 = vperm.xlu0 %5065, %v4945
    %v5067 = vpop.permute.xlu0 %5066
    %5070 = vset.pattern.permute.xlu0 0
    %5071 = vperm.xlu0 %5070, %v4946
    %v5072 = vpop.permute.xlu0 %5071
    %5075 = vset.pattern.permute.xlu0 0
    %5076 = vperm.xlu0 %5075, %v4947
    %v5077 = vpop.permute.xlu0 %5076
    %5080 = vset.pattern.permute.xlu0 0
    %5081 = vperm.xlu0 %5080, %v4948
    %v5082 = vpop.permute.xlu0 %5081
    %v5084 = vmul.f32 %v4920, %v4952
    %v5085 = vmul.f32 %v4919, %v4957
    %v5086 = vmul.f32 %v4918, %v4962
    %v5087 = vmul.f32 %v4917, %v4967
    %v5088 = vmul.f32 %v4916, %v4972
    %v5089 = vmul.f32 %v4915, %v4977
    %v5090 = vmul.f32 %v4914, %v4982
    %v5091 = vmul.f32 %v4913, %v4987
    %v5092 = vmul.f32 %v4912, %v4992
    %v5093 = vmul.f32 %v4911, %v4997
    %v5094 = vmul.f32 %v4910, %v5002
    %v5095 = vmul.f32 %v4909, %v5007
    %v5096 = vmul.f32 %v4908, %v5012
    %v5097 = vmul.f32 %v4907, %v5017
    %v5098 = vmul.f32 %v4906, %v5022
    %v5099 = vmul.f32 %v4905, %v5027
    %v5100 = vmul.f32 %v4904, %v5032
    %v5101 = vmul.f32 %v4903, %v5037
    %v5102 = vmul.f32 %v4902, %v5042
    %v5103 = vmul.f32 %v4901, %v5047
    %v5104 = vmul.f32 %v4900, %v5052
    %v5105 = vmul.f32 %v4899, %v5057
    %v5106 = vmul.f32 %v4898, %v5062
    %v5107 = vmul.f32 %v4897, %v5067
    %v5108 = vmul.f32 %v4896, %v5072
    %v5109 = vmul.f32 %v4895, %v5077
    %v5110 = vmul.f32 %v4921, %v5082
    %v5111 = vadd.f32 %v4841, %v5084
    %v5112 = vadd.f32 %v4842, %v5085
    %v5113 = vadd.f32 %v4843, %v5086
    %v5114 = vadd.f32 %v4844, %v5087
    %v5115 = vadd.f32 %v4845, %v5088
    %v5116 = vadd.f32 %v4846, %v5089
    %v5117 = vadd.f32 %v4847, %v5090
    %v5118 = vadd.f32 %v4848, %v5091
    %v5119 = vadd.f32 %v4849, %v5092
    %v5120 = vadd.f32 %v4850, %v5093
    %v5121 = vadd.f32 %v4851, %v5094
    %v5122 = vadd.f32 %v4852, %v5095
    %v5123 = vadd.f32 %v4853, %v5096
    %v5124 = vadd.f32 %v4854, %v5097
    %v5125 = vadd.f32 %v4855, %v5098
    %v5126 = vadd.f32 %v4856, %v5099
    %v5127 = vadd.f32 %v4857, %v5100
    %v5128 = vadd.f32 %v4858, %v5101
    %v5129 = vadd.f32 %v4859, %v5102
    %v5130 = vadd.f32 %v4860, %v5103
    %v5131 = vadd.f32 %v4861, %v5104
    %v5132 = vadd.f32 %v4862, %v5105
    %v5133 = vadd.f32 %v4863, %v5106
    %v5134 = vadd.f32 %v4864, %v5107
    %v5135 = vadd.f32 %v4865, %v5108
    %v5136 = vadd.f32 %v4866, %v5109
    %v5137 = vadd.f32 %v4867, %v5110
    %v5138 = vld [vmem:[%s6] sm:$0x1]
    %v5140 = vlaneseq
    %v5141 = vshrl.u32 %v5140, 7
    %v5142 = vsub.s32 0, %v5141
    %v5143 = vrot.slane %v5138, %v5142
    %v5145 = vadd.f32 %v5111, %v5143
    %v5146 = vadd.f32 %v5112, %v5143
    %v5147 = vadd.f32 %v5113, %v5143
    %v5148 = vadd.f32 %v5114, %v5143
    %v5149 = vadd.f32 %v5115, %v5143
    %v5150 = vadd.f32 %v5116, %v5143
    %v5151 = vadd.f32 %v5117, %v5143
    %v5152 = vadd.f32 %v5118, %v5143
    %v5153 = vadd.f32 %v5119, %v5143
    %v5154 = vadd.f32 %v5120, %v5143
    %v5155 = vadd.f32 %v5121, %v5143
    %v5156 = vadd.f32 %v5122, %v5143
    %v5157 = vadd.f32 %v5123, %v5143
    %v5158 = vadd.f32 %v5124, %v5143
    %v5159 = vadd.f32 %v5125, %v5143
    %v5160 = vadd.f32 %v5126, %v5143
    %v5161 = vadd.f32 %v5127, %v5143
    %v5162 = vadd.f32 %v5128, %v5143
    %v5163 = vadd.f32 %v5129, %v5143
    %v5164 = vadd.f32 %v5130, %v5143
    %v5165 = vadd.f32 %v5131, %v5143
    %v5166 = vadd.f32 %v5132, %v5143
    %v5167 = vadd.f32 %v5133, %v5143
    %v5168 = vadd.f32 %v5134, %v5143
    %v5169 = vadd.f32 %v5135, %v5143
    %v5170 = vadd.f32 %v5136, %v5143
    %v5171 = vadd.f32 %v5137, %v5143
    %v5172 = vmax.f32 %v5145, 0.0
    %v5173 = vmax.f32 %v5146, 0.0
    %v5174 = vmax.f32 %v5147, 0.0
    %v5175 = vmax.f32 %v5148, 0.0
    %v5176 = vmax.f32 %v5149, 0.0
    %v5177 = vmax.f32 %v5150, 0.0
    %v5178 = vmax.f32 %v5151, 0.0
    %v5179 = vmax.f32 %v5152, 0.0
    %v5180 = vmax.f32 %v5153, 0.0
    %v5181 = vmax.f32 %v5154, 0.0
    %v5182 = vmax.f32 %v5155, 0.0
    %v5183 = vmax.f32 %v5156, 0.0
    %v5184 = vmax.f32 %v5157, 0.0
    %v5185 = vmax.f32 %v5158, 0.0
    %v5186 = vmax.f32 %v5159, 0.0
    %v5187 = vmax.f32 %v5160, 0.0
    %v5188 = vmax.f32 %v5161, 0.0
    %v5189 = vmax.f32 %v5162, 0.0
    %v5190 = vmax.f32 %v5163, 0.0
    %v5191 = vmax.f32 %v5164, 0.0
    %v5192 = vmax.f32 %v5165, 0.0
    %v5193 = vmax.f32 %v5166, 0.0
    %v5194 = vmax.f32 %v5167, 0.0
    %v5195 = vmax.f32 %v5168, 0.0
    %v5196 = vmax.f32 %v5169, 0.0
    %v5197 = vmax.f32 %v5170, 0.0
    %v5198 = vmax.f32 %v5171, 0.0
    %5199 = vst.msk [vmem:[#allocation3] sm:$0xff] %vm3606, %v5172
    %5200 = vst.msk [vmem:[#allocation3 + $0x8] sm:$0xff] %vm3606, %v5173
    %5201 = vst.msk [vmem:[#allocation3 + $0x10] sm:$0xff] %vm3606, %v5174
    %5202 = vst.msk [vmem:[#allocation3 + $0x18] sm:$0xff] %vm3606, %v5175
    %5203 = vst.msk [vmem:[#allocation3 + $0x20] sm:$0xff] %vm3606, %v5176
    %5204 = vst.msk [vmem:[#allocation3 + $0x28] sm:$0xff] %vm3606, %v5177
    %5205 = vst.msk [vmem:[#allocation3 + $0x30] sm:$0xff] %vm3606, %v5178
    %5206 = vst.msk [vmem:[#allocation3 + $0x38] sm:$0xff] %vm3606, %v5179
    %5207 = vst.msk [vmem:[#allocation3 + $0x40] sm:$0xff] %vm3606, %v5180
    %5208 = vst.msk [vmem:[#allocation3 + $0x48] sm:$0xff] %vm3606, %v5181
    %5209 = vst.msk [vmem:[#allocation3 + $0x50] sm:$0xff] %vm3606, %v5182
    %5210 = vst.msk [vmem:[#allocation3 + $0x58] sm:$0xff] %vm3606, %v5183
    %5211 = vst.msk [vmem:[#allocation3 + $0x60] sm:$0xff] %vm3606, %v5184
    %5212 = vst.msk [vmem:[#allocation3 + $0x68] sm:$0xff] %vm3606, %v5185
    %5213 = vst.msk [vmem:[#allocation3 + $0x70] sm:$0xff] %vm3606, %v5186
    %5214 = vst.msk [vmem:[#allocation3 + $0x78] sm:$0xff] %vm3606, %v5187
    %5215 = vst.msk [vmem:[#allocation3 + $0x80] sm:$0xff] %vm3606, %v5188
    %5216 = vst.msk [vmem:[#allocation3 + $0x88] sm:$0xff] %vm3606, %v5189
    %5217 = vst.msk [vmem:[#allocation3 + $0x90] sm:$0xff] %vm3606, %v5190
    %5218 = vst.msk [vmem:[#allocation3 + $0x98] sm:$0xff] %vm3606, %v5191
    %5219 = vst.msk [vmem:[#allocation3 + $0xa0] sm:$0xff] %vm3606, %v5192
    %5220 = vst.msk [vmem:[#allocation3 + $0xa8] sm:$0xff] %vm3606, %v5193
    %5221 = vst.msk [vmem:[#allocation3 + $0xb0] sm:$0xff] %vm3606, %v5194
    %5222 = vst.msk [vmem:[#allocation3 + $0xb8] sm:$0xff] %vm3606, %v5195
    %5223 = vst.msk [vmem:[#allocation3 + $0xc0] sm:$0xff] %vm3606, %v5196
    %5224 = vst.msk [vmem:[#allocation3 + $0xc8] sm:$0xff] %vm3606, %v5197
    %5225 = vst.msk [vmem:[#allocation3 + $0xd0] sm:$0xff] %vm3606, %v5198
    %v5226 = vld [vmem:[#allocation3] ss:$3 sm:$0xff]
    %s5227 = scalar_lea.vmem [#allocation3], 24
    %v5228 = vld [vmem:[%s5227] ss:$3 sm:$0xff]
    %s5229 = scalar_lea.vmem [#allocation3], 48
    %v5230 = vld [vmem:[%s5229] ss:$3 sm:$0xff]
    %s5231 = scalar_lea.vmem [#allocation3], 72
    %v5232 = vld [vmem:[%s5231] ss:$3 sm:$0xff]
    %s5233 = scalar_lea.vmem [#allocation3], 96
    %v5234 = vld [vmem:[%s5233] ss:$3 sm:$0xff]
    %s5235 = scalar_lea.vmem [#allocation3], 120
    %v5236 = vld [vmem:[%s5235] ss:$3 sm:$0xff]
    %s5237 = scalar_lea.vmem [#allocation3], 144
    %v5238 = vld [vmem:[%s5237] ss:$3 sm:$0xff]
    %s5239 = scalar_lea.vmem [#allocation3], 168
    %v5240 = vld [vmem:[%s5239] ss:$3 sm:$0xff]
    %s5241 = scalar_lea.vmem [#allocation3], 192
    %v5242 = vld [vmem:[%s5241] ss:$3 sm:$0xff]
    %s5243 = scalar_lea.vmem [#allocation3], 1
    %v5244 = vld [vmem:[%s5243] ss:$3 sm:$0xff]
    %s5245 = scalar_lea.vmem [#allocation3], 25
    %v5246 = vld [vmem:[%s5245] ss:$3 sm:$0xff]
    %s5247 = scalar_lea.vmem [#allocation3], 49
    %v5248 = vld [vmem:[%s5247] ss:$3 sm:$0xff]
    %s5249 = scalar_lea.vmem [#allocation3], 73
    %v5250 = vld [vmem:[%s5249] ss:$3 sm:$0xff]
    %s5251 = scalar_lea.vmem [#allocation3], 97
    %v5252 = vld [vmem:[%s5251] ss:$3 sm:$0xff]
    %s5253 = scalar_lea.vmem [#allocation3], 121
    %v5254 = vld [vmem:[%s5253] ss:$3 sm:$0xff]
    %s5255 = scalar_lea.vmem [#allocation3], 145
    %v5256 = vld [vmem:[%s5255] ss:$3 sm:$0xff]
    %s5257 = scalar_lea.vmem [#allocation3], 169
    %v5258 = vld [vmem:[%s5257] ss:$3 sm:$0xff]
    %s5259 = scalar_lea.vmem [#allocation3], 193
    %v5260 = vld [vmem:[%s5259] ss:$3 sm:$0xff]
    %v5261 = vmax.f32 %v5226, %v5244
    %v5262 = vmax.f32 %v5228, %v5246
    %v5263 = vmax.f32 %v5230, %v5248
    %v5264 = vmax.f32 %v5232, %v5250
    %v5265 = vmax.f32 %v5234, %v5252
    %v5266 = vmax.f32 %v5236, %v5254
    %v5267 = vmax.f32 %v5238, %v5256
    %v5268 = vmax.f32 %v5240, %v5258
    %v5269 = vmax.f32 %v5242, %v5260
    %s5270 = scalar_lea.vmem [#allocation3], 2
    %v5271 = vld [vmem:[%s5270] ss:$3 sm:$0xff]
    %s5272 = scalar_lea.vmem [#allocation3], 26
    %v5273 = vld [vmem:[%s5272] ss:$3 sm:$0xff]
    %s5274 = scalar_lea.vmem [#allocation3], 50
    %v5275 = vld [vmem:[%s5274] ss:$3 sm:$0xff]
    %s5276 = scalar_lea.vmem [#allocation3], 74
    %v5277 = vld [vmem:[%s5276] ss:$3 sm:$0xff]
    %s5278 = scalar_lea.vmem [#allocation3], 98
    %v5279 = vld [vmem:[%s5278] ss:$3 sm:$0xff]
    %s5280 = scalar_lea.vmem [#allocation3], 122
    %v5281 = vld [vmem:[%s5280] ss:$3 sm:$0xff]
    %s5282 = scalar_lea.vmem [#allocation3], 146
    %v5283 = vld [vmem:[%s5282] ss:$3 sm:$0xff]
    %s5284 = scalar_lea.vmem [#allocation3], 170
    %v5285 = vld [vmem:[%s5284] ss:$3 sm:$0xff]
    %s5286 = scalar_lea.vmem [#allocation3], 194
    %v5287 = vld [vmem:[%s5286] ss:$3 sm:$0xff]
    %v5288 = vmax.f32 %v5261, %v5271
    %v5289 = vmax.f32 %v5262, %v5273
    %v5290 = vmax.f32 %v5263, %v5275
    %v5291 = vmax.f32 %v5264, %v5277
    %v5292 = vmax.f32 %v5265, %v5279
    %v5293 = vmax.f32 %v5266, %v5281
    %v5294 = vmax.f32 %v5267, %v5283
    %v5295 = vmax.f32 %v5268, %v5285
    %v5296 = vmax.f32 %v5269, %v5287
    %v5297 = vld [vmem:[%s9] sm:$0xff]
    %v5298 = vld [vmem:[%s9 + $0x8] sm:$0xff]
    %v5299 = vld [vmem:[%s9 + $0x10] sm:$0xff]
    %v5300 = vld [vmem:[%s9 + $0x18] sm:$0xff]
    %v5302 = vsel %vm3606, %v5288, 0
    %v5305 = vsel %vm3606, %v5289, 0
    %v5308 = vsel %vm3606, %v5290, 0
    %v5311 = vsel %vm3606, %v5291, 0
    %v5314 = vsel %vm3606, %v5292, 0
    %v5317 = vsel %vm3606, %v5293, 0
    %v5320 = vsel %vm3606, %v5294, 0
    %v5323 = vsel %vm3606, %v5295, 0
    %v5326 = vsel %vm3606, %v5296, 0
    %5328 = vmatprep.subr.mxu0 0.0
    %5329 = vmatpush1.msra.mxu0 0.0
    %5330 = vmatprep.subr.mxu0 0.0
    %5331 = vmatpush1.msra.mxu0 0.0
    %5332 = vmatprep.subr.mxu0 0.0
    %5333 = vmatpush1.msra.mxu0 0.0
    %5334 = vmatprep.subr.mxu0 0.0
    %5335 = vmatpush1.msra.mxu0 0.0
    %5336 = vmatprep.subr.mxu0 0.0
    %5337 = vmatpush1.msra.mxu0 0.0
    %5338 = vmatprep.subr.mxu0 0.0
    %5339 = vmatpush1.msra.mxu0 0.0
    %5340 = vmatprep.subr.mxu0 0.0
    %5341 = vmatpush1.msra.mxu0 0.0
    %5342 = vmatprep.subr.mxu0 0.0
    %5343 = vmatpush1.msra.mxu0 0.0
    %5344 = vmatprep.subr.mxu0 0.0
    %5345 = vmatpush1.msra.mxu0 0.0
    %5346 = vmatprep.subr.mxu0 0.0
    %5347 = vmatpush1.msra.mxu0 0.0
    %5348 = vmatprep.subr.mxu0 0.0
    %5349 = vmatpush1.msra.mxu0 0.0
    %5350 = vmatprep.subr.mxu0 0.0
    %5351 = vmatpush1.msra.mxu0 0.0
    %5352 = vmatprep.subr.mxu0 0.0
    %5353 = vmatpush1.msra.mxu0 %v5300
    %5354 = vmatprep.subr.mxu0 0.0
    %5355 = vmatpush1.msra.mxu0 %v5299
    %5356 = vmatprep.subr.mxu0 0.0
    %5357 = vmatpush1.msra.mxu0 %v5298
    %5358 = vmatprep.subr.mxu0 0.0
    %5359 = vmatpush1.msra.mxu0 %v5297
    %5360 = vmatprep.subr.mxu0 0.0
    %5361 = vmatpush2.msra.mxu0 0.0
    %5362 = vmatprep.subr.mxu0 0.0
    %5363 = vmatpush2.msra.mxu0 0.0
    %5364 = vmatprep.subr.mxu0 0.0
    %5365 = vmatpush2.msra.mxu0 0.0
    %5366 = vmatprep.subr.mxu0 0.0
    %5367 = vmatpush2.msra.mxu0 0.0
    %5368 = vmatprep.subr.mxu0 0.0
    %5369 = vmatpush2.msra.mxu0 0.0
    %5370 = vmatprep.subr.mxu0 0.0
    %5371 = vmatpush2.msra.mxu0 0.0
    %5372 = vmatprep.subr.mxu0 0.0
    %5373 = vmatpush2.msra.mxu0 0.0
    %5374 = vmatprep.subr.mxu0 0.0
    %5375 = vmatpush2.msra.mxu0 0.0
    %5376 = vmatprep.subr.mxu0 0.0
    %5377 = vmatpush2.msra.mxu0 0.0
    %5378 = vmatprep.subr.mxu0 0.0
    %5379 = vmatpush2.msra.mxu0 0.0
    %5380 = vmatprep.subr.mxu0 0.0
    %5381 = vmatpush2.msra.mxu0 0.0
    %5382 = vmatprep.subr.mxu0 0.0
    %5383 = vmatpush2.msra.mxu0 0.0
    %5384 = vmatprep.subr.mxu0 0.0
    %5385 = vmatpush2.msra.mxu0 0.0
    %5386 = vmatprep.subr.mxu0 0.0
    %5387 = vmatpush2.msra.mxu0 0.0
    %5388 = vmatprep.subr.mxu0 0.0
    %5389 = vmatpush2.msra.mxu0 0.0
    %5390 = vmatprep.subr.mxu0 0.0
    %5391 = vmatpush2.msra.mxu0 0.0
    %5392 = vmatprep.mubr.f32.mxu0 0.0
    %5393 = vmatmul.mubr.f32.gmra.mxu0 %v5302
    %v5394 = vpop.f32.mrf.mxu0
    %v5395 = vadd.f32 0.0, %v5394
    %v5396 = vpop.f32.mrf.mxu0
    %5397 = vmatprep.mubr.f32.mxu0 0.0
    %5398 = vmatmul.mubr.f32.gmra.mxu0 %v5305
    %v5399 = vpop.f32.mrf.mxu0
    %v5400 = vadd.f32 0.0, %v5399
    %v5401 = vpop.f32.mrf.mxu0
    %5402 = vmatprep.mubr.f32.mxu0 0.0
    %5403 = vmatmul.mubr.f32.gmra.mxu0 %v5308
    %v5404 = vpop.f32.mrf.mxu0
    %v5405 = vadd.f32 0.0, %v5404
    %v5406 = vpop.f32.mrf.mxu0
    %5407 = vmatprep.mubr.f32.mxu0 0.0
    %5408 = vmatmul.mubr.f32.gmra.mxu0 %v5311
    %v5409 = vpop.f32.mrf.mxu0
    %v5410 = vadd.f32 0.0, %v5409
    %v5411 = vpop.f32.mrf.mxu0
    %5412 = vmatprep.mubr.f32.mxu0 0.0
    %5413 = vmatmul.mubr.f32.gmra.mxu0 %v5314
    %v5414 = vpop.f32.mrf.mxu0
    %v5415 = vadd.f32 0.0, %v5414
    %v5416 = vpop.f32.mrf.mxu0
    %5417 = vmatprep.mubr.f32.mxu0 0.0
    %5418 = vmatmul.mubr.f32.gmra.mxu0 %v5317
    %v5419 = vpop.f32.mrf.mxu0
    %v5420 = vadd.f32 0.0, %v5419
    %v5421 = vpop.f32.mrf.mxu0
    %5422 = vmatprep.mubr.f32.mxu0 0.0
    %5423 = vmatmul.mubr.f32.gmra.mxu0 %v5320
    %v5424 = vpop.f32.mrf.mxu0
    %v5425 = vadd.f32 0.0, %v5424
    %v5426 = vpop.f32.mrf.mxu0
    %5427 = vmatprep.mubr.f32.mxu0 0.0
    %5428 = vmatmul.mubr.f32.gmra.mxu0 %v5323
    %v5429 = vpop.f32.mrf.mxu0
    %v5430 = vadd.f32 0.0, %v5429
    %v5431 = vpop.f32.mrf.mxu0
    %5432 = vmatprep.mubr.f32.mxu0 0.0
    %5433 = vmatmul.mubr.f32.gmra.mxu0 %v5326
    %v5434 = vpop.f32.mrf.mxu0
    %v5435 = vadd.f32 0.0, %v5434
    %v5436 = vpop.f32.mrf.mxu0
    %5437 = vdwg.mxu0
    %s5438 = scalar_lea.vmem %s9, 32
    %v5439 = vld [vmem:[%s5438] sm:$0xff]
    %v5440 = vld [vmem:[%s5438 + $0x8] sm:$0xff]
    %v5441 = vld [vmem:[%s5438 + $0x10] sm:$0xff]
    %v5442 = vld [vmem:[%s5438 + $0x18] sm:$0xff]
    %5443 = vmatprep.subr.mxu0 0.0
    %5444 = vmatpush1.msra.mxu0 0.0
    %5445 = vmatprep.subr.mxu0 0.0
    %5446 = vmatpush1.msra.mxu0 0.0
    %5447 = vmatprep.subr.mxu0 0.0
    %5448 = vmatpush1.msra.mxu0 0.0
    %5449 = vmatprep.subr.mxu0 0.0
    %5450 = vmatpush1.msra.mxu0 0.0
    %5451 = vmatprep.subr.mxu0 0.0
    %5452 = vmatpush1.msra.mxu0 0.0
    %5453 = vmatprep.subr.mxu0 0.0
    %5454 = vmatpush1.msra.mxu0 0.0
    %5455 = vmatprep.subr.mxu0 0.0
    %5456 = vmatpush1.msra.mxu0 0.0
    %5457 = vmatprep.subr.mxu0 0.0
    %5458 = vmatpush1.msra.mxu0 0.0
    %5459 = vmatprep.subr.mxu0 0.0
    %5460 = vmatpush1.msra.mxu0 0.0
    %5461 = vmatprep.subr.mxu0 0.0
    %5462 = vmatpush1.msra.mxu0 0.0
    %5463 = vmatprep.subr.mxu0 0.0
    %5464 = vmatpush1.msra.mxu0 0.0
    %5465 = vmatprep.subr.mxu0 0.0
    %5466 = vmatpush1.msra.mxu0 0.0
    %5467 = vmatprep.subr.mxu0 0.0
    %5468 = vmatpush1.msra.mxu0 %v5442
    %5469 = vmatprep.subr.mxu0 0.0
    %5470 = vmatpush1.msra.mxu0 %v5441
    %5471 = vmatprep.subr.mxu0 0.0
    %5472 = vmatpush1.msra.mxu0 %v5440
    %5473 = vmatprep.subr.mxu0 0.0
    %5474 = vmatpush1.msra.mxu0 %v5439
    %5475 = vmatprep.subr.mxu0 0.0
    %5476 = vmatpush2.msra.mxu0 0.0
    %5477 = vmatprep.subr.mxu0 0.0
    %5478 = vmatpush2.msra.mxu0 0.0
    %5479 = vmatprep.subr.mxu0 0.0
    %5480 = vmatpush2.msra.mxu0 0.0
    %5481 = vmatprep.subr.mxu0 0.0
    %5482 = vmatpush2.msra.mxu0 0.0
    %5483 = vmatprep.subr.mxu0 0.0
    %5484 = vmatpush2.msra.mxu0 0.0
    %5485 = vmatprep.subr.mxu0 0.0
    %5486 = vmatpush2.msra.mxu0 0.0
    %5487 = vmatprep.subr.mxu0 0.0
    %5488 = vmatpush2.msra.mxu0 0.0
    %5489 = vmatprep.subr.mxu0 0.0
    %5490 = vmatpush2.msra.mxu0 0.0
    %5491 = vmatprep.subr.mxu0 0.0
    %5492 = vmatpush2.msra.mxu0 0.0
    %5493 = vmatprep.subr.mxu0 0.0
    %5494 = vmatpush2.msra.mxu0 0.0
    %5495 = vmatprep.subr.mxu0 0.0
    %5496 = vmatpush2.msra.mxu0 0.0
    %5497 = vmatprep.subr.mxu0 0.0
    %5498 = vmatpush2.msra.mxu0 0.0
    %5499 = vmatprep.subr.mxu0 0.0
    %5500 = vmatpush2.msra.mxu0 0.0
    %5501 = vmatprep.subr.mxu0 0.0
    %5502 = vmatpush2.msra.mxu0 0.0
    %5503 = vmatprep.subr.mxu0 0.0
    %5504 = vmatpush2.msra.mxu0 0.0
    %5505 = vmatprep.subr.mxu0 0.0
    %5506 = vmatpush2.msra.mxu0 0.0
    %5507 = vmatprep.mubr.f32.mxu0 0.0
    %5508 = vmatmul.mubr.f32.gmra.mxu0 %v5302
    %v5509 = vpop.f32.mrf.mxu0
    %v5510 = vadd.f32 0.0, %v5509
    %v5511 = vpop.f32.mrf.mxu0
    %5512 = vmatprep.mubr.f32.mxu0 0.0
    %5513 = vmatmul.mubr.f32.gmra.mxu0 %v5305
    %v5514 = vpop.f32.mrf.mxu0
    %v5515 = vadd.f32 0.0, %v5514
    %v5516 = vpop.f32.mrf.mxu0
    %5517 = vmatprep.mubr.f32.mxu0 0.0
    %5518 = vmatmul.mubr.f32.gmra.mxu0 %v5308
    %v5519 = vpop.f32.mrf.mxu0
    %v5520 = vadd.f32 0.0, %v5519
    %v5521 = vpop.f32.mrf.mxu0
    %5522 = vmatprep.mubr.f32.mxu0 0.0
    %5523 = vmatmul.mubr.f32.gmra.mxu0 %v5311
    %v5524 = vpop.f32.mrf.mxu0
    %v5525 = vadd.f32 0.0, %v5524
    %v5526 = vpop.f32.mrf.mxu0
    %5527 = vmatprep.mubr.f32.mxu0 0.0
    %5528 = vmatmul.mubr.f32.gmra.mxu0 %v5314
    %v5529 = vpop.f32.mrf.mxu0
    %v5530 = vadd.f32 0.0, %v5529
    %v5531 = vpop.f32.mrf.mxu0
    %5532 = vmatprep.mubr.f32.mxu0 0.0
    %5533 = vmatmul.mubr.f32.gmra.mxu0 %v5317
    %v5534 = vpop.f32.mrf.mxu0
    %v5535 = vadd.f32 0.0, %v5534
    %v5536 = vpop.f32.mrf.mxu0
    %5537 = vmatprep.mubr.f32.mxu0 0.0
    %5538 = vmatmul.mubr.f32.gmra.mxu0 %v5320
    %v5539 = vpop.f32.mrf.mxu0
    %v5540 = vadd.f32 0.0, %v5539
    %v5541 = vpop.f32.mrf.mxu0
    %5542 = vmatprep.mubr.f32.mxu0 0.0
    %5543 = vmatmul.mubr.f32.gmra.mxu0 %v5323
    %v5544 = vpop.f32.mrf.mxu0
    %v5545 = vadd.f32 0.0, %v5544
    %v5546 = vpop.f32.mrf.mxu0
    %5547 = vmatprep.mubr.f32.mxu0 0.0
    %5548 = vmatmul.mubr.f32.gmra.mxu0 %v5326
    %v5549 = vpop.f32.mrf.mxu0
    %v5550 = vadd.f32 0.0, %v5549
    %v5551 = vpop.f32.mrf.mxu0
    %5552 = vdwg.mxu0
    %s5553 = scalar_lea.vmem %s9, 64
    %v5554 = vld [vmem:[%s5553] sm:$0xff]
    %v5555 = vld [vmem:[%s5553 + $0x8] sm:$0xff]
    %v5556 = vld [vmem:[%s5553 + $0x10] sm:$0xff]
    %v5557 = vld [vmem:[%s5553 + $0x18] sm:$0xff]
    %5558 = vmatprep.subr.mxu0 0.0
    %5559 = vmatpush1.msra.mxu0 0.0
    %5560 = vmatprep.subr.mxu0 0.0
    %5561 = vmatpush1.msra.mxu0 0.0
    %5562 = vmatprep.subr.mxu0 0.0
    %5563 = vmatpush1.msra.mxu0 0.0
    %5564 = vmatprep.subr.mxu0 0.0
    %5565 = vmatpush1.msra.mxu0 0.0
    %5566 = vmatprep.subr.mxu0 0.0
    %5567 = vmatpush1.msra.mxu0 0.0
    %5568 = vmatprep.subr.mxu0 0.0
    %5569 = vmatpush1.msra.mxu0 0.0
    %5570 = vmatprep.subr.mxu0 0.0
    %5571 = vmatpush1.msra.mxu0 0.0
    %5572 = vmatprep.subr.mxu0 0.0
    %5573 = vmatpush1.msra.mxu0 0.0
    %5574 = vmatprep.subr.mxu0 0.0
    %5575 = vmatpush1.msra.mxu0 0.0
    %5576 = vmatprep.subr.mxu0 0.0
    %5577 = vmatpush1.msra.mxu0 0.0
    %5578 = vmatprep.subr.mxu0 0.0
    %5579 = vmatpush1.msra.mxu0 0.0
    %5580 = vmatprep.subr.mxu0 0.0
    %5581 = vmatpush1.msra.mxu0 0.0
    %5582 = vmatprep.subr.mxu0 0.0
    %5583 = vmatpush1.msra.mxu0 %v5557
    %5584 = vmatprep.subr.mxu0 0.0
    %5585 = vmatpush1.msra.mxu0 %v5556
    %5586 = vmatprep.subr.mxu0 0.0
    %5587 = vmatpush1.msra.mxu0 %v5555
    %5588 = vmatprep.subr.mxu0 0.0
    %5589 = vmatpush1.msra.mxu0 %v5554
    %5590 = vmatprep.subr.mxu0 0.0
    %5591 = vmatpush2.msra.mxu0 0.0
    %5592 = vmatprep.subr.mxu0 0.0
    %5593 = vmatpush2.msra.mxu0 0.0
    %5594 = vmatprep.subr.mxu0 0.0
    %5595 = vmatpush2.msra.mxu0 0.0
    %5596 = vmatprep.subr.mxu0 0.0
    %5597 = vmatpush2.msra.mxu0 0.0
    %5598 = vmatprep.subr.mxu0 0.0
    %5599 = vmatpush2.msra.mxu0 0.0
    %5600 = vmatprep.subr.mxu0 0.0
    %5601 = vmatpush2.msra.mxu0 0.0
    %5602 = vmatprep.subr.mxu0 0.0
    %5603 = vmatpush2.msra.mxu0 0.0
    %5604 = vmatprep.subr.mxu0 0.0
    %5605 = vmatpush2.msra.mxu0 0.0
    %5606 = vmatprep.subr.mxu0 0.0
    %5607 = vmatpush2.msra.mxu0 0.0
    %5608 = vmatprep.subr.mxu0 0.0
    %5609 = vmatpush2.msra.mxu0 0.0
    %5610 = vmatprep.subr.mxu0 0.0
    %5611 = vmatpush2.msra.mxu0 0.0
    %5612 = vmatprep.subr.mxu0 0.0
    %5613 = vmatpush2.msra.mxu0 0.0
    %5614 = vmatprep.subr.mxu0 0.0
    %5615 = vmatpush2.msra.mxu0 0.0
    %5616 = vmatprep.subr.mxu0 0.0
    %5617 = vmatpush2.msra.mxu0 0.0
    %5618 = vmatprep.subr.mxu0 0.0
    %5619 = vmatpush2.msra.mxu0 0.0
    %5620 = vmatprep.subr.mxu0 0.0
    %5621 = vmatpush2.msra.mxu0 0.0
    %5622 = vmatprep.mubr.f32.mxu0 0.0
    %5623 = vmatmul.mubr.f32.gmra.mxu0 %v5302
    %v5624 = vpop.f32.mrf.mxu0
    %v5625 = vadd.f32 0.0, %v5624
    %v5626 = vpop.f32.mrf.mxu0
    %5627 = vmatprep.mubr.f32.mxu0 0.0
    %5628 = vmatmul.mubr.f32.gmra.mxu0 %v5305
    %v5629 = vpop.f32.mrf.mxu0
    %v5630 = vadd.f32 0.0, %v5629
    %v5631 = vpop.f32.mrf.mxu0
    %5632 = vmatprep.mubr.f32.mxu0 0.0
    %5633 = vmatmul.mubr.f32.gmra.mxu0 %v5308
    %v5634 = vpop.f32.mrf.mxu0
    %v5635 = vadd.f32 0.0, %v5634
    %v5636 = vpop.f32.mrf.mxu0
    %5637 = vmatprep.mubr.f32.mxu0 0.0
    %5638 = vmatmul.mubr.f32.gmra.mxu0 %v5311
    %v5639 = vpop.f32.mrf.mxu0
    %v5640 = vadd.f32 0.0, %v5639
    %v5641 = vpop.f32.mrf.mxu0
    %5642 = vmatprep.mubr.f32.mxu0 0.0
    %5643 = vmatmul.mubr.f32.gmra.mxu0 %v5314
    %v5644 = vpop.f32.mrf.mxu0
    %v5645 = vadd.f32 0.0, %v5644
    %v5646 = vpop.f32.mrf.mxu0
    %5647 = vmatprep.mubr.f32.mxu0 0.0
    %5648 = vmatmul.mubr.f32.gmra.mxu0 %v5317
    %v5649 = vpop.f32.mrf.mxu0
    %v5650 = vadd.f32 0.0, %v5649
    %v5651 = vpop.f32.mrf.mxu0
    %5652 = vmatprep.mubr.f32.mxu0 0.0
    %5653 = vmatmul.mubr.f32.gmra.mxu0 %v5320
    %v5654 = vpop.f32.mrf.mxu0
    %v5655 = vadd.f32 0.0, %v5654
    %v5656 = vpop.f32.mrf.mxu0
    %5657 = vmatprep.mubr.f32.mxu0 0.0
    %5658 = vmatmul.mubr.f32.gmra.mxu0 %v5323
    %v5659 = vpop.f32.mrf.mxu0
    %v5660 = vadd.f32 0.0, %v5659
    %v5661 = vpop.f32.mrf.mxu0
    %5662 = vmatprep.mubr.f32.mxu0 0.0
    %5663 = vmatmul.mubr.f32.gmra.mxu0 %v5326
    %v5664 = vpop.f32.mrf.mxu0
    %v5665 = vadd.f32 0.0, %v5664
    %v5666 = vpop.f32.mrf.mxu0
    %5667 = vdwg.mxu0
    %v5668 = vrot.slane %v5395, 7
    %v5669 = vrot.slane %v5400, 7
    %v5670 = vrot.slane %v5405, 7
    %v5671 = vrot.slane %v5410, 7
    %v5672 = vrot.slane %v5415, 7
    %v5673 = vrot.slane %v5420, 7
    %v5674 = vrot.slane %v5425, 7
    %v5675 = vrot.slane %v5430, 7
    %v5676 = vrot.slane %v5435, 7
    %v5677 = vsel %vm1896, %v5675, %v5676
    %v5678 = vsel %vm1896, %v5674, %v5675
    %v5679 = vsel %vm1896, %v5673, %v5674
    %v5680 = vsel %vm1896, %v5672, %v5673
    %v5681 = vsel %vm1896, %v5671, %v5672
    %v5682 = vsel %vm1896, %v5670, %v5671
    %v5683 = vsel %vm1896, %v5669, %v5670
    %v5684 = vsel %vm1896, %v5668, %v5669
    %v5685 = vsel %vm1896, %v5676, %v5668
    %v5686 = vld [vmem:[%s11] sm:$0xff]
    %v5687 = vld [vmem:[%s11 + $0x8] sm:$0xff]
    %v5688 = vld [vmem:[%s11 + $0x10] sm:$0xff]
    %v5689 = vld [vmem:[%s11 + $0x18] sm:$0xff]
    %v5690 = vld [vmem:[%s11 + $0x20] sm:$0xff]
    %v5691 = vld [vmem:[%s11 + $0x28] sm:$0xff]
    %v5692 = vld [vmem:[%s11 + $0x30] sm:$0xff]
    %v5693 = vld [vmem:[%s11 + $0x38] sm:$0xff]
    %v5694 = vld [vmem:[%s11 + $0x40] sm:$0xff]
    %5696 = vset.pattern.permute.xlu0 0
    %5697 = vperm.xlu0 %5696, %v5686
    %v5698 = vpop.permute.xlu0 %5697
    %5701 = vset.pattern.permute.xlu0 0
    %5702 = vperm.xlu0 %5701, %v5687
    %v5703 = vpop.permute.xlu0 %5702
    %5706 = vset.pattern.permute.xlu0 0
    %5707 = vperm.xlu0 %5706, %v5688
    %v5708 = vpop.permute.xlu0 %5707
    %5711 = vset.pattern.permute.xlu0 0
    %5712 = vperm.xlu0 %5711, %v5689
    %v5713 = vpop.permute.xlu0 %5712
    %5716 = vset.pattern.permute.xlu0 0
    %5717 = vperm.xlu0 %5716, %v5690
    %v5718 = vpop.permute.xlu0 %5717
    %5721 = vset.pattern.permute.xlu0 0
    %5722 = vperm.xlu0 %5721, %v5691
    %v5723 = vpop.permute.xlu0 %5722
    %5726 = vset.pattern.permute.xlu0 0
    %5727 = vperm.xlu0 %5726, %v5692
    %v5728 = vpop.permute.xlu0 %5727
    %5731 = vset.pattern.permute.xlu0 0
    %5732 = vperm.xlu0 %5731, %v5693
    %v5733 = vpop.permute.xlu0 %5732
    %5736 = vset.pattern.permute.xlu0 0
    %5737 = vperm.xlu0 %5736, %v5694
    %v5738 = vpop.permute.xlu0 %5737
    %v5740 = vmul.f32 %v5685, %v5698
    %v5741 = vmul.f32 %v5684, %v5703
    %v5742 = vmul.f32 %v5683, %v5708
    %v5743 = vmul.f32 %v5682, %v5713
    %v5744 = vmul.f32 %v5681, %v5718
    %v5745 = vmul.f32 %v5680, %v5723
    %v5746 = vmul.f32 %v5679, %v5728
    %v5747 = vmul.f32 %v5678, %v5733
    %v5748 = vmul.f32 %v5677, %v5738
    %v5749 = vadd.f32 %v5740, %v5510
    %v5750 = vadd.f32 %v5741, %v5515
    %v5751 = vadd.f32 %v5742, %v5520
    %v5752 = vadd.f32 %v5743, %v5525
    %v5753 = vadd.f32 %v5744, %v5530
    %v5754 = vadd.f32 %v5745, %v5535
    %v5755 = vadd.f32 %v5746, %v5540
    %v5756 = vadd.f32 %v5747, %v5545
    %v5757 = vadd.f32 %v5748, %v5550
    %v5758 = vrot.slane %v5625, 1
    %v5759 = vrot.slane %v5630, 1
    %v5760 = vrot.slane %v5635, 1
    %v5761 = vrot.slane %v5640, 1
    %v5762 = vrot.slane %v5645, 1
    %v5763 = vrot.slane %v5650, 1
    %v5764 = vrot.slane %v5655, 1
    %v5765 = vrot.slane %v5660, 1
    %v5766 = vrot.slane %v5665, 1
    %v5767 = vsel %vm2707, %v5765, %v5766
    %v5768 = vsel %vm2707, %v5764, %v5765
    %v5769 = vsel %vm2707, %v5763, %v5764
    %v5770 = vsel %vm2707, %v5762, %v5763
    %v5771 = vsel %vm2707, %v5761, %v5762
    %v5772 = vsel %vm2707, %v5760, %v5761
    %v5773 = vsel %vm2707, %v5759, %v5760
    %v5774 = vsel %vm2707, %v5758, %v5759
    %v5775 = vsel %vm2707, %v5766, %v5758
    %v5776 = vld [vmem:[%s12] sm:$0xff]
    %v5777 = vld [vmem:[%s12 + $0x8] sm:$0xff]
    %v5778 = vld [vmem:[%s12 + $0x10] sm:$0xff]
    %v5779 = vld [vmem:[%s12 + $0x18] sm:$0xff]
    %v5780 = vld [vmem:[%s12 + $0x20] sm:$0xff]
    %v5781 = vld [vmem:[%s12 + $0x28] sm:$0xff]
    %v5782 = vld [vmem:[%s12 + $0x30] sm:$0xff]
    %v5783 = vld [vmem:[%s12 + $0x38] sm:$0xff]
    %v5784 = vld [vmem:[%s12 + $0x40] sm:$0xff]
    %5786 = vset.pattern.permute.xlu0 0
    %5787 = vperm.xlu0 %5786, %v5776
    %v5788 = vpop.permute.xlu0 %5787
    %5791 = vset.pattern.permute.xlu0 0
    %5792 = vperm.xlu0 %5791, %v5777
    %v5793 = vpop.permute.xlu0 %5792
    %5796 = vset.pattern.permute.xlu0 0
    %5797 = vperm.xlu0 %5796, %v5778
    %v5798 = vpop.permute.xlu0 %5797
    %5801 = vset.pattern.permute.xlu0 0
    %5802 = vperm.xlu0 %5801, %v5779
    %v5803 = vpop.permute.xlu0 %5802
    %5806 = vset.pattern.permute.xlu0 0
    %5807 = vperm.xlu0 %5806, %v5780
    %v5808 = vpop.permute.xlu0 %5807
    %5811 = vset.pattern.permute.xlu0 0
    %5812 = vperm.xlu0 %5811, %v5781
    %v5813 = vpop.permute.xlu0 %5812
    %5816 = vset.pattern.permute.xlu0 0
    %5817 = vperm.xlu0 %5816, %v5782
    %v5818 = vpop.permute.xlu0 %5817
    %5821 = vset.pattern.permute.xlu0 0
    %5822 = vperm.xlu0 %5821, %v5783
    %v5823 = vpop.permute.xlu0 %5822
    %5826 = vset.pattern.permute.xlu0 0
    %5827 = vperm.xlu0 %5826, %v5784
    %v5828 = vpop.permute.xlu0 %5827
    %v5830 = vmul.f32 %v5774, %v5788
    %v5831 = vmul.f32 %v5773, %v5793
    %v5832 = vmul.f32 %v5772, %v5798
    %v5833 = vmul.f32 %v5771, %v5803
    %v5834 = vmul.f32 %v5770, %v5808
    %v5835 = vmul.f32 %v5769, %v5813
    %v5836 = vmul.f32 %v5768, %v5818
    %v5837 = vmul.f32 %v5767, %v5823
    %v5838 = vmul.f32 %v5775, %v5828
    %v5839 = vadd.f32 %v5749, %v5830
    %v5840 = vadd.f32 %v5750, %v5831
    %v5841 = vadd.f32 %v5751, %v5832
    %v5842 = vadd.f32 %v5752, %v5833
    %v5843 = vadd.f32 %v5753, %v5834
    %v5844 = vadd.f32 %v5754, %v5835
    %v5845 = vadd.f32 %v5755, %v5836
    %v5846 = vadd.f32 %v5756, %v5837
    %v5847 = vadd.f32 %v5757, %v5838
    %v5848 = vld [vmem:[%s10] sm:$0x1]
    %v5850 = vlaneseq
    %v5851 = vshrl.u32 %v5850, 7
    %v5852 = vsub.s32 0, %v5851
    %v5853 = vrot.slane %v5848, %v5852
    %v5855 = vadd.f32 %v5839, %v5853
    %v5856 = vadd.f32 %v5840, %v5853
    %v5857 = vadd.f32 %v5841, %v5853
    %v5858 = vadd.f32 %v5842, %v5853
    %v5859 = vadd.f32 %v5843, %v5853
    %v5860 = vadd.f32 %v5844, %v5853
    %v5861 = vadd.f32 %v5845, %v5853
    %v5862 = vadd.f32 %v5846, %v5853
    %v5863 = vadd.f32 %v5847, %v5853
    %v5864 = vmax.f32 %v5855, 0.0
    %v5865 = vmax.f32 %v5856, 0.0
    %v5866 = vmax.f32 %v5857, 0.0
    %v5867 = vmax.f32 %v5858, 0.0
    %v5868 = vmax.f32 %v5859, 0.0
    %v5869 = vmax.f32 %v5860, 0.0
    %v5870 = vmax.f32 %v5861, 0.0
    %v5871 = vmax.f32 %v5862, 0.0
    %v5872 = vmax.f32 %v5863, 0.0
    %5873 = vst.msk [vmem:[#allocation4] sm:$0xff] %vm3606, %v5864
    %5874 = vst.msk [vmem:[#allocation4 + $0x8] sm:$0xff] %vm3606, %v5865
    %5875 = vst.msk [vmem:[#allocation4 + $0x10] sm:$0xff] %vm3606, %v5866
    %5876 = vst.msk [vmem:[#allocation4 + $0x18] sm:$0xff] %vm3606, %v5867
    %5877 = vst.msk [vmem:[#allocation4 + $0x20] sm:$0xff] %vm3606, %v5868
    %5878 = vst.msk [vmem:[#allocation4 + $0x28] sm:$0xff] %vm3606, %v5869
    %5879 = vst.msk [vmem:[#allocation4 + $0x30] sm:$0xff] %vm3606, %v5870
    %5880 = vst.msk [vmem:[#allocation4 + $0x38] sm:$0xff] %vm3606, %v5871
    %5881 = vst.msk [vmem:[#allocation4 + $0x40] sm:$0xff] %vm3606, %v5872
    %v5882 = vld [vmem:[#allocation4] ss:$3 sm:$0xff]
    %s5883 = scalar_lea.vmem [#allocation4], 24
    %v5884 = vld [vmem:[%s5883] ss:$3 sm:$0xff]
    %s5885 = scalar_lea.vmem [#allocation4], 48
    %v5886 = vld [vmem:[%s5885] ss:$3 sm:$0xff]
    %s5887 = scalar_lea.vmem [#allocation4], 1
    %v5888 = vld [vmem:[%s5887] ss:$3 sm:$0xff]
    %s5889 = scalar_lea.vmem [#allocation4], 25
    %v5890 = vld [vmem:[%s5889] ss:$3 sm:$0xff]
    %s5891 = scalar_lea.vmem [#allocation4], 49
    %v5892 = vld [vmem:[%s5891] ss:$3 sm:$0xff]
    %v5893 = vmax.f32 %v5882, %v5888
    %v5894 = vmax.f32 %v5884, %v5890
    %v5895 = vmax.f32 %v5886, %v5892
    %s5896 = scalar_lea.vmem [#allocation4], 2
    %v5897 = vld [vmem:[%s5896] ss:$3 sm:$0xff]
    %s5898 = scalar_lea.vmem [#allocation4], 26
    %v5899 = vld [vmem:[%s5898] ss:$3 sm:$0xff]
    %s5900 = scalar_lea.vmem [#allocation4], 50
    %v5901 = vld [vmem:[%s5900] ss:$3 sm:$0xff]
    %v5902 = vmax.f32 %v5893, %v5897
    %v5903 = vmax.f32 %v5894, %v5899
    %v5904 = vmax.f32 %v5895, %v5901
    %v5905 = vld [vmem:[%s13] sm:$0xff]
    %v5906 = vld [vmem:[%s13 + $0x8] sm:$0xff]
    %v5907 = vld [vmem:[%s13 + $0x10] sm:$0xff]
    %v5908 = vld [vmem:[%s13 + $0x18] sm:$0xff]
    %v5910 = vsel %vm3606, %v5902, 0
    %v5913 = vsel %vm3606, %v5903, 0
    %v5916 = vsel %vm3606, %v5904, 0
    %5918 = vmatprep.subr.mxu0 0.0
    %5919 = vmatpush1.msra.mxu0 0.0
    %5920 = vmatprep.subr.mxu0 0.0
    %5921 = vmatpush1.msra.mxu0 0.0
    %5922 = vmatprep.subr.mxu0 0.0
    %5923 = vmatpush1.msra.mxu0 0.0
    %5924 = vmatprep.subr.mxu0 0.0
    %5925 = vmatpush1.msra.mxu0 0.0
    %5926 = vmatprep.subr.mxu0 0.0
    %5927 = vmatpush1.msra.mxu0 0.0
    %5928 = vmatprep.subr.mxu0 0.0
    %5929 = vmatpush1.msra.mxu0 0.0
    %5930 = vmatprep.subr.mxu0 0.0
    %5931 = vmatpush1.msra.mxu0 0.0
    %5932 = vmatprep.subr.mxu0 0.0
    %5933 = vmatpush1.msra.mxu0 0.0
    %5934 = vmatprep.subr.mxu0 0.0
    %5935 = vmatpush1.msra.mxu0 0.0
    %5936 = vmatprep.subr.mxu0 0.0
    %5937 = vmatpush1.msra.mxu0 0.0
    %5938 = vmatprep.subr.mxu0 0.0
    %5939 = vmatpush1.msra.mxu0 0.0
    %5940 = vmatprep.subr.mxu0 0.0
    %5941 = vmatpush1.msra.mxu0 0.0
    %5942 = vmatprep.subr.mxu0 0.0
    %5943 = vmatpush1.msra.mxu0 %v5908
    %5944 = vmatprep.subr.mxu0 0.0
    %5945 = vmatpush1.msra.mxu0 %v5907
    %5946 = vmatprep.subr.mxu0 0.0
    %5947 = vmatpush1.msra.mxu0 %v5906
    %5948 = vmatprep.subr.mxu0 0.0
    %5949 = vmatpush1.msra.mxu0 %v5905
    %5950 = vmatprep.subr.mxu0 0.0
    %5951 = vmatpush2.msra.mxu0 0.0
    %5952 = vmatprep.subr.mxu0 0.0
    %5953 = vmatpush2.msra.mxu0 0.0
    %5954 = vmatprep.subr.mxu0 0.0
    %5955 = vmatpush2.msra.mxu0 0.0
    %5956 = vmatprep.subr.mxu0 0.0
    %5957 = vmatpush2.msra.mxu0 0.0
    %5958 = vmatprep.subr.mxu0 0.0
    %5959 = vmatpush2.msra.mxu0 0.0
    %5960 = vmatprep.subr.mxu0 0.0
    %5961 = vmatpush2.msra.mxu0 0.0
    %5962 = vmatprep.subr.mxu0 0.0
    %5963 = vmatpush2.msra.mxu0 0.0
    %5964 = vmatprep.subr.mxu0 0.0
    %5965 = vmatpush2.msra.mxu0 0.0
    %5966 = vmatprep.subr.mxu0 0.0
    %5967 = vmatpush2.msra.mxu0 0.0
    %5968 = vmatprep.subr.mxu0 0.0
    %5969 = vmatpush2.msra.mxu0 0.0
    %5970 = vmatprep.subr.mxu0 0.0
    %5971 = vmatpush2.msra.mxu0 0.0
    %5972 = vmatprep.subr.mxu0 0.0
    %5973 = vmatpush2.msra.mxu0 0.0
    %5974 = vmatprep.subr.mxu0 0.0
    %5975 = vmatpush2.msra.mxu0 0.0
    %5976 = vmatprep.subr.mxu0 0.0
    %5977 = vmatpush2.msra.mxu0 0.0
    %5978 = vmatprep.subr.mxu0 0.0
    %5979 = vmatpush2.msra.mxu0 0.0
    %5980 = vmatprep.subr.mxu0 0.0
    %5981 = vmatpush2.msra.mxu0 0.0
    %5982 = vmatprep.mubr.f32.mxu0 0.0
    %5983 = vmatmul.mubr.f32.gmra.mxu0 %v5910
    %v5984 = vpop.f32.mrf.mxu0
    %v5985 = vadd.f32 0.0, %v5984
    %v5986 = vpop.f32.mrf.mxu0
    %5987 = vmatprep.mubr.f32.mxu0 0.0
    %5988 = vmatmul.mubr.f32.gmra.mxu0 %v5913
    %v5989 = vpop.f32.mrf.mxu0
    %v5990 = vadd.f32 0.0, %v5989
    %v5991 = vpop.f32.mrf.mxu0
    %5992 = vmatprep.mubr.f32.mxu0 0.0
    %5993 = vmatmul.mubr.f32.gmra.mxu0 %v5916
    %v5994 = vpop.f32.mrf.mxu0
    %v5995 = vadd.f32 0.0, %v5994
    %v5996 = vpop.f32.mrf.mxu0
    %5997 = vdwg.mxu0
    %s5998 = scalar_lea.vmem %s13, 32
    %v5999 = vld [vmem:[%s5998] sm:$0xff]
    %v6000 = vld [vmem:[%s5998 + $0x8] sm:$0xff]
    %v6001 = vld [vmem:[%s5998 + $0x10] sm:$0xff]
    %v6002 = vld [vmem:[%s5998 + $0x18] sm:$0xff]
    %6003 = vmatprep.subr.mxu0 0.0
    %6004 = vmatpush1.msra.mxu0 0.0
    %6005 = vmatprep.subr.mxu0 0.0
    %6006 = vmatpush1.msra.mxu0 0.0
    %6007 = vmatprep.subr.mxu0 0.0
    %6008 = vmatpush1.msra.mxu0 0.0
    %6009 = vmatprep.subr.mxu0 0.0
    %6010 = vmatpush1.msra.mxu0 0.0
    %6011 = vmatprep.subr.mxu0 0.0
    %6012 = vmatpush1.msra.mxu0 0.0
    %6013 = vmatprep.subr.mxu0 0.0
    %6014 = vmatpush1.msra.mxu0 0.0
    %6015 = vmatprep.subr.mxu0 0.0
    %6016 = vmatpush1.msra.mxu0 0.0
    %6017 = vmatprep.subr.mxu0 0.0
    %6018 = vmatpush1.msra.mxu0 0.0
    %6019 = vmatprep.subr.mxu0 0.0
    %6020 = vmatpush1.msra.mxu0 0.0
    %6021 = vmatprep.subr.mxu0 0.0
    %6022 = vmatpush1.msra.mxu0 0.0
    %6023 = vmatprep.subr.mxu0 0.0
    %6024 = vmatpush1.msra.mxu0 0.0
    %6025 = vmatprep.subr.mxu0 0.0
    %6026 = vmatpush1.msra.mxu0 0.0
    %6027 = vmatprep.subr.mxu0 0.0
    %6028 = vmatpush1.msra.mxu0 %v6002
    %6029 = vmatprep.subr.mxu0 0.0
    %6030 = vmatpush1.msra.mxu0 %v6001
    %6031 = vmatprep.subr.mxu0 0.0
    %6032 = vmatpush1.msra.mxu0 %v6000
    %6033 = vmatprep.subr.mxu0 0.0
    %6034 = vmatpush1.msra.mxu0 %v5999
    %6035 = vmatprep.subr.mxu0 0.0
    %6036 = vmatpush2.msra.mxu0 0.0
    %6037 = vmatprep.subr.mxu0 0.0
    %6038 = vmatpush2.msra.mxu0 0.0
    %6039 = vmatprep.subr.mxu0 0.0
    %6040 = vmatpush2.msra.mxu0 0.0
    %6041 = vmatprep.subr.mxu0 0.0
    %6042 = vmatpush2.msra.mxu0 0.0
    %6043 = vmatprep.subr.mxu0 0.0
    %6044 = vmatpush2.msra.mxu0 0.0
    %6045 = vmatprep.subr.mxu0 0.0
    %6046 = vmatpush2.msra.mxu0 0.0
    %6047 = vmatprep.subr.mxu0 0.0
    %6048 = vmatpush2.msra.mxu0 0.0
    %6049 = vmatprep.subr.mxu0 0.0
    %6050 = vmatpush2.msra.mxu0 0.0
    %6051 = vmatprep.subr.mxu0 0.0
    %6052 = vmatpush2.msra.mxu0 0.0
    %6053 = vmatprep.subr.mxu0 0.0
    %6054 = vmatpush2.msra.mxu0 0.0
    %6055 = vmatprep.subr.mxu0 0.0
    %6056 = vmatpush2.msra.mxu0 0.0
    %6057 = vmatprep.subr.mxu0 0.0
    %6058 = vmatpush2.msra.mxu0 0.0
    %6059 = vmatprep.subr.mxu0 0.0
    %6060 = vmatpush2.msra.mxu0 0.0
    %6061 = vmatprep.subr.mxu0 0.0
    %6062 = vmatpush2.msra.mxu0 0.0
    %6063 = vmatprep.subr.mxu0 0.0
    %6064 = vmatpush2.msra.mxu0 0.0
    %6065 = vmatprep.subr.mxu0 0.0
    %6066 = vmatpush2.msra.mxu0 0.0
    %6067 = vmatprep.mubr.f32.mxu0 0.0
    %6068 = vmatmul.mubr.f32.gmra.mxu0 %v5910
    %v6069 = vpop.f32.mrf.mxu0
    %v6070 = vadd.f32 0.0, %v6069
    %v6071 = vpop.f32.mrf.mxu0
    %6072 = vmatprep.mubr.f32.mxu0 0.0
    %6073 = vmatmul.mubr.f32.gmra.mxu0 %v5913
    %v6074 = vpop.f32.mrf.mxu0
    %v6075 = vadd.f32 0.0, %v6074
    %v6076 = vpop.f32.mrf.mxu0
    %6077 = vmatprep.mubr.f32.mxu0 0.0
    %6078 = vmatmul.mubr.f32.gmra.mxu0 %v5916
    %v6079 = vpop.f32.mrf.mxu0
    %v6080 = vadd.f32 0.0, %v6079
    %v6081 = vpop.f32.mrf.mxu0
    %6082 = vdwg.mxu0
    %s6083 = scalar_lea.vmem %s13, 64
    %v6084 = vld [vmem:[%s6083] sm:$0xff]
    %v6085 = vld [vmem:[%s6083 + $0x8] sm:$0xff]
    %v6086 = vld [vmem:[%s6083 + $0x10] sm:$0xff]
    %v6087 = vld [vmem:[%s6083 + $0x18] sm:$0xff]
    %6088 = vmatprep.subr.mxu0 0.0
    %6089 = vmatpush1.msra.mxu0 0.0
    %6090 = vmatprep.subr.mxu0 0.0
    %6091 = vmatpush1.msra.mxu0 0.0
    %6092 = vmatprep.subr.mxu0 0.0
    %6093 = vmatpush1.msra.mxu0 0.0
    %6094 = vmatprep.subr.mxu0 0.0
    %6095 = vmatpush1.msra.mxu0 0.0
    %6096 = vmatprep.subr.mxu0 0.0
    %6097 = vmatpush1.msra.mxu0 0.0
    %6098 = vmatprep.subr.mxu0 0.0
    %6099 = vmatpush1.msra.mxu0 0.0
    %6100 = vmatprep.subr.mxu0 0.0
    %6101 = vmatpush1.msra.mxu0 0.0
    %6102 = vmatprep.subr.mxu0 0.0
    %6103 = vmatpush1.msra.mxu0 0.0
    %6104 = vmatprep.subr.mxu0 0.0
    %6105 = vmatpush1.msra.mxu0 0.0
    %6106 = vmatprep.subr.mxu0 0.0
    %6107 = vmatpush1.msra.mxu0 0.0
    %6108 = vmatprep.subr.mxu0 0.0
    %6109 = vmatpush1.msra.mxu0 0.0
    %6110 = vmatprep.subr.mxu0 0.0
    %6111 = vmatpush1.msra.mxu0 0.0
    %6112 = vmatprep.subr.mxu0 0.0
    %6113 = vmatpush1.msra.mxu0 %v6087
    %6114 = vmatprep.subr.mxu0 0.0
    %6115 = vmatpush1.msra.mxu0 %v6086
    %6116 = vmatprep.subr.mxu0 0.0
    %6117 = vmatpush1.msra.mxu0 %v6085
    %6118 = vmatprep.subr.mxu0 0.0
    %6119 = vmatpush1.msra.mxu0 %v6084
    %6120 = vmatprep.subr.mxu0 0.0
    %6121 = vmatpush2.msra.mxu0 0.0
    %6122 = vmatprep.subr.mxu0 0.0
    %6123 = vmatpush2.msra.mxu0 0.0
    %6124 = vmatprep.subr.mxu0 0.0
    %6125 = vmatpush2.msra.mxu0 0.0
    %6126 = vmatprep.subr.mxu0 0.0
    %6127 = vmatpush2.msra.mxu0 0.0
    %6128 = vmatprep.subr.mxu0 0.0
    %6129 = vmatpush2.msra.mxu0 0.0
    %6130 = vmatprep.subr.mxu0 0.0
    %6131 = vmatpush2.msra.mxu0 0.0
    %6132 = vmatprep.subr.mxu0 0.0
    %6133 = vmatpush2.msra.mxu0 0.0
    %6134 = vmatprep.subr.mxu0 0.0
    %6135 = vmatpush2.msra.mxu0 0.0
    %6136 = vmatprep.subr.mxu0 0.0
    %6137 = vmatpush2.msra.mxu0 0.0
    %6138 = vmatprep.subr.mxu0 0.0
    %6139 = vmatpush2.msra.mxu0 0.0
    %6140 = vmatprep.subr.mxu0 0.0
    %6141 = vmatpush2.msra.mxu0 0.0
    %6142 = vmatprep.subr.mxu0 0.0
    %6143 = vmatpush2.msra.mxu0 0.0
    %6144 = vmatprep.subr.mxu0 0.0
    %6145 = vmatpush2.msra.mxu0 0.0
    %6146 = vmatprep.subr.mxu0 0.0
    %6147 = vmatpush2.msra.mxu0 0.0
    %6148 = vmatprep.subr.mxu0 0.0
    %6149 = vmatpush2.msra.mxu0 0.0
    %6150 = vmatprep.subr.mxu0 0.0
    %6151 = vmatpush2.msra.mxu0 0.0
    %6152 = vmatprep.mubr.f32.mxu0 0.0
    %6153 = vmatmul.mubr.f32.gmra.mxu0 %v5910
    %v6154 = vpop.f32.mrf.mxu0
    %v6155 = vadd.f32 0.0, %v6154
    %v6156 = vpop.f32.mrf.mxu0
    %6157 = vmatprep.mubr.f32.mxu0 0.0
    %6158 = vmatmul.mubr.f32.gmra.mxu0 %v5913
    %v6159 = vpop.f32.mrf.mxu0
    %v6160 = vadd.f32 0.0, %v6159
    %v6161 = vpop.f32.mrf.mxu0
    %6162 = vmatprep.mubr.f32.mxu0 0.0
    %6163 = vmatmul.mubr.f32.gmra.mxu0 %v5916
    %v6164 = vpop.f32.mrf.mxu0
    %v6165 = vadd.f32 0.0, %v6164
    %v6166 = vpop.f32.mrf.mxu0
    %6167 = vdwg.mxu0
    %v6168 = vrot.slane %v5985, 7
    %v6169 = vrot.slane %v5990, 7
    %v6170 = vrot.slane %v5995, 7
    %v6171 = vsel %vm1896, %v6169, %v6170
    %v6172 = vsel %vm1896, %v6168, %v6169
    %v6173 = vsel %vm1896, %v6170, %v6168
    %v6174 = vld [vmem:[%s15] sm:$0xff]
    %v6175 = vld [vmem:[%s15 + $0x8] sm:$0xff]
    %v6176 = vld [vmem:[%s15 + $0x10] sm:$0xff]
    %6178 = vset.pattern.permute.xlu0 0
    %6179 = vperm.xlu0 %6178, %v6174
    %v6180 = vpop.permute.xlu0 %6179
    %6183 = vset.pattern.permute.xlu0 0
    %6184 = vperm.xlu0 %6183, %v6175
    %v6185 = vpop.permute.xlu0 %6184
    %6188 = vset.pattern.permute.xlu0 0
    %6189 = vperm.xlu0 %6188, %v6176
    %v6190 = vpop.permute.xlu0 %6189
    %v6192 = vmul.f32 %v6173, %v6180
    %v6193 = vmul.f32 %v6172, %v6185
    %v6194 = vmul.f32 %v6171, %v6190
    %v6195 = vadd.f32 %v6192, %v6070
    %v6196 = vadd.f32 %v6193, %v6075
    %v6197 = vadd.f32 %v6194, %v6080
    %v6198 = vrot.slane %v6155, 1
    %v6199 = vrot.slane %v6160, 1
    %v6200 = vrot.slane %v6165, 1
    %v6201 = vsel %vm2707, %v6199, %v6200
    %v6202 = vsel %vm2707, %v6198, %v6199
    %v6203 = vsel %vm2707, %v6200, %v6198
    %v6204 = vld [vmem:[%s16] sm:$0xff]
    %v6205 = vld [vmem:[%s16 + $0x8] sm:$0xff]
    %v6206 = vld [vmem:[%s16 + $0x10] sm:$0xff]
    %6208 = vset.pattern.permute.xlu0 0
    %6209 = vperm.xlu0 %6208, %v6204
    %v6210 = vpop.permute.xlu0 %6209
    %6213 = vset.pattern.permute.xlu0 0
    %6214 = vperm.xlu0 %6213, %v6205
    %v6215 = vpop.permute.xlu0 %6214
    %6218 = vset.pattern.permute.xlu0 0
    %6219 = vperm.xlu0 %6218, %v6206
    %v6220 = vpop.permute.xlu0 %6219
    %v6222 = vmul.f32 %v6202, %v6210
    %v6223 = vmul.f32 %v6201, %v6215
    %v6224 = vmul.f32 %v6203, %v6220
    %v6225 = vadd.f32 %v6195, %v6222
    %v6226 = vadd.f32 %v6196, %v6223
    %v6227 = vadd.f32 %v6197, %v6224
    %v6228 = vld [vmem:[%s14] sm:$0x1]
    %v6230 = vlaneseq
    %v6231 = vshrl.u32 %v6230, 7
    %v6232 = vsub.s32 0, %v6231
    %v6233 = vrot.slane %v6228, %v6232
    %v6235 = vadd.f32 %v6225, %v6233
    %v6236 = vadd.f32 %v6226, %v6233
    %v6237 = vadd.f32 %v6227, %v6233
    %6238 = vst.msk [vmem:[#allocation5] sm:$0xff] %vm3606, %v6235
    %6239 = vst.msk [vmem:[#allocation5 + $0x8] sm:$0xff] %vm3606, %v6236
    %6240 = vst.msk [vmem:[#allocation5 + $0x10] sm:$0xff] %vm3606, %v6237
    %v6241 = vld [vmem:[#allocation5] ss:$3 sm:$0xff]
    %s6242 = scalar_lea.vmem [#allocation5], 1
    %v6243 = vld [vmem:[%s6242] ss:$3 sm:$0xff]
    %v6244 = vmax.f32 %v6241, %v6243
    %s6245 = scalar_lea.vmem [#allocation5], 2
    %v6246 = vld [vmem:[%s6245] ss:$3 sm:$0xff]
    %v6247 = vmax.f32 %v6244, %v6246
    %v6248 = vld [vmem:[%s17] sm:$0xff]
    %v6249 = vld [vmem:[%s17 + $0x8] sm:$0xff]
    %v6250 = vld [vmem:[%s17 + $0x10] sm:$0xff]
    %v6251 = vld [vmem:[%s17 + $0x18] sm:$0xff]
    %v6252 = vld [vmem:[%s18] sm:$0x1]
    %v6254 = vlaneseq
    %v6255 = vshrl.u32 %v6254, 7
    %v6256 = vsub.s32 0, %v6255
    %v6257 = vrot.slane %v6252, %v6256
    %v6260 = vsel %vm3606, %v6247, 0
    %6262 = vmatprep.subr.mxu0 0.0
    %6263 = vmatpush1.msra.mxu0 0.0
    %6264 = vmatprep.subr.mxu0 0.0
    %6265 = vmatpush1.msra.mxu0 0.0
    %6266 = vmatprep.subr.mxu0 0.0
    %6267 = vmatpush1.msra.mxu0 0.0
    %6268 = vmatprep.subr.mxu0 0.0
    %6269 = vmatpush1.msra.mxu0 0.0
    %6270 = vmatprep.subr.mxu0 0.0
    %6271 = vmatpush1.msra.mxu0 0.0
    %6272 = vmatprep.subr.mxu0 0.0
    %6273 = vmatpush1.msra.mxu0 0.0
    %6274 = vmatprep.subr.mxu0 0.0
    %6275 = vmatpush1.msra.mxu0 0.0
    %6276 = vmatprep.subr.mxu0 0.0
    %6277 = vmatpush1.msra.mxu0 0.0
    %6278 = vmatprep.subr.mxu0 0.0
    %6279 = vmatpush1.msra.mxu0 0.0
    %6280 = vmatprep.subr.mxu0 0.0
    %6281 = vmatpush1.msra.mxu0 0.0
    %6282 = vmatprep.subr.mxu0 0.0
    %6283 = vmatpush1.msra.mxu0 0.0
    %6284 = vmatprep.subr.mxu0 0.0
    %6285 = vmatpush1.msra.mxu0 0.0
    %6286 = vmatprep.subr.mxu0 0.0
    %6287 = vmatpush1.msra.mxu0 %v6251
    %6288 = vmatprep.subr.mxu0 0.0
    %6289 = vmatpush1.msra.mxu0 %v6250
    %6290 = vmatprep.subr.mxu0 0.0
    %6291 = vmatpush1.msra.mxu0 %v6249
    %6292 = vmatprep.subr.mxu0 0.0
    %6293 = vmatpush1.msra.mxu0 %v6248
    %6294 = vmatprep.subr.mxu0 0.0
    %6295 = vmatpush2.msra.mxu0 0.0
    %6296 = vmatprep.subr.mxu0 0.0
    %6297 = vmatpush2.msra.mxu0 0.0
    %6298 = vmatprep.subr.mxu0 0.0
    %6299 = vmatpush2.msra.mxu0 0.0
    %6300 = vmatprep.subr.mxu0 0.0
    %6301 = vmatpush2.msra.mxu0 0.0
    %6302 = vmatprep.subr.mxu0 0.0
    %6303 = vmatpush2.msra.mxu0 0.0
    %6304 = vmatprep.subr.mxu0 0.0
    %6305 = vmatpush2.msra.mxu0 0.0
    %6306 = vmatprep.subr.mxu0 0.0
    %6307 = vmatpush2.msra.mxu0 0.0
    %6308 = vmatprep.subr.mxu0 0.0
    %6309 = vmatpush2.msra.mxu0 0.0
    %6310 = vmatprep.subr.mxu0 0.0
    %6311 = vmatpush2.msra.mxu0 0.0
    %6312 = vmatprep.subr.mxu0 0.0
    %6313 = vmatpush2.msra.mxu0 0.0
    %6314 = vmatprep.subr.mxu0 0.0
    %6315 = vmatpush2.msra.mxu0 0.0
    %6316 = vmatprep.subr.mxu0 0.0
    %6317 = vmatpush2.msra.mxu0 0.0
    %6318 = vmatprep.subr.mxu0 0.0
    %6319 = vmatpush2.msra.mxu0 0.0
    %6320 = vmatprep.subr.mxu0 0.0
    %6321 = vmatpush2.msra.mxu0 0.0
    %6322 = vmatprep.subr.mxu0 0.0
    %6323 = vmatpush2.msra.mxu0 0.0
    %6324 = vmatprep.subr.mxu0 0.0
    %6325 = vmatpush2.msra.mxu0 0.0
    %6326 = vmatprep.mubr.f32.mxu0 0.0
    %6327 = vmatmul.mubr.f32.gmra.mxu0 %v6260
    %v6328 = vpop.f32.mrf.mxu0
    %v6329 = vadd.f32 %v6257, %v6328
    %v6330 = vpop.f32.mrf.mxu0
    %6331 = vdwg.mxu0
    %vm6332 = vcmask 80896
    %6333 = vst.msk [vmem:[#allocation6] sm:$0xff] %vm6332, %v6329
    // Predicated region
    $region78: #{tpu_custom_call.1} parent=1 // pred_check
      _
    $region79: #{tpu_custom_call.1} parent=1 // pred_check_branch
      %6335 = sbr.rel (0) target = $region81
    $region80: #{tpu_custom_call.1} parent=1 // pred_region
      %s6337 = ssub.s32 128, 128
      %6338 = vsyncadd [#allocation7], %s6337
      %s6340 = sshll.u32 [#allocation6], 4
      %s6341 = int_to_ptr.vmem [resolvable:$true] %s6340
      %6343 = dma.vmem_to_hbm [thread:$0]  %s6341, 128, %s19, [#allocation7]
    $region81: #{tpu_custom_call.1} parent=1 // pred_fallthru
      _
    // Predicated region
    $region82: #{tpu_custom_call.1} parent=1 // pred_check
      _
    $region83: #{tpu_custom_call.1} parent=1 // pred_check_branch
      %6345 = sbr.rel (0) target = $region85
    $region84: #{tpu_custom_call.1} parent=1 // pred_region
      %6346 = dma.done [#allocation7], 128
    $region85: #{tpu_custom_call.1} parent=1 // pred_fallthru
      _
    %6347 = vsyncpa [#allocation7], 1

</llo_original>
